<compile_context>
chip_gen: v6e
topology: v6e:2x2x1
jax: 0.10.0
libtpu: 0.0.40
codegen_flags: <defaults>
</compile_context>

<pallas_src>
import functools

import jax
import jax.numpy as jnp
from jax import lax
from jax.experimental import pallas as pl
from jax.experimental.pallas import tpu as pltpu

INPUT_DIM = 5
FEAT_PAD = 16                     # input feature dim zero-padded 5 -> 16 (one 16-lane token group)
EMBED_DIM = 16
NUM_HEADS = 4
HEAD_DIM = EMBED_DIM // NUM_HEADS
MLP_DIM = int(EMBED_DIM * 4.0)
LN_EPS = 1e-5
SLAB_LANES = 128

assert FEAT_PAD == EMBED_DIM      # lets one (bb, N, 16) scratch serve both the input unfold and output fold


def _slab_layout(n):
    """Row offsets of every parameter block inside the packed (rows, 128) slab."""
    off = {}
    r = 0

    def take(name, rows):
        nonlocal r
        off[name] = r
        r += rows

    take("wp", FEAT_PAD)            # (FEAT_PAD, E)  proj weight, pre-transposed, zero-padded rows
    take("win", EMBED_DIM)          # (E, 3E)        in_proj weight, pre-transposed
    take("wout", EMBED_DIM)         # (E, E)         out_proj weight, pre-transposed
    take("w1", EMBED_DIM)           # (E, MLP)       mlp fc1, pre-transposed
    take("w2", MLP_DIM)             # (MLP, E)       mlp fc2, pre-transposed
    take("mask", NUM_HEADS * n)     # (H*n, E)       block-diagonal head mask (0/1)
    for name in ("proj_b", "ln1_g", "ln1_b", "in_b", "out_b",
                 "ln2_g", "ln2_b", "mlp_b1", "mlp_b2"):
        take(name, 8)               # one vector per 8-row (sublane-aligned) slot
    total = ((r + 7) // 8) * 8
    return off, total


def _erf(z):
    # Abramowitz & Stegun 7.1.26 polynomial erf (max abs err ~1.5e-7, fp32-exact).
    # PyTorch nn.GELU() is the exact-erf GELU and lax.erf is not guaranteed to
    # have a Mosaic lowering, so the polynomial is used instead.
    a1, a2, a3, a4, a5 = 0.254829592, -0.284496736, 1.421413741, -1.453152027, 1.061405429
    p = 0.3275911
    za = jnp.abs(z)
    t = 1.0 / (1.0 + p * za)
    poly = ((((a5 * t + a4) * t + a3) * t + a2) * t + a1) * t
    y = 1.0 - poly * jnp.exp(-za * za)
    return jnp.where(z >= 0.0, y, -y)


def _gelu_exact(v):
    return 0.5 * v * (1.0 + _erf(v * 0.7071067811865476))


def _layernorm(v, g, b):
    mu = jnp.mean(v, axis=-1, keepdims=True)
    var = jnp.mean((v - mu) ** 2, axis=-1, keepdims=True)
    return (v - mu) * lax.rsqrt(var + LN_EPS) * g + b


def _radar_vit_kernel(x_ref, w_ref, o_ref, tok_ref, *, bb, n, off, matmul_dtype):
    """One batch block.

    x_ref:   (bb, n*FEAT_PAD)   lane-dense folded input block
    w_ref:   (slab_rows, 128)   packed weights (constant index -> DMA'd once)
    o_ref:   (bb, n*E)          lane-dense folded output block
    tok_ref: (bb, n, 16)        VMEM scratch for token un/fold (FEAT_PAD == E)
    """
    rows = bb * n
    E = EMBED_DIM
    Hn = NUM_HEADS * n
    cdt = matmul_dtype
    f32 = jnp.float32

    # --- static slices of the packed weight slab ---
    wp = w_ref[off["wp"]:off["wp"] + FEAT_PAD, 0:E]
    win = w_ref[off["win"]:off["win"] + E, 0:3 * E]
    wout = w_ref[off["wout"]:off["wout"] + E, 0:E]
    w1 = w_ref[off["w1"]:off["w1"] + E, 0:MLP_DIM]
    w2 = w_ref[off["w2"]:off["w2"] + MLP_DIM, 0:E]
    head_mask = w_ref[off["mask"]:off["mask"] + Hn, 0:E]              # (Hn, E) 0/1
    proj_b = w_ref[off["proj_b"]:off["proj_b"] + 1, 0:E]
    ln1_g = w_ref[off["ln1_g"]:off["ln1_g"] + 1, 0:E]
    ln1_b = w_ref[off["ln1_b"]:off["ln1_b"] + 1, 0:E]
    in_b = w_ref[off["in_b"]:off["in_b"] + 1, 0:3 * E]
    out_b = w_ref[off["out_b"]:off["out_b"] + 1, 0:E]
    ln2_g = w_ref[off["ln2_g"]:off["ln2_g"] + 1, 0:E]
    ln2_b = w_ref[off["ln2_b"]:off["ln2_b"] + 1, 0:E]
    mlp_b1 = w_ref[off["mlp_b1"]:off["mlp_b1"] + 1, 0:MLP_DIM]
    mlp_b2 = w_ref[off["mlp_b2"]:off["mlp_b2"] + 1, 0:E]

    # ---- input unfold: (bb, n*16) lane-dense -> (rows, 16) via VMEM scratch ----
    # (ref-level middle-index stores + a proven leading-dim reshape; avoids any
    # unsupported minor-dim-splitting value reshape)
    x_in = x_ref[...]                                                 # (bb, n*FEAT_PAD)
    for t in range(n):                                                # static unroll (n small)
        tok_ref[:, t, :] = x_in[:, t * FEAT_PAD:(t + 1) * FEAT_PAD]
    x = tok_ref[...].reshape(rows, FEAT_PAD)                          # (rows, 16)

    # ---- proj: Linear(input_dim -> embed_dim) ----
    h = jnp.dot(x.astype(cdt), wp.astype(cdt),
                preferred_element_type=f32) + proj_b                  # (rows, E)

    # ---- norm1 + multi-head self-attention (block-diagonal head packing) ----
    ln1 = _layernorm(h, ln1_g, ln1_b)
    qkv = jnp.dot(ln1.astype(cdt), win.astype(cdt),
                  preferred_element_type=f32) + in_b                  # (rows, 3E)
    scale = 1.0 / (HEAD_DIM ** 0.5)
    q3 = qkv[:, 0:E].reshape(bb, n, E) * scale                        # (bb, n, E)
    k3 = qkv[:, E:2 * E].reshape(bb, n, E)
    v3 = qkv[:, 2 * E:3 * E].reshape(bb, n, E)

    # Block-diagonal K / V: all heads packed into ONE batched QK^T and ONE PV matmul.
    # k_bd[b, h*n+m, e] = k3[b, m, e] if lane e belongs to head h else 0.
    k_bd = jnp.concatenate([k3] * NUM_HEADS, axis=1) * head_mask      # (bb, Hn, E)
    v_bd = jnp.concatenate([v3] * NUM_HEADS, axis=1) * head_mask      # (bb, Hn, E)
    s = jnp.einsum('bne,bje->bnj', q3, k_bd,
                   preferred_element_type=f32)                        # (bb, n, Hn)

    # Per-head softmax over its own n-column group (exact divide; approx
    # reciprocal removed per review -> restores ~1e-6 agreement in fp32 mode).
    ps = []
    for hh in range(NUM_HEADS):                                       # static 4-iter loop (VPU/EUP only)
        sh = s[:, :, hh * n:(hh + 1) * n]
        sh = sh - jnp.max(sh, axis=-1, keepdims=True)
        p = jnp.exp(sh)
        ps.append(p / jnp.sum(p, axis=-1, keepdims=True))
    p_bd = jnp.concatenate(ps, axis=-1)                               # (bb, n, Hn)

    attn = jnp.einsum('bnj,bje->bne', p_bd, v_bd,
                      preferred_element_type=f32).reshape(rows, E)    # (rows, E)
    attn = jnp.dot(attn.astype(cdt), wout.astype(cdt),
                   preferred_element_type=f32) + out_b

    h = h + attn                                                      # residual 1

    # ---- norm2 + MLP ----
    ln2 = _layernorm(h, ln2_g, ln2_b)
    m = jnp.dot(ln2.astype(cdt), w1.astype(cdt),
                preferred_element_type=f32) + mlp_b1                  # (rows, MLP)
    m = _gelu_exact(m)
    m = jnp.dot(m.astype(cdt), w2.astype(cdt),
                preferred_element_type=f32) + mlp_b2                  # (rows, E)

    # ---- lane-dense output fold: (rows, E) -> (bb, n*E) via the same scratch ----
    tok_ref[...] = (h + m).reshape(bb, n, E)                          # residual 2
    o_ref[...] = jnp.concatenate([tok_ref[:, t, :] for t in range(n)],
                                 axis=-1).astype(o_ref.dtype)         # (bb, n*E) dense store


def _pack_weight_slab(params, n):
    """Pre-transpose, zero-pad and pack all params + the head mask into one fp32 slab."""
    off, rows = _slab_layout(n)
    E = EMBED_DIM
    f32 = lambda a: jnp.asarray(a, jnp.float32)
    slab = jnp.zeros((rows, SLAB_LANES), jnp.float32)

    wp = jnp.zeros((FEAT_PAD, E), jnp.float32).at[:INPUT_DIM, :].set(f32(params["proj_w"]).T)
    slab = slab.at[off["wp"]:off["wp"] + FEAT_PAD, 0:E].set(wp)
    slab = slab.at[off["win"]:off["win"] + E, 0:3 * E].set(f32(params["in_proj_w"]).T)
    slab = slab.at[off["wout"]:off["wout"] + E, 0:E].set(f32(params["out_proj_w"]).T)
    slab = slab.at[off["w1"]:off["w1"] + E, 0:MLP_DIM].set(f32(params["mlp_w1"]).T)
    slab = slab.at[off["w2"]:off["w2"] + MLP_DIM, 0:E].set(f32(params["mlp_w2"]).T)

    # Block-diagonal head mask: mask[h*n + m, e] = 1 iff lane e belongs to head h.
    row_head = jnp.arange(NUM_HEADS * n) // n
    col_head = jnp.arange(E) // HEAD_DIM
    mask = (row_head[:, None] == col_head[None, :]).astype(jnp.float32)
    slab = slab.at[off["mask"]:off["mask"] + NUM_HEADS * n, 0:E].set(mask)

    vecs = {
        "proj_b": (params["proj_b"], E), "ln1_g": (params["ln1_g"], E),
        "ln1_b": (params["ln1_b"], E), "in_b": (params["in_proj_b"], 3 * E),
        "out_b": (params["out_proj_b"], E), "ln2_g": (params["ln2_g"], E),
        "ln2_b": (params["ln2_b"], E), "mlp_b1": (params["mlp_b1"], MLP_DIM),
        "mlp_b2": (params["mlp_b2"], E),
    }
    for name, (val, width) in vecs.items():
        slab = slab.at[off[name], 0:width].set(f32(val))
    return slab, off


def radar_vit_forward(x, params, *, block_batch=128, matmul_dtype=jnp.bfloat16):
    """x: (B, C=1, N, INPUT_DIM) -> (B, C, N, EMBED_DIM)."""
    B, C, N, Fd = x.shape
    assert C == 1, "x.view(B, N, F) in the reference module requires C == 1"
    assert Fd == INPUT_DIM
    assert N % 8 == 0, "token count kept sublane-aligned for clean Mosaic reshapes"
    E = EMBED_DIM

    # Block-batch: multiple of 8; aim for a grid of >= 2 steps when there is
    # enough work so v7x's two TensorCores both get a share (no effect on
    # single-TC v5e/v6e).  On v6e/v5e callers may raise block_batch to 256-512.
    target = -(-B // 2) if B > 8 else B
    target = ((target + 7) // 8) * 8
    bb = max(8, min(block_batch, target))
    bb = ((bb + 7) // 8) * 8
    num_blocks = -(-B // bb)
    b_pad = num_blocks * bb

    # Zero-pad batch to a block multiple and features 5 -> 16, then fold tokens
    # into lanes: x2[b, t*16 + f] = x[b, 0, t, f]  (lane-dense input block).
    xs = x.reshape(B, N, Fd).astype(jnp.float32)
    xs = jnp.pad(xs, ((0, b_pad - B), (0, 0), (0, FEAT_PAD - Fd)))
    x2 = xs.reshape(b_pad, N * FEAT_PAD)

    slab, off = _pack_weight_slab(params, N)
    slab_rows = slab.shape[0]

    kernel = functools.partial(_radar_vit_kernel, bb=bb, n=N, off=off,
                               matmul_dtype=matmul_dtype)
    out = pl.pallas_call(
        kernel,
        out_shape=jax.ShapeDtypeStruct((b_pad, N * E), jnp.float32),
        grid=(num_blocks,),
        in_specs=[
            pl.BlockSpec((bb, N * FEAT_PAD), lambda i: (i, 0)),        # lane-dense input
            pl.BlockSpec((slab_rows, SLAB_LANES), lambda i: (0, 0)),   # constant -> DMA'd once
        ],
        out_specs=pl.BlockSpec((bb, N * E), lambda i: (i, 0)),          # lane-dense output
        scratch_shapes=[pltpu.VMEM((bb, N, FEAT_PAD), jnp.float32)],    # token un/fold scratch
        compiler_params=pltpu.CompilerParams(
            dimension_semantics=("parallel",),
            vmem_limit_bytes=48 * 1024 * 1024,   # fits v7x's 64 MiB VMEM with headroom
        ),
    )(x2, slab)

    out = out[:B].reshape(B, N, E)
    return out.reshape(B, C, N, E)


def init_params(key):
    ks = jax.random.split(key, 10)

    def w(k, shape, scale=0.05):
        return (scale * jax.random.normal(k, shape)).astype(jnp.float32)

    return {
        "proj_w": w(ks[0], (EMBED_DIM, INPUT_DIM)),
        "proj_b": w(ks[1], (EMBED_DIM,)),
        "ln1_g": jnp.ones((EMBED_DIM,), jnp.float32),
        "ln1_b": jnp.zeros((EMBED_DIM,), jnp.float32),
        "in_proj_w": w(ks[2], (3 * EMBED_DIM, EMBED_DIM)),
        "in_proj_b": w(ks[3], (3 * EMBED_DIM,)),
        "out_proj_w": w(ks[4], (EMBED_DIM, EMBED_DIM)),
        "out_proj_b": w(ks[5], (EMBED_DIM,)),
        "ln2_g": jnp.ones((EMBED_DIM,), jnp.float32),
        "ln2_b": jnp.zeros((EMBED_DIM,), jnp.float32),
        "mlp_w1": w(ks[6], (MLP_DIM, EMBED_DIM)),
        "mlp_b1": w(ks[7], (MLP_DIM,)),
        "mlp_w2": w(ks[8], (EMBED_DIM, MLP_DIM)),
        "mlp_b2": w(ks[9], (EMBED_DIM,)),
    }


def reference_forward(x, params):
    # Pure-JAX mirror of the PyTorch forward (for correctness check only).
    B, C, N, Fd = x.shape
    xs = x.reshape(B, N, Fd)
    h = xs @ params["proj_w"].T + params["proj_b"]

    def ln(v, g, b):
        mu = v.mean(-1, keepdims=True)
        var = ((v - mu) ** 2).mean(-1, keepdims=True)
        return (v - mu) / jnp.sqrt(var + LN_EPS) * g + b

    ln1 = ln(h, params["ln1_g"], params["ln1_b"])
    qkv = ln1 @ params["in_proj_w"].T + params["in_proj_b"]
    q, k, v = jnp.split(qkv, 3, axis=-1)

    def split_heads(t):
        return t.reshape(B, N, NUM_HEADS, HEAD_DIM).transpose(0, 2, 1, 3)

    qh, kh, vh = map(split_heads, (q, k, v))
    s = jnp.einsum("bhqd,bhkd->bhqk", qh, kh) / (HEAD_DIM ** 0.5)
    p = jax.nn.softmax(s, axis=-1)
    a = jnp.einsum("bhqk,bhkd->bhqd", p, vh).transpose(0, 2, 1, 3).reshape(B, N, EMBED_DIM)
    a = a @ params["out_proj_w"].T + params["out_proj_b"]
    h = h + a
    ln2 = ln(h, params["ln2_g"], params["ln2_b"])
    m = ln2 @ params["mlp_w1"].T + params["mlp_b1"]
    m = jax.nn.gelu(m, approximate=False)
    m = m @ params["mlp_w2"].T + params["mlp_b2"]
    return (h + m).reshape(B, C, N, EMBED_DIM)


if __name__ == "__main__":
    key = jax.random.PRNGKey(0)
    kx, kp, kx2 = jax.random.split(key, 3)
    params = init_params(kp)

    # Small primary case (single grid step).
    B, C, N = 2, 1, 8
    x = jax.random.normal(kx, (B, C, N, INPUT_DIM), dtype=jnp.float32)
    ref = reference_forward(x, params)

    # fp32 matmul path: exact softmax divide + fp32 MXU -> ~1e-6 agreement.
    out_f32 = jax.block_until_ready(
        radar_vit_forward(x, params, matmul_dtype=jnp.float32))
    assert out_f32.shape == (B, C, N, EMBED_DIM)
    assert jnp.allclose(out_f32, ref, rtol=1e-4, atol=1e-4), \
        float(jnp.max(jnp.abs(out_f32 - ref)))

    # Default bf16 matmul-operand path (halved MXU push count); ~1e-3-level drift.
    out_bf16 = jax.block_until_ready(radar_vit_forward(x, params))
    assert jnp.allclose(out_bf16, ref, rtol=2e-2, atol=2e-2), \
        float(jnp.max(jnp.abs(out_bf16 - ref)))

    # Multi-block case exercising batch padding + multi-step grid (block_batch=8 -> grid=3).
    B2 = 20
    x2 = jax.random.normal(kx2, (B2, C, N, INPUT_DIM), dtype=jnp.float32)
    out2 = jax.block_until_ready(radar_vit_forward(x2, params, block_batch=8))
    ref2 = reference_forward(x2, params)
    assert out2.shape == (B2, C, N, EMBED_DIM)
    assert jnp.allclose(out2, ref2, rtol=2e-2, atol=2e-2), \
        float(jnp.max(jnp.abs(out2 - ref2)))

    print("KERNEL_OK")
</pallas_src>

<mosaic_0001>
module attributes {stable_mosaic.version = 11 : i64} {
  func.func @_radar_vit_kernel(%arg0: i32, %arg1: memref<8x128xf32, #tpu.memory_space<vmem>>, %arg2: memref<232x128xf32, #tpu.memory_space<vmem>>, %arg3: memref<8x128xf32, #tpu.memory_space<vmem>>, %arg4: memref<8x8x16xf32, #tpu.memory_space<vmem>>) attributes {dimension_semantics = [#tpu.dimension_semantics<parallel>], iteration_bounds = array<i64: 1>, scalar_prefetch = 0 : i64, scratch_operands = 1 : i64, tpu.core_type = #tpu.core_type<tc>, window_params = [{transform_indices = @transform_0, window_bounds = array<i64: 8, 128>}, {pipeline_mode = #tpu.pipeline_mode<synchronous>, transform_indices = @transform_1, window_bounds = array<i64: 232, 128>}, {transform_indices = @transform_2, window_bounds = array<i64: 8, 128>}]} {
    %c0 = arith.constant 0 : index
    %c0_0 = arith.constant 0 : index
    %0 = vector.load %arg2[%c0, %c0_0] : memref<232x128xf32, #tpu.memory_space<vmem>>, vector<16x16xf32>
    %c16 = arith.constant 16 : index
    %c0_1 = arith.constant 0 : index
    %1 = vector.load %arg2[%c16, %c0_1] : memref<232x128xf32, #tpu.memory_space<vmem>>, vector<16x48xf32>
    %c32 = arith.constant 32 : index
    %c0_2 = arith.constant 0 : index
    %2 = vector.load %arg2[%c32, %c0_2] : memref<232x128xf32, #tpu.memory_space<vmem>>, vector<16x16xf32>
    %c48 = arith.constant 48 : index
    %c0_3 = arith.constant 0 : index
    %3 = vector.load %arg2[%c48, %c0_3] : memref<232x128xf32, #tpu.memory_space<vmem>>, vector<16x64xf32>
    %c64 = arith.constant 64 : index
    %c0_4 = arith.constant 0 : index
    %4 = vector.load %arg2[%c64, %c0_4] : memref<232x128xf32, #tpu.memory_space<vmem>>, vector<64x16xf32>
    %c128 = arith.constant 128 : index
    %c0_5 = arith.constant 0 : index
    %5 = vector.load %arg2[%c128, %c0_5] : memref<232x128xf32, #tpu.memory_space<vmem>>, vector<32x16xf32>
    %c160 = arith.constant 160 : index
    %c0_6 = arith.constant 0 : index
    %6 = vector.load %arg2[%c160, %c0_6] : memref<232x128xf32, #tpu.memory_space<vmem>>, vector<1x16xf32>
    %c168 = arith.constant 168 : index
    %c0_7 = arith.constant 0 : index
    %7 = vector.load %arg2[%c168, %c0_7] : memref<232x128xf32, #tpu.memory_space<vmem>>, vector<1x16xf32>
    %c176 = arith.constant 176 : index
    %c0_8 = arith.constant 0 : index
    %8 = vector.load %arg2[%c176, %c0_8] : memref<232x128xf32, #tpu.memory_space<vmem>>, vector<1x16xf32>
    %c184 = arith.constant 184 : index
    %c0_9 = arith.constant 0 : index
    %9 = vector.load %arg2[%c184, %c0_9] : memref<232x128xf32, #tpu.memory_space<vmem>>, vector<1x48xf32>
    %c192 = arith.constant 192 : index
    %c0_10 = arith.constant 0 : index
    %10 = vector.load %arg2[%c192, %c0_10] : memref<232x128xf32, #tpu.memory_space<vmem>>, vector<1x16xf32>
    %c200 = arith.constant 200 : index
    %c0_11 = arith.constant 0 : index
    %11 = vector.load %arg2[%c200, %c0_11] : memref<232x128xf32, #tpu.memory_space<vmem>>, vector<1x16xf32>
    %c208 = arith.constant 208 : index
    %c0_12 = arith.constant 0 : index
    %12 = vector.load %arg2[%c208, %c0_12] : memref<232x128xf32, #tpu.memory_space<vmem>>, vector<1x16xf32>
    %c216 = arith.constant 216 : index
    %c0_13 = arith.constant 0 : index
    %13 = vector.load %arg2[%c216, %c0_13] : memref<232x128xf32, #tpu.memory_space<vmem>>, vector<1x64xf32>
    %c224 = arith.constant 224 : index
    %c0_14 = arith.constant 0 : index
    %14 = vector.load %arg2[%c224, %c0_14] : memref<232x128xf32, #tpu.memory_space<vmem>>, vector<1x16xf32>
    %c0_15 = arith.constant 0 : index
    %c0_16 = arith.constant 0 : index
    %15 = vector.load %arg1[%c0_15, %c0_16] : memref<8x128xf32, #tpu.memory_space<vmem>>, vector<8x128xf32>
    %16 = vector.extract_strided_slice %15 {offsets = [0, 0], sizes = [8, 16], strides = [1, 1]} : vector<8x128xf32> to vector<8x16xf32>
    %c0_17 = arith.constant 0 : index
    %c0_18 = arith.constant 0 : index
    %c0_19 = arith.constant 0 : index
    %17 = vector.load %arg4[%c0_17, %c0_18, %c0_19] : memref<8x8x16xf32, #tpu.memory_space<vmem>>, vector<8x1x16xf32>
    %18 = vector.shape_cast %17 : vector<8x1x16xf32> to vector<8x16xf32>
    %19 = vector.shape_cast %16 : vector<8x16xf32> to vector<8x1x16xf32>
    tpu.vector_store %arg4[%c0_17, %c0_18, %c0_19], %19 {strides = array<i32>} : memref<8x8x16xf32, #tpu.memory_space<vmem>>, vector<8x1x16xf32>,
    %20 = vector.extract_strided_slice %15 {offsets = [0, 16], sizes = [8, 16], strides = [1, 1]} : vector<8x128xf32> to vector<8x16xf32>
    %c0_20 = arith.constant 0 : index
    %c1 = arith.constant 1 : index
    %c0_21 = arith.constant 0 : index
    %21 = vector.load %arg4[%c0_20, %c1, %c0_21] : memref<8x8x16xf32, #tpu.memory_space<vmem>>, vector<8x1x16xf32>
    %22 = vector.shape_cast %21 : vector<8x1x16xf32> to vector<8x16xf32>
    %23 = vector.shape_cast %20 : vector<8x16xf32> to vector<8x1x16xf32>
    tpu.vector_store %arg4[%c0_20, %c1, %c0_21], %23 {strides = array<i32>} : memref<8x8x16xf32, #tpu.memory_space<vmem>>, vector<8x1x16xf32>,
    %24 = vector.extract_strided_slice %15 {offsets = [0, 32], sizes = [8, 16], strides = [1, 1]} : vector<8x128xf32> to vector<8x16xf32>
    %c0_22 = arith.constant 0 : index
    %c2 = arith.constant 2 : index
    %c0_23 = arith.constant 0 : index
    %25 = vector.load %arg4[%c0_22, %c2, %c0_23] : memref<8x8x16xf32, #tpu.memory_space<vmem>>, vector<8x1x16xf32>
    %26 = vector.shape_cast %25 : vector<8x1x16xf32> to vector<8x16xf32>
    %27 = vector.shape_cast %24 : vector<8x16xf32> to vector<8x1x16xf32>
    tpu.vector_store %arg4[%c0_22, %c2, %c0_23], %27 {strides = array<i32>} : memref<8x8x16xf32, #tpu.memory_space<vmem>>, vector<8x1x16xf32>,
    %28 = vector.extract_strided_slice %15 {offsets = [0, 48], sizes = [8, 16], strides = [1, 1]} : vector<8x128xf32> to vector<8x16xf32>
    %c0_24 = arith.constant 0 : index
    %c3 = arith.constant 3 : index
    %c0_25 = arith.constant 0 : index
    %29 = vector.load %arg4[%c0_24, %c3, %c0_25] : memref<8x8x16xf32, #tpu.memory_space<vmem>>, vector<8x1x16xf32>
    %30 = vector.shape_cast %29 : vector<8x1x16xf32> to vector<8x16xf32>
    %31 = vector.shape_cast %28 : vector<8x16xf32> to vector<8x1x16xf32>
    tpu.vector_store %arg4[%c0_24, %c3, %c0_25], %31 {strides = array<i32>} : memref<8x8x16xf32, #tpu.memory_space<vmem>>, vector<8x1x16xf32>,
    %32 = vector.extract_strided_slice %15 {offsets = [0, 64], sizes = [8, 16], strides = [1, 1]} : vector<8x128xf32> to vector<8x16xf32>
    %c0_26 = arith.constant 0 : index
    %c4 = arith.constant 4 : index
    %c0_27 = arith.constant 0 : index
    %33 = vector.load %arg4[%c0_26, %c4, %c0_27] : memref<8x8x16xf32, #tpu.memory_space<vmem>>, vector<8x1x16xf32>
    %34 = vector.shape_cast %33 : vector<8x1x16xf32> to vector<8x16xf32>
    %35 = vector.shape_cast %32 : vector<8x16xf32> to vector<8x1x16xf32>
    tpu.vector_store %arg4[%c0_26, %c4, %c0_27], %35 {strides = array<i32>} : memref<8x8x16xf32, #tpu.memory_space<vmem>>, vector<8x1x16xf32>,
    %36 = vector.extract_strided_slice %15 {offsets = [0, 80], sizes = [8, 16], strides = [1, 1]} : vector<8x128xf32> to vector<8x16xf32>
    %c0_28 = arith.constant 0 : index
    %c5 = arith.constant 5 : index
    %c0_29 = arith.constant 0 : index
    %37 = vector.load %arg4[%c0_28, %c5, %c0_29] : memref<8x8x16xf32, #tpu.memory_space<vmem>>, vector<8x1x16xf32>
    %38 = vector.shape_cast %37 : vector<8x1x16xf32> to vector<8x16xf32>
    %39 = vector.shape_cast %36 : vector<8x16xf32> to vector<8x1x16xf32>
    tpu.vector_store %arg4[%c0_28, %c5, %c0_29], %39 {strides = array<i32>} : memref<8x8x16xf32, #tpu.memory_space<vmem>>, vector<8x1x16xf32>,
    %40 = vector.extract_strided_slice %15 {offsets = [0, 96], sizes = [8, 16], strides = [1, 1]} : vector<8x128xf32> to vector<8x16xf32>
    %c0_30 = arith.constant 0 : index
    %c6 = arith.constant 6 : index
    %c0_31 = arith.constant 0 : index
    %41 = vector.load %arg4[%c0_30, %c6, %c0_31] : memref<8x8x16xf32, #tpu.memory_space<vmem>>, vector<8x1x16xf32>
    %42 = vector.shape_cast %41 : vector<8x1x16xf32> to vector<8x16xf32>
    %43 = vector.shape_cast %40 : vector<8x16xf32> to vector<8x1x16xf32>
    tpu.vector_store %arg4[%c0_30, %c6, %c0_31], %43 {strides = array<i32>} : memref<8x8x16xf32, #tpu.memory_space<vmem>>, vector<8x1x16xf32>,
    %44 = vector.extract_strided_slice %15 {offsets = [0, 112], sizes = [8, 16], strides = [1, 1]} : vector<8x128xf32> to vector<8x16xf32>
    %c0_32 = arith.constant 0 : index
    %c7 = arith.constant 7 : index
    %c0_33 = arith.constant 0 : index
    %45 = vector.load %arg4[%c0_32, %c7, %c0_33] : memref<8x8x16xf32, #tpu.memory_space<vmem>>, vector<8x1x16xf32>
    %46 = vector.shape_cast %45 : vector<8x1x16xf32> to vector<8x16xf32>
    %47 = vector.shape_cast %44 : vector<8x16xf32> to vector<8x1x16xf32>
    tpu.vector_store %arg4[%c0_32, %c7, %c0_33], %47 {strides = array<i32>} : memref<8x8x16xf32, #tpu.memory_space<vmem>>, vector<8x1x16xf32>,
    %c0_34 = arith.constant 0 : index
    %c0_35 = arith.constant 0 : index
    %c0_36 = arith.constant 0 : index
    %48 = vector.load %arg4[%c0_34, %c0_35, %c0_36] : memref<8x8x16xf32, #tpu.memory_space<vmem>>, vector<8x8x16xf32>
    %49 = vector.shape_cast %48 : vector<8x8x16xf32> to vector<64x16xf32>
    %cst = arith.constant dense<0.000000e+00> : vector<64x16xf32>
    %50 = tpu.matmul %49, %0, %cst {dimension_numbers = #tpu.dot_dimension_numbers<[1], [0], [0], [1], [0, 0, 1, 1], [], []>} : vector<64x16xf32>, vector<16x16xf32>, vector<64x16xf32> -> vector<64x16xf32>
    %51 = vector.broadcast %6 : vector<1x16xf32> to vector<64x16xf32>
    %52 = arith.addf %50, %51 : vector<64x16xf32>
    %cst_37 = arith.constant dense<0.000000e+00> : vector<64xf32>
    %53 = vector.multi_reduction <add>, %52, %cst_37 [1] : vector<64x16xf32> to vector<64xf32>
    %54 = vector.shape_cast %53 : vector<64xf32> to vector<64x1xf32>
    %cst_38 = arith.constant 1.600000e+01 : f32
    %55 = vector.broadcast %cst_38 : f32 to vector<64x1xf32>
    %56 = arith.divf %54, %55 : vector<64x1xf32>
    %57 = vector.broadcast %56 : vector<64x1xf32> to vector<64x16xf32>
    %58 = arith.subf %52, %57 : vector<64x16xf32>
    %59 = arith.mulf %58, %58 : vector<64x16xf32>
    %cst_39 = arith.constant dense<0.000000e+00> : vector<64xf32>
    %60 = vector.multi_reduction <add>, %59, %cst_39 [1] : vector<64x16xf32> to vector<64xf32>
    %61 = vector.shape_cast %60 : vector<64xf32> to vector<64x1xf32>
    %cst_40 = arith.constant 1.600000e+01 : f32
    %62 = vector.broadcast %cst_40 : f32 to vector<64x1xf32>
    %63 = arith.divf %61, %62 : vector<64x1xf32>
    %64 = vector.broadcast %56 : vector<64x1xf32> to vector<64x16xf32>
    %65 = arith.subf %52, %64 : vector<64x16xf32>
    %cst_41 = arith.constant 9.99999974E-6 : f32
    %66 = vector.broadcast %cst_41 : f32 to vector<64x1xf32>
    %67 = arith.addf %63, %66 : vector<64x1xf32>
    %68 = math.rsqrt %67 : vector<64x1xf32>
    %69 = vector.broadcast %68 : vector<64x1xf32> to vector<64x16xf32>
    %70 = arith.mulf %65, %69 : vector<64x16xf32>
    %71 = vector.broadcast %7 : vector<1x16xf32> to vector<64x16xf32>
    %72 = arith.mulf %70, %71 : vector<64x16xf32>
    %73 = vector.broadcast %8 : vector<1x16xf32> to vector<64x16xf32>
    %74 = arith.addf %72, %73 : vector<64x16xf32>
    %cst_42 = arith.constant dense<0.000000e+00> : vector<64x48xf32>
    %75 = tpu.matmul %74, %1, %cst_42 {dimension_numbers = #tpu.dot_dimension_numbers<[1], [0], [0], [1], [0, 0, 1, 1], [], []>} : vector<64x16xf32>, vector<16x48xf32>, vector<64x48xf32> -> vector<64x48xf32>
    %76 = vector.broadcast %9 : vector<1x48xf32> to vector<64x48xf32>
    %77 = arith.addf %75, %76 : vector<64x48xf32>
    %78 = vector.extract_strided_slice %77 {offsets = [0, 0], sizes = [64, 16], strides = [1, 1]} : vector<64x48xf32> to vector<64x16xf32>
    %79 = vector.shape_cast %78 : vector<64x16xf32> to vector<8x8x16xf32>
    %cst_43 = arith.constant 5.000000e-01 : f32
    %80 = vector.broadcast %cst_43 : f32 to vector<8x8x16xf32>
    %81 = arith.mulf %79, %80 : vector<8x8x16xf32>
    %82 = vector.extract_strided_slice %77 {offsets = [0, 16], sizes = [64, 16], strides = [1, 1]} : vector<64x48xf32> to vector<64x16xf32>
    %83 = vector.shape_cast %82 : vector<64x16xf32> to vector<8x8x16xf32>
    %84 = vector.extract_strided_slice %77 {offsets = [0, 32], sizes = [64, 16], strides = [1, 1]} : vector<64x48xf32> to vector<64x16xf32>
    %85 = vector.shape_cast %84 : vector<64x16xf32> to vector<8x8x16xf32>
    %86 = tpu.concatenate %83, %83, %83, %83 in 1 : vector<8x8x16xf32>, vector<8x8x16xf32>, vector<8x8x16xf32>, vector<8x8x16xf32> -> vector<8x32x16xf32>
    %87 = vector.shape_cast %5 : vector<32x16xf32> to vector<1x32x16xf32>
    %88 = vector.broadcast %87 : vector<1x32x16xf32> to vector<8x32x16xf32>
    %89 = arith.mulf %86, %88 : vector<8x32x16xf32>
    %90 = tpu.concatenate %85, %85, %85, %85 in 1 : vector<8x8x16xf32>, vector<8x8x16xf32>, vector<8x8x16xf32>, vector<8x8x16xf32> -> vector<8x32x16xf32>
    %91 = vector.shape_cast %5 : vector<32x16xf32> to vector<1x32x16xf32>
    %92 = vector.broadcast %91 : vector<1x32x16xf32> to vector<8x32x16xf32>
    %93 = arith.mulf %90, %92 : vector<8x32x16xf32>
    "tpu.trace_start"() <{level = 10 : i32, message = "bne,bje->bnj"}> : () -> ()
    %cst_44 = arith.constant dense<0.000000e+00> : vector<8x8x32xf32>
    %94 = tpu.matmul %81, %89, %cst_44 {dimension_numbers = #tpu.dot_dimension_numbers<[2], [2], [1], [1], [0, 0, 0, 1, 1, 1], [0], [0]>} : vector<8x8x16xf32>, vector<8x32x16xf32>, vector<8x8x32xf32> -> vector<8x8x32xf32>
    "tpu.trace_stop"() : () -> ()
    %95 = vector.extract_strided_slice %94 {offsets = [0, 0, 0], sizes = [8, 8, 8], strides = [1, 1, 1]} : vector<8x8x32xf32> to vector<8x8x8xf32>
    %cst_45 = arith.constant dense<0xFF800000> : vector<8x8xf32>
    %96 = vector.multi_reduction <maximumf>, %95, %cst_45 [2] : vector<8x8x8xf32> to vector<8x8xf32>
    %97 = vector.shape_cast %96 : vector<8x8xf32> to vector<8x8x1xf32>
    %98 = vector.broadcast %97 : vector<8x8x1xf32> to vector<8x8x8xf32>
    %99 = arith.subf %95, %98 : vector<8x8x8xf32>
    %100 = math.exp %99 : vector<8x8x8xf32>
    %cst_46 = arith.constant dense<0.000000e+00> : vector<8x8xf32>
    %101 = vector.multi_reduction <add>, %100, %cst_46 [2] : vector<8x8x8xf32> to vector<8x8xf32>
    %102 = vector.shape_cast %101 : vector<8x8xf32> to vector<8x8x1xf32>
    %103 = vector.broadcast %102 : vector<8x8x1xf32> to vector<8x8x8xf32>
    %104 = arith.divf %100, %103 : vector<8x8x8xf32>
    %105 = vector.extract_strided_slice %94 {offsets = [0, 0, 8], sizes = [8, 8, 8], strides = [1, 1, 1]} : vector<8x8x32xf32> to vector<8x8x8xf32>
    %cst_47 = arith.constant dense<0xFF800000> : vector<8x8xf32>
    %106 = vector.multi_reduction <maximumf>, %105, %cst_47 [2] : vector<8x8x8xf32> to vector<8x8xf32>
    %107 = vector.shape_cast %106 : vector<8x8xf32> to vector<8x8x1xf32>
    %108 = vector.broadcast %107 : vector<8x8x1xf32> to vector<8x8x8xf32>
    %109 = arith.subf %105, %108 : vector<8x8x8xf32>
    %110 = math.exp %109 : vector<8x8x8xf32>
    %cst_48 = arith.constant dense<0.000000e+00> : vector<8x8xf32>
    %111 = vector.multi_reduction <add>, %110, %cst_48 [2] : vector<8x8x8xf32> to vector<8x8xf32>
    %112 = vector.shape_cast %111 : vector<8x8xf32> to vector<8x8x1xf32>
    %113 = vector.broadcast %112 : vector<8x8x1xf32> to vector<8x8x8xf32>
    %114 = arith.divf %110, %113 : vector<8x8x8xf32>
    %115 = vector.extract_strided_slice %94 {offsets = [0, 0, 16], sizes = [8, 8, 8], strides = [1, 1, 1]} : vector<8x8x32xf32> to vector<8x8x8xf32>
    %cst_49 = arith.constant dense<0xFF800000> : vector<8x8xf32>
    %116 = vector.multi_reduction <maximumf>, %115, %cst_49 [2] : vector<8x8x8xf32> to vector<8x8xf32>
    %117 = vector.shape_cast %116 : vector<8x8xf32> to vector<8x8x1xf32>
    %118 = vector.broadcast %117 : vector<8x8x1xf32> to vector<8x8x8xf32>
    %119 = arith.subf %115, %118 : vector<8x8x8xf32>
    %120 = math.exp %119 : vector<8x8x8xf32>
    %cst_50 = arith.constant dense<0.000000e+00> : vector<8x8xf32>
    %121 = vector.multi_reduction <add>, %120, %cst_50 [2] : vector<8x8x8xf32> to vector<8x8xf32>
    %122 = vector.shape_cast %121 : vector<8x8xf32> to vector<8x8x1xf32>
    %123 = vector.broadcast %122 : vector<8x8x1xf32> to vector<8x8x8xf32>
    %124 = arith.divf %120, %123 : vector<8x8x8xf32>
    %125 = vector.extract_strided_slice %94 {offsets = [0, 0, 24], sizes = [8, 8, 8], strides = [1, 1, 1]} : vector<8x8x32xf32> to vector<8x8x8xf32>
    %cst_51 = arith.constant dense<0xFF800000> : vector<8x8xf32>
    %126 = vector.multi_reduction <maximumf>, %125, %cst_51 [2] : vector<8x8x8xf32> to vector<8x8xf32>
    %127 = vector.shape_cast %126 : vector<8x8xf32> to vector<8x8x1xf32>
    %128 = vector.broadcast %127 : vector<8x8x1xf32> to vector<8x8x8xf32>
    %129 = arith.subf %125, %128 : vector<8x8x8xf32>
    %130 = math.exp %129 : vector<8x8x8xf32>
    %cst_52 = arith.constant dense<0.000000e+00> : vector<8x8xf32>
    %131 = vector.multi_reduction <add>, %130, %cst_52 [2] : vector<8x8x8xf32> to vector<8x8xf32>
    %132 = vector.shape_cast %131 : vector<8x8xf32> to vector<8x8x1xf32>
    %133 = vector.broadcast %132 : vector<8x8x1xf32> to vector<8x8x8xf32>
    %134 = arith.divf %130, %133 : vector<8x8x8xf32>
    %135 = tpu.concatenate %104, %114, %124, %134 in 2 : vector<8x8x8xf32>, vector<8x8x8xf32>, vector<8x8x8xf32>, vector<8x8x8xf32> -> vector<8x8x32xf32>
    "tpu.trace_start"() <{level = 10 : i32, message = "bnj,bje->bne"}> : () -> ()
    %cst_53 = arith.constant dense<0.000000e+00> : vector<8x8x16xf32>
    %136 = tpu.matmul %135, %93, %cst_53 {dimension_numbers = #tpu.dot_dimension_numbers<[2], [1], [1], [2], [0, 0, 0, 1, 1, 2], [0], [0]>} : vector<8x8x32xf32>, vector<8x32x16xf32>, vector<8x8x16xf32> -> vector<8x8x16xf32>
    "tpu.trace_stop"() : () -> ()
    %137 = vector.shape_cast %136 : vector<8x8x16xf32> to vector<64x16xf32>
    %cst_54 = arith.constant dense<0.000000e+00> : vector<64x16xf32>
    %138 = tpu.matmul %137, %2, %cst_54 {dimension_numbers = #tpu.dot_dimension_numbers<[1], [0], [0], [1], [0, 0, 1, 1], [], []>} : vector<64x16xf32>, vector<16x16xf32>, vector<64x16xf32> -> vector<64x16xf32>
    %139 = vector.broadcast %10 : vector<1x16xf32> to vector<64x16xf32>
    %140 = arith.addf %138, %139 : vector<64x16xf32>
    %141 = arith.addf %52, %140 : vector<64x16xf32>
    %cst_55 = arith.constant dense<0.000000e+00> : vector<64xf32>
    %142 = vector.multi_reduction <add>, %141, %cst_55 [1] : vector<64x16xf32> to vector<64xf32>
    %143 = vector.shape_cast %142 : vector<64xf32> to vector<64x1xf32>
    %cst_56 = arith.constant 1.600000e+01 : f32
    %144 = vector.broadcast %cst_56 : f32 to vector<64x1xf32>
    %145 = arith.divf %143, %144 : vector<64x1xf32>
    %146 = vector.broadcast %145 : vector<64x1xf32> to vector<64x16xf32>
    %147 = arith.subf %141, %146 : vector<64x16xf32>
    %148 = arith.mulf %147, %147 : vector<64x16xf32>
    %cst_57 = arith.constant dense<0.000000e+00> : vector<64xf32>
    %149 = vector.multi_reduction <add>, %148, %cst_57 [1] : vector<64x16xf32> to vector<64xf32>
    %150 = vector.shape_cast %149 : vector<64xf32> to vector<64x1xf32>
    %cst_58 = arith.constant 1.600000e+01 : f32
    %151 = vector.broadcast %cst_58 : f32 to vector<64x1xf32>
    %152 = arith.divf %150, %151 : vector<64x1xf32>
    %153 = vector.broadcast %145 : vector<64x1xf32> to vector<64x16xf32>
    %154 = arith.subf %141, %153 : vector<64x16xf32>
    %cst_59 = arith.constant 9.99999974E-6 : f32
    %155 = vector.broadcast %cst_59 : f32 to vector<64x1xf32>
    %156 = arith.addf %152, %155 : vector<64x1xf32>
    %157 = math.rsqrt %156 : vector<64x1xf32>
    %158 = vector.broadcast %157 : vector<64x1xf32> to vector<64x16xf32>
    %159 = arith.mulf %154, %158 : vector<64x16xf32>
    %160 = vector.broadcast %11 : vector<1x16xf32> to vector<64x16xf32>
    %161 = arith.mulf %159, %160 : vector<64x16xf32>
    %162 = vector.broadcast %12 : vector<1x16xf32> to vector<64x16xf32>
    %163 = arith.addf %161, %162 : vector<64x16xf32>
    %cst_60 = arith.constant dense<0.000000e+00> : vector<64x64xf32>
    %164 = tpu.matmul %163, %3, %cst_60 {dimension_numbers = #tpu.dot_dimension_numbers<[1], [0], [0], [1], [0, 0, 1, 1], [], []>} : vector<64x16xf32>, vector<16x64xf32>, vector<64x64xf32> -> vector<64x64xf32>
    %165 = vector.broadcast %13 : vector<1x64xf32> to vector<64x64xf32>
    %166 = arith.addf %164, %165 : vector<64x64xf32>
    %cst_61 = arith.constant 5.000000e-01 : f32
    %167 = vector.broadcast %cst_61 : f32 to vector<64x64xf32>
    %168 = arith.mulf %167, %166 : vector<64x64xf32>
    %cst_62 = arith.constant 0.707106769 : f32
    %169 = vector.broadcast %cst_62 : f32 to vector<64x64xf32>
    %170 = arith.mulf %166, %169 : vector<64x64xf32>
    %171 = math.absf %170 : vector<64x64xf32>
    %cst_63 = arith.constant 0.327591091 : f32
    %172 = vector.broadcast %cst_63 : f32 to vector<64x64xf32>
    %173 = arith.mulf %172, %171 : vector<64x64xf32>
    %cst_64 = arith.constant 1.000000e+00 : f32
    %174 = vector.broadcast %cst_64 : f32 to vector<64x64xf32>
    %175 = arith.addf %174, %173 : vector<64x64xf32>
    %cst_65 = arith.constant 1.000000e+00 : f32
    %176 = vector.broadcast %cst_65 : f32 to vector<64x64xf32>
    %177 = arith.divf %176, %175 : vector<64x64xf32>
    %cst_66 = arith.constant 1.06140542 : f32
    %178 = vector.broadcast %cst_66 : f32 to vector<64x64xf32>
    %179 = arith.mulf %178, %177 : vector<64x64xf32>
    %cst_67 = arith.constant -1.45315206 : f32
    %180 = vector.broadcast %cst_67 : f32 to vector<64x64xf32>
    %181 = arith.addf %179, %180 : vector<64x64xf32>
    %182 = arith.mulf %181, %177 : vector<64x64xf32>
    %cst_68 = arith.constant 1.42141378 : f32
    %183 = vector.broadcast %cst_68 : f32 to vector<64x64xf32>
    %184 = arith.addf %182, %183 : vector<64x64xf32>
    %185 = arith.mulf %184, %177 : vector<64x64xf32>
    %cst_69 = arith.constant -0.284496725 : f32
    %186 = vector.broadcast %cst_69 : f32 to vector<64x64xf32>
    %187 = arith.addf %185, %186 : vector<64x64xf32>
    %188 = arith.mulf %187, %177 : vector<64x64xf32>
    %cst_70 = arith.constant 0.254829586 : f32
    %189 = vector.broadcast %cst_70 : f32 to vector<64x64xf32>
    %190 = arith.addf %188, %189 : vector<64x64xf32>
    %191 = arith.mulf %190, %177 : vector<64x64xf32>
    %cst_71 = arith.constant 0.000000e+00 : f32
    %192 = vector.broadcast %cst_71 : f32 to vector<64x64xf32>
    %193 = arith.subf %192, %171 : vector<64x64xf32>
    %194 = arith.mulf %193, %171 : vector<64x64xf32>
    %195 = math.exp %194 : vector<64x64xf32>
    %196 = arith.mulf %191, %195 : vector<64x64xf32>
    %cst_72 = arith.constant 1.000000e+00 : f32
    %197 = vector.broadcast %cst_72 : f32 to vector<64x64xf32>
    %198 = arith.subf %197, %196 : vector<64x64xf32>
    %cst_73 = arith.constant 0.000000e+00 : f32
    %199 = vector.broadcast %cst_73 : f32 to vector<64x64xf32>
    %200 = arith.cmpf oge, %170, %199 : vector<64x64xf32>
    %cst_74 = arith.constant 0.000000e+00 : f32
    %201 = vector.broadcast %cst_74 : f32 to vector<64x64xf32>
    %202 = arith.subf %201, %198 : vector<64x64xf32>
    %203 = arith.select %200, %198, %202 : vector<64x64xi1>, vector<64x64xf32>
    %cst_75 = arith.constant 1.000000e+00 : f32
    %204 = vector.broadcast %cst_75 : f32 to vector<64x64xf32>
    %205 = arith.addf %204, %203 : vector<64x64xf32>
    %206 = arith.mulf %168, %205 : vector<64x64xf32>
    %cst_76 = arith.constant dense<0.000000e+00> : vector<64x16xf32>
    %207 = tpu.matmul %206, %4, %cst_76 {dimension_numbers = #tpu.dot_dimension_numbers<[1], [0], [0], [1], [0, 0, 1, 1], [], []>} : vector<64x64xf32>, vector<64x16xf32>, vector<64x16xf32> -> vector<64x16xf32>
    %208 = vector.broadcast %14 : vector<1x16xf32> to vector<64x16xf32>
    %209 = arith.addf %207, %208 : vector<64x16xf32>
    %210 = arith.addf %141, %209 : vector<64x16xf32>
    %211 = vector.shape_cast %210 : vector<64x16xf32> to vector<8x8x16xf32>
    %c0_77 = arith.constant 0 : index
    %c0_78 = arith.constant 0 : index
    %c0_79 = arith.constant 0 : index
    %212 = vector.load %arg4[%c0_77, %c0_78, %c0_79] : memref<8x8x16xf32, #tpu.memory_space<vmem>>, vector<8x8x16xf32>
    tpu.vector_store %arg4[%c0_77, %c0_78, %c0_79], %211 {strides = array<i32>} : memref<8x8x16xf32, #tpu.memory_space<vmem>>, vector<8x8x16xf32>,
    %c0_80 = arith.constant 0 : index
    %c0_81 = arith.constant 0 : index
    %c0_82 = arith.constant 0 : index
    %213 = vector.load %arg4[%c0_80, %c0_81, %c0_82] : memref<8x8x16xf32, #tpu.memory_space<vmem>>, vector<8x1x16xf32>
    %214 = vector.shape_cast %213 : vector<8x1x16xf32> to vector<8x16xf32>
    %c0_83 = arith.constant 0 : index
    %c1_84 = arith.constant 1 : index
    %c0_85 = arith.constant 0 : index
    %215 = vector.load %arg4[%c0_83, %c1_84, %c0_85] : memref<8x8x16xf32, #tpu.memory_space<vmem>>, vector<8x1x16xf32>
    %216 = vector.shape_cast %215 : vector<8x1x16xf32> to vector<8x16xf32>
    %c0_86 = arith.constant 0 : index
    %c2_87 = arith.constant 2 : index
    %c0_88 = arith.constant 0 : index
    %217 = vector.load %arg4[%c0_86, %c2_87, %c0_88] : memref<8x8x16xf32, #tpu.memory_space<vmem>>, vector<8x1x16xf32>
    %218 = vector.shape_cast %217 : vector<8x1x16xf32> to vector<8x16xf32>
    %c0_89 = arith.constant 0 : index
    %c3_90 = arith.constant 3 : index
    %c0_91 = arith.constant 0 : index
    %219 = vector.load %arg4[%c0_89, %c3_90, %c0_91] : memref<8x8x16xf32, #tpu.memory_space<vmem>>, vector<8x1x16xf32>
    %220 = vector.shape_cast %219 : vector<8x1x16xf32> to vector<8x16xf32>
    %c0_92 = arith.constant 0 : index
    %c4_93 = arith.constant 4 : index
    %c0_94 = arith.constant 0 : index
    %221 = vector.load %arg4[%c0_92, %c4_93, %c0_94] : memref<8x8x16xf32, #tpu.memory_space<vmem>>, vector<8x1x16xf32>
    %222 = vector.shape_cast %221 : vector<8x1x16xf32> to vector<8x16xf32>
    %c0_95 = arith.constant 0 : index
    %c5_96 = arith.constant 5 : index
    %c0_97 = arith.constant 0 : index
    %223 = vector.load %arg4[%c0_95, %c5_96, %c0_97] : memref<8x8x16xf32, #tpu.memory_space<vmem>>, vector<8x1x16xf32>
    %224 = vector.shape_cast %223 : vector<8x1x16xf32> to vector<8x16xf32>
    %c0_98 = arith.constant 0 : index
    %c6_99 = arith.constant 6 : index
    %c0_100 = arith.constant 0 : index
    %225 = vector.load %arg4[%c0_98, %c6_99, %c0_100] : memref<8x8x16xf32, #tpu.memory_space<vmem>>, vector<8x1x16xf32>
    %226 = vector.shape_cast %225 : vector<8x1x16xf32> to vector<8x16xf32>
    %c0_101 = arith.constant 0 : index
    %c7_102 = arith.constant 7 : index
    %c0_103 = arith.constant 0 : index
    %227 = vector.load %arg4[%c0_101, %c7_102, %c0_103] : memref<8x8x16xf32, #tpu.memory_space<vmem>>, vector<8x1x16xf32>
    %228 = vector.shape_cast %227 : vector<8x1x16xf32> to vector<8x16xf32>
    %229 = tpu.concatenate %214, %216, %218, %220, %222, %224, %226, %228 in 1 : vector<8x16xf32>, vector<8x16xf32>, vector<8x16xf32>, vector<8x16xf32>, vector<8x16xf32>, vector<8x16xf32>, vector<8x16xf32>, vector<8x16xf32> -> vector<8x128xf32>
    %c0_104 = arith.constant 0 : index
    %c0_105 = arith.constant 0 : index
    %230 = vector.load %arg3[%c0_104, %c0_105] : memref<8x128xf32, #tpu.memory_space<vmem>>, vector<8x128xf32>
    tpu.vector_store %arg3[%c0_104, %c0_105], %229 {strides = array<i32>} : memref<8x128xf32, #tpu.memory_space<vmem>>, vector<8x128xf32>,
    return
  }
  func.func @transform_0(%arg0: i32) -> (i32, i32) {
    %c0_i32 = arith.constant 0 : i32
    %c0_i32_0 = arith.constant 0 : i32
    return %arg0, %c0_i32 : i32, i32
  }
  func.func @transform_1(%arg0: i32) -> (i32, i32) {
    %c0_i32 = arith.constant 0 : i32
    %c0_i32_0 = arith.constant 0 : i32
    %c0_i32_1 = arith.constant 0 : i32
    return %c0_i32, %c0_i32_0 : i32, i32
  }
  func.func @transform_2(%arg0: i32) -> (i32, i32) {
    %c0_i32 = arith.constant 0 : i32
    %c0_i32_0 = arith.constant 0 : i32
    return %arg0, %c0_i32 : i32, i32
  }
}

</mosaic_0001>

<llo_original>
// kernel: tpu_custom_call.1
$region0: #{tpu_custom_call.1}
  #allocation0 [shape = 'u32[]', space=smem, size = 0x4, offset = 0x4, fixed_abs, tag = 'smem constant byte address 0x4 - core index']
  #allocation1 [shape = 'u32[144,128]{1,0:T(1,128)}', space=vmem, size = 0x12000, scoped, tag = 'internal scratch']
  #allocation2 [shape = 'f32[8,8,16]{2,1,0:T(8,128)}', space=vmem, size = 0x8000, scoped, tag = 'scratch operand']
  %s0 = inlined_call_operand.hbm [shape: f32[8,128], index: 0, kind: input, shape index: {}]
  %s1 = inlined_call_operand.hbm [shape: f32[232,128], index: 1, kind: input, shape index: {}]
  %s2 = inlined_call_operand.hbm [shape: f32[8,128], index: 2, kind: output, shape index: {}]
  %s3 = sld [smem:[#allocation0]]
  $region26: #{tpu_custom_call.1} parent=0
    _
  %s5 = ssub.s32 1, %s3
  %s6 = scalar_select 0, %s5, %s3
  $region1: #{tpu_custom_call.1} parent=0
    #allocation3 [shape = 'u8[4096]{0}', space=vmem, size = 0x1000, scoped, tag = 'input window, operand 0, single buffered']
    #allocation4 [shape = 's32[1]{0}', space=sflag, size = 0x4, scoped, tag = 'scoped memory for tpu_custom_call.1']
    #allocation5 [shape = 's32[1]{0}', space=sflag, size = 0x4, scoped, tag = 'scoped memory for tpu_custom_call.1']
    #allocation6 [shape = 'u8[118784]{0}', space=vmem, size = 0x1d000, scoped, tag = 'input window, operand 1, single buffered']
    #allocation7 [shape = 's32[1]{0}', space=sflag, size = 0x4, scoped, tag = 'scoped memory for tpu_custom_call.1']
    #allocation8 [shape = 'u8[4096]{0}', space=vmem, size = 0x1000, scoped, tag = 'output window, operand 0, single buffered']
    %7 = vsyncpa [#allocation4], 0
    %8 = vsyncpa [#allocation7], 0
    %9 = vsyncpa [#allocation5], 0
    // Predicated region
    $region2: #{tpu_custom_call.1} parent=1 // pred_check
      _
    $region3: #{tpu_custom_call.1} parent=1 // pred_check_branch
      %11 = sbr.rel (0) target = $region5
    $region4: #{tpu_custom_call.1} parent=1 // pred_region
      %s13 = ssub.s32 128, 128
      %14 = vsyncadd [#allocation4], %s13
      %s16 = sshll.u32 [#allocation3], 4
      %s17 = int_to_ptr.vmem [resolvable:$true] %s16
      %19 = dma.hbm_to_vmem [thread:$0]  %s0, 128, %s17, [#allocation4]
    $region5: #{tpu_custom_call.1} parent=1 // pred_fallthru
      _
    // Predicated region
    $region6: #{tpu_custom_call.1} parent=1 // pred_check
      _
    $region7: #{tpu_custom_call.1} parent=1 // pred_check_branch
      %21 = sbr.rel (0) target = $region9
    $region8: #{tpu_custom_call.1} parent=1 // pred_region
      %s23 = ssub.s32 3712, 3712
      %24 = vsyncadd [#allocation7], %s23
      %s25 = sshll.u32 [#allocation6], 4
      %s26 = int_to_ptr.vmem [resolvable:$true] %s25
      %31 = dma.hbm_to_vmem [thread:$0]  %s1, 3712, %s26, [#allocation7], 128, 128, 8
    $region9: #{tpu_custom_call.1} parent=1 // pred_fallthru
      _
    // Predicated region
    $region10: #{tpu_custom_call.1} parent=1 // pred_check
      _
    $region11: #{tpu_custom_call.1} parent=1 // pred_check_branch
      %33 = sbr.rel (0) target = $region13
    $region12: #{tpu_custom_call.1} parent=1 // pred_region
      %34 = dma.done [#allocation4], 128
    $region13: #{tpu_custom_call.1} parent=1 // pred_fallthru
      _
    // Predicated region
    $region14: #{tpu_custom_call.1} parent=1 // pred_check
      _
    $region15: #{tpu_custom_call.1} parent=1 // pred_check_branch
      %36 = sbr.rel (0) target = $region17
    $region16: #{tpu_custom_call.1} parent=1 // pred_region
      %37 = dma.done [#allocation7], 3712
    $region17: #{tpu_custom_call.1} parent=1 // pred_fallthru
      _
    %v38 = vld [vmem:[#allocation6] sm:$0xff]
    %v39 = vld [vmem:[#allocation6 + $0x8] sm:$0xff]
    %v40 = vld [vmem:[#allocation6 + $0x10] sm:$0xff]
    %v41 = vld [vmem:[#allocation6 + $0x18] sm:$0xff]
    %v42 = vld [vmem:[#allocation6 + $0x20] sm:$0xff]
    %v43 = vld [vmem:[#allocation6 + $0x28] sm:$0xff]
    %v44 = vld [vmem:[#allocation6 + $0x30] sm:$0xff]
    %v45 = vld [vmem:[#allocation6 + $0x38] sm:$0xff]
    %v46 = vld [vmem:[#allocation6 + $0x40] sm:$0xff]
    %v47 = vld [vmem:[#allocation6 + $0x48] sm:$0xff]
    %v48 = vld [vmem:[#allocation6 + $0x50] sm:$0xff]
    %v49 = vld [vmem:[#allocation6 + $0x58] sm:$0xff]
    %v50 = vld [vmem:[#allocation6 + $0x60] sm:$0xff]
    %v51 = vld [vmem:[#allocation6 + $0x68] sm:$0xff]
    %v52 = vld [vmem:[#allocation6 + $0x70] sm:$0xff]
    %v53 = vld [vmem:[#allocation6 + $0x78] sm:$0xff]
    %v54 = vld [vmem:[#allocation6 + $0x80] sm:$0xff]
    %v55 = vld [vmem:[#allocation6 + $0x88] sm:$0xff]
    %v56 = vld [vmem:[#allocation6 + $0x90] sm:$0xff]
    %v57 = vld [vmem:[#allocation6 + $0x98] sm:$0xff]
    %v58 = vld [vmem:[#allocation6 + $0xa0] sm:$0x1]
    %v59 = vld [vmem:[#allocation6 + $0xa8] sm:$0x1]
    %v60 = vld [vmem:[#allocation6 + $0xb0] sm:$0x1]
    %v61 = vld [vmem:[#allocation6 + $0xb8] sm:$0x1]
    %v62 = vld [vmem:[#allocation6 + $0xc0] sm:$0x1]
    %v63 = vld [vmem:[#allocation6 + $0xc8] sm:$0x1]
    %v64 = vld [vmem:[#allocation6 + $0xd0] sm:$0x1]
    %v65 = vld [vmem:[#allocation6 + $0xd8] sm:$0x1]
    %v66 = vld [vmem:[#allocation6 + $0xe0] sm:$0x1]
    %v67 = vld [vmem:[#allocation3] sm:$0xff]
    %v69 = vcombine.high %v67, %v67
    %v71 = vunpack.c.l.s4 1966171168
    %v72 = vunpack.c.0.s8 %v71
    %v73 = vlaneseq
    %v74 = vshrl.u32 %v73, 7
    %v75 = vsub.s32 %v72, %v74
    %v76 = vrot.slane %v67, %v75
    %v78 = vunpack.c.l.s4 1966171168
    %v79 = vunpack.c.0.s8 %v78
    %v80 = vlaneseq
    %v81 = vshrl.u32 %v80, 7
    %v82 = vsub.s32 %v79, %v81
    %v83 = vrot.slane %v69, %v82
    %v84 = vcombine.high %v76, %v76
    %v85 = vcombine.high %v83, %v83
    %v87 = vunpack.c.l.s4 1966171168
    %v88 = vunpack.c.0.s8 %v87
    %v89 = vlaneseq
    %v90 = vshrl.u32 %v89, 7
    %v91 = vsub.s32 %v88, %v90
    %v92 = vrot.slane %v76, %v91
    %v94 = vunpack.c.l.s4 1966171168
    %v95 = vunpack.c.0.s8 %v94
    %v96 = vlaneseq
    %v97 = vshrl.u32 %v96, 7
    %v98 = vsub.s32 %v95, %v97
    %v99 = vrot.slane %v83, %v98
    %v101 = vunpack.c.l.s4 1966171168
    %v102 = vunpack.c.0.s8 %v101
    %v103 = vlaneseq
    %v104 = vshrl.u32 %v103, 7
    %v105 = vsub.s32 %v102, %v104
    %v106 = vrot.slane %v84, %v105
    %v108 = vunpack.c.l.s4 1966171168
    %v109 = vunpack.c.0.s8 %v108
    %v110 = vlaneseq
    %v111 = vshrl.u32 %v110, 7
    %v112 = vsub.s32 %v109, %v111
    %v113 = vrot.slane %v85, %v112
    %v114 = vcombine.high %v92, %v92
    %v115 = vcombine.high %v99, %v99
    %v116 = vcombine.high %v106, %v106
    %v117 = vcombine.high %v113, %v113
    %vm126 = vcmask 122880
    %127 = vst.msk [vmem:[#allocation2] sm:$0x1] %vm126, %v92
    %128 = vst.msk [vmem:[#allocation2 + $0x8] sm:$0x1] %vm126, %v106
    %129 = vst.msk [vmem:[#allocation2 + $0x10] sm:$0x1] %vm126, %v114
    %130 = vst.msk [vmem:[#allocation2 + $0x18] sm:$0x1] %vm126, %v116
    %131 = vst.msk [vmem:[#allocation2 + $0x20] sm:$0x1] %vm126, %v99
    %132 = vst.msk [vmem:[#allocation2 + $0x28] sm:$0x1] %vm126, %v113
    %133 = vst.msk [vmem:[#allocation2 + $0x30] sm:$0x1] %vm126, %v115
    %134 = vst.msk [vmem:[#allocation2 + $0x38] sm:$0x1] %vm126, %v117
    %v135 = vlaneseq
    %v136 = vshrl.u32 %v135, 7
    %v137 = vsub.s32 0, %v136
    %v138 = vrot.slane %v92, %v137
    %v139 = vlaneseq
    %v140 = vshrl.u32 %v139, 7
    %v141 = vsub.s32 0, %v140
    %v142 = vrot.slane %v106, %v141
    %v143 = vlaneseq
    %v144 = vshrl.u32 %v143, 7
    %v145 = vsub.s32 0, %v144
    %v146 = vrot.slane %v114, %v145
    %v147 = vlaneseq
    %v148 = vshrl.u32 %v147, 7
    %v149 = vsub.s32 0, %v148
    %v150 = vrot.slane %v116, %v149
    %v151 = vlaneseq
    %v152 = vshrl.u32 %v151, 7
    %v153 = vsub.s32 0, %v152
    %v154 = vrot.slane %v99, %v153
    %v155 = vlaneseq
    %v156 = vshrl.u32 %v155, 7
    %v157 = vsub.s32 0, %v156
    %v158 = vrot.slane %v113, %v157
    %v159 = vlaneseq
    %v160 = vshrl.u32 %v159, 7
    %v161 = vsub.s32 0, %v160
    %v162 = vrot.slane %v115, %v161
    %v163 = vlaneseq
    %v164 = vshrl.u32 %v163, 7
    %v165 = vsub.s32 0, %v164
    %v166 = vrot.slane %v117, %v165
    %167 = vrot.lane.b32.xlu0 %v138, 112
    %v168 = vpop.permute.xlu0 %167
    %169 = vrot.lane.b32.xlu0 %v142, 112
    %v170 = vpop.permute.xlu0 %169
    %171 = vrot.lane.b32.xlu0 %v146, 112
    %v172 = vpop.permute.xlu0 %171
    %173 = vrot.lane.b32.xlu0 %v150, 112
    %v174 = vpop.permute.xlu0 %173
    %175 = vrot.lane.b32.xlu0 %v154, 112
    %v176 = vpop.permute.xlu0 %175
    %177 = vrot.lane.b32.xlu0 %v158, 112
    %v178 = vpop.permute.xlu0 %177
    %179 = vrot.lane.b32.xlu0 %v162, 112
    %v180 = vpop.permute.xlu0 %179
    %181 = vrot.lane.b32.xlu0 %v166, 112
    %v182 = vpop.permute.xlu0 %181
    %191 = vst.msk [vmem:[#allocation2 + $0x1] sm:$0x1] %vm126, %v168
    %192 = vst.msk [vmem:[#allocation2 + $0x9] sm:$0x1] %vm126, %v170
    %193 = vst.msk [vmem:[#allocation2 + $0x11] sm:$0x1] %vm126, %v172
    %194 = vst.msk [vmem:[#allocation2 + $0x19] sm:$0x1] %vm126, %v174
    %195 = vst.msk [vmem:[#allocation2 + $0x21] sm:$0x1] %vm126, %v176
    %196 = vst.msk [vmem:[#allocation2 + $0x29] sm:$0x1] %vm126, %v178
    %197 = vst.msk [vmem:[#allocation2 + $0x31] sm:$0x1] %vm126, %v180
    %198 = vst.msk [vmem:[#allocation2 + $0x39] sm:$0x1] %vm126, %v182
    %199 = vrot.lane.b32.xlu0 %v138, 96
    %v200 = vpop.permute.xlu0 %199
    %201 = vrot.lane.b32.xlu0 %v142, 96
    %v202 = vpop.permute.xlu0 %201
    %203 = vrot.lane.b32.xlu0 %v146, 96
    %v204 = vpop.permute.xlu0 %203
    %205 = vrot.lane.b32.xlu0 %v150, 96
    %v206 = vpop.permute.xlu0 %205
    %207 = vrot.lane.b32.xlu0 %v154, 96
    %v208 = vpop.permute.xlu0 %207
    %209 = vrot.lane.b32.xlu0 %v158, 96
    %v210 = vpop.permute.xlu0 %209
    %211 = vrot.lane.b32.xlu0 %v162, 96
    %v212 = vpop.permute.xlu0 %211
    %213 = vrot.lane.b32.xlu0 %v166, 96
    %v214 = vpop.permute.xlu0 %213
    %223 = vst.msk [vmem:[#allocation2 + $0x2] sm:$0x1] %vm126, %v200
    %224 = vst.msk [vmem:[#allocation2 + $0xa] sm:$0x1] %vm126, %v202
    %225 = vst.msk [vmem:[#allocation2 + $0x12] sm:$0x1] %vm126, %v204
    %226 = vst.msk [vmem:[#allocation2 + $0x1a] sm:$0x1] %vm126, %v206
    %227 = vst.msk [vmem:[#allocation2 + $0x22] sm:$0x1] %vm126, %v208
    %228 = vst.msk [vmem:[#allocation2 + $0x2a] sm:$0x1] %vm126, %v210
    %229 = vst.msk [vmem:[#allocation2 + $0x32] sm:$0x1] %vm126, %v212
    %230 = vst.msk [vmem:[#allocation2 + $0x3a] sm:$0x1] %vm126, %v214
    %231 = vrot.lane.b32.xlu0 %v138, 80
    %v232 = vpop.permute.xlu0 %231
    %233 = vrot.lane.b32.xlu0 %v142, 80
    %v234 = vpop.permute.xlu0 %233
    %235 = vrot.lane.b32.xlu0 %v146, 80
    %v236 = vpop.permute.xlu0 %235
    %237 = vrot.lane.b32.xlu0 %v150, 80
    %v238 = vpop.permute.xlu0 %237
    %239 = vrot.lane.b32.xlu0 %v154, 80
    %v240 = vpop.permute.xlu0 %239
    %241 = vrot.lane.b32.xlu0 %v158, 80
    %v242 = vpop.permute.xlu0 %241
    %243 = vrot.lane.b32.xlu0 %v162, 80
    %v244 = vpop.permute.xlu0 %243
    %245 = vrot.lane.b32.xlu0 %v166, 80
    %v246 = vpop.permute.xlu0 %245
    %255 = vst.msk [vmem:[#allocation2 + $0x3] sm:$0x1] %vm126, %v232
    %256 = vst.msk [vmem:[#allocation2 + $0xb] sm:$0x1] %vm126, %v234
    %257 = vst.msk [vmem:[#allocation2 + $0x13] sm:$0x1] %vm126, %v236
    %258 = vst.msk [vmem:[#allocation2 + $0x1b] sm:$0x1] %vm126, %v238
    %259 = vst.msk [vmem:[#allocation2 + $0x23] sm:$0x1] %vm126, %v240
    %260 = vst.msk [vmem:[#allocation2 + $0x2b] sm:$0x1] %vm126, %v242
    %261 = vst.msk [vmem:[#allocation2 + $0x33] sm:$0x1] %vm126, %v244
    %262 = vst.msk [vmem:[#allocation2 + $0x3b] sm:$0x1] %vm126, %v246
    %263 = vrot.lane.b32.xlu0 %v138, 64
    %v264 = vpop.permute.xlu0 %263
    %265 = vrot.lane.b32.xlu0 %v142, 64
    %v266 = vpop.permute.xlu0 %265
    %267 = vrot.lane.b32.xlu0 %v146, 64
    %v268 = vpop.permute.xlu0 %267
    %269 = vrot.lane.b32.xlu0 %v150, 64
    %v270 = vpop.permute.xlu0 %269
    %271 = vrot.lane.b32.xlu0 %v154, 64
    %v272 = vpop.permute.xlu0 %271
    %273 = vrot.lane.b32.xlu0 %v158, 64
    %v274 = vpop.permute.xlu0 %273
    %275 = vrot.lane.b32.xlu0 %v162, 64
    %v276 = vpop.permute.xlu0 %275
    %277 = vrot.lane.b32.xlu0 %v166, 64
    %v278 = vpop.permute.xlu0 %277
    %287 = vst.msk [vmem:[#allocation2 + $0x4] sm:$0x1] %vm126, %v264
    %288 = vst.msk [vmem:[#allocation2 + $0xc] sm:$0x1] %vm126, %v266
    %289 = vst.msk [vmem:[#allocation2 + $0x14] sm:$0x1] %vm126, %v268
    %290 = vst.msk [vmem:[#allocation2 + $0x1c] sm:$0x1] %vm126, %v270
    %291 = vst.msk [vmem:[#allocation2 + $0x24] sm:$0x1] %vm126, %v272
    %292 = vst.msk [vmem:[#allocation2 + $0x2c] sm:$0x1] %vm126, %v274
    %293 = vst.msk [vmem:[#allocation2 + $0x34] sm:$0x1] %vm126, %v276
    %294 = vst.msk [vmem:[#allocation2 + $0x3c] sm:$0x1] %vm126, %v278
    %295 = vrot.lane.b32.xlu0 %v138, 48
    %v296 = vpop.permute.xlu0 %295
    %297 = vrot.lane.b32.xlu0 %v142, 48
    %v298 = vpop.permute.xlu0 %297
    %299 = vrot.lane.b32.xlu0 %v146, 48
    %v300 = vpop.permute.xlu0 %299
    %301 = vrot.lane.b32.xlu0 %v150, 48
    %v302 = vpop.permute.xlu0 %301
    %303 = vrot.lane.b32.xlu0 %v154, 48
    %v304 = vpop.permute.xlu0 %303
    %305 = vrot.lane.b32.xlu0 %v158, 48
    %v306 = vpop.permute.xlu0 %305
    %307 = vrot.lane.b32.xlu0 %v162, 48
    %v308 = vpop.permute.xlu0 %307
    %309 = vrot.lane.b32.xlu0 %v166, 48
    %v310 = vpop.permute.xlu0 %309
    %319 = vst.msk [vmem:[#allocation2 + $0x5] sm:$0x1] %vm126, %v296
    %320 = vst.msk [vmem:[#allocation2 + $0xd] sm:$0x1] %vm126, %v298
    %321 = vst.msk [vmem:[#allocation2 + $0x15] sm:$0x1] %vm126, %v300
    %322 = vst.msk [vmem:[#allocation2 + $0x1d] sm:$0x1] %vm126, %v302
    %323 = vst.msk [vmem:[#allocation2 + $0x25] sm:$0x1] %vm126, %v304
    %324 = vst.msk [vmem:[#allocation2 + $0x2d] sm:$0x1] %vm126, %v306
    %325 = vst.msk [vmem:[#allocation2 + $0x35] sm:$0x1] %vm126, %v308
    %326 = vst.msk [vmem:[#allocation2 + $0x3d] sm:$0x1] %vm126, %v310
    %327 = vrot.lane.b32.xlu0 %v138, 32
    %v328 = vpop.permute.xlu0 %327
    %329 = vrot.lane.b32.xlu0 %v142, 32
    %v330 = vpop.permute.xlu0 %329
    %331 = vrot.lane.b32.xlu0 %v146, 32
    %v332 = vpop.permute.xlu0 %331
    %333 = vrot.lane.b32.xlu0 %v150, 32
    %v334 = vpop.permute.xlu0 %333
    %335 = vrot.lane.b32.xlu0 %v154, 32
    %v336 = vpop.permute.xlu0 %335
    %337 = vrot.lane.b32.xlu0 %v158, 32
    %v338 = vpop.permute.xlu0 %337
    %339 = vrot.lane.b32.xlu0 %v162, 32
    %v340 = vpop.permute.xlu0 %339
    %341 = vrot.lane.b32.xlu0 %v166, 32
    %v342 = vpop.permute.xlu0 %341
    %351 = vst.msk [vmem:[#allocation2 + $0x6] sm:$0x1] %vm126, %v328
    %352 = vst.msk [vmem:[#allocation2 + $0xe] sm:$0x1] %vm126, %v330
    %353 = vst.msk [vmem:[#allocation2 + $0x16] sm:$0x1] %vm126, %v332
    %354 = vst.msk [vmem:[#allocation2 + $0x1e] sm:$0x1] %vm126, %v334
    %355 = vst.msk [vmem:[#allocation2 + $0x26] sm:$0x1] %vm126, %v336
    %356 = vst.msk [vmem:[#allocation2 + $0x2e] sm:$0x1] %vm126, %v338
    %357 = vst.msk [vmem:[#allocation2 + $0x36] sm:$0x1] %vm126, %v340
    %358 = vst.msk [vmem:[#allocation2 + $0x3e] sm:$0x1] %vm126, %v342
    %359 = vrot.lane.b32.xlu0 %v138, 16
    %v360 = vpop.permute.xlu0 %359
    %361 = vrot.lane.b32.xlu0 %v142, 16
    %v362 = vpop.permute.xlu0 %361
    %363 = vrot.lane.b32.xlu0 %v146, 16
    %v364 = vpop.permute.xlu0 %363
    %365 = vrot.lane.b32.xlu0 %v150, 16
    %v366 = vpop.permute.xlu0 %365
    %367 = vrot.lane.b32.xlu0 %v154, 16
    %v368 = vpop.permute.xlu0 %367
    %369 = vrot.lane.b32.xlu0 %v158, 16
    %v370 = vpop.permute.xlu0 %369
    %371 = vrot.lane.b32.xlu0 %v162, 16
    %v372 = vpop.permute.xlu0 %371
    %373 = vrot.lane.b32.xlu0 %v166, 16
    %v374 = vpop.permute.xlu0 %373
    %383 = vst.msk [vmem:[#allocation2 + $0x7] sm:$0x1] %vm126, %v360
    %384 = vst.msk [vmem:[#allocation2 + $0xf] sm:$0x1] %vm126, %v362
    %385 = vst.msk [vmem:[#allocation2 + $0x17] sm:$0x1] %vm126, %v364
    %386 = vst.msk [vmem:[#allocation2 + $0x1f] sm:$0x1] %vm126, %v366
    %387 = vst.msk [vmem:[#allocation2 + $0x27] sm:$0x1] %vm126, %v368
    %388 = vst.msk [vmem:[#allocation2 + $0x2f] sm:$0x1] %vm126, %v370
    %389 = vst.msk [vmem:[#allocation2 + $0x37] sm:$0x1] %vm126, %v372
    %390 = vst.msk [vmem:[#allocation2 + $0x3f] sm:$0x1] %vm126, %v374
    %v391 = vld [vmem:[#allocation2] sm:$0xff]
    %v392 = vld [vmem:[#allocation2 + $0x8] sm:$0xff]
    %v393 = vld [vmem:[#allocation2 + $0x10] sm:$0xff]
    %v394 = vld [vmem:[#allocation2 + $0x18] sm:$0xff]
    %v395 = vld [vmem:[#allocation2 + $0x20] sm:$0xff]
    %v396 = vld [vmem:[#allocation2 + $0x28] sm:$0xff]
    %v397 = vld [vmem:[#allocation2 + $0x30] sm:$0xff]
    %v398 = vld [vmem:[#allocation2 + $0x38] sm:$0xff]
    %v399 = vlaneseq
    %v400 = vshrl.u32 %v399, 7
    %v401 = vsub.s32 0, %v400
    %v402 = vrot.slane %v58, %v401
    %vm403 = vcmask 130048
    %v405 = vsel %vm403, %v391, 0
    %v408 = vsel %vm403, %v392, 0
    %v411 = vsel %vm403, %v393, 0
    %v414 = vsel %vm403, %v394, 0
    %v417 = vsel %vm403, %v395, 0
    %v420 = vsel %vm403, %v396, 0
    %v423 = vsel %vm403, %v397, 0
    %v426 = vsel %vm403, %v398, 0
    %428 = vmatprep.subr.mxu0 0.0
    %429 = vmatpush1.msra.mxu0 0.0
    %430 = vmatprep.subr.mxu0 0.0
    %431 = vmatpush1.msra.mxu0 0.0
    %432 = vmatprep.subr.mxu0 0.0
    %433 = vmatpush1.msra.mxu0 0.0
    %434 = vmatprep.subr.mxu0 0.0
    %435 = vmatpush1.msra.mxu0 0.0
    %436 = vmatprep.subr.mxu0 0.0
    %437 = vmatpush1.msra.mxu0 0.0
    %438 = vmatprep.subr.mxu0 0.0
    %439 = vmatpush1.msra.mxu0 0.0
    %440 = vmatprep.subr.mxu0 0.0
    %441 = vmatpush1.msra.mxu0 0.0
    %442 = vmatprep.subr.mxu0 0.0
    %443 = vmatpush1.msra.mxu0 0.0
    %444 = vmatprep.subr.mxu0 0.0
    %445 = vmatpush1.msra.mxu0 0.0
    %446 = vmatprep.subr.mxu0 0.0
    %447 = vmatpush1.msra.mxu0 0.0
    %448 = vmatprep.subr.mxu0 0.0
    %449 = vmatpush1.msra.mxu0 0.0
    %450 = vmatprep.subr.mxu0 0.0
    %451 = vmatpush1.msra.mxu0 0.0
    %452 = vmatprep.subr.mxu0 0.0
    %453 = vmatpush1.msra.mxu0 0.0
    %454 = vmatprep.subr.mxu0 0.0
    %455 = vmatpush1.msra.mxu0 0.0
    %456 = vmatprep.subr.mxu0 0.0
    %457 = vmatpush1.msra.mxu0 %v39
    %458 = vmatprep.subr.mxu0 0.0
    %459 = vmatpush1.msra.mxu0 %v38
    %460 = vmatprep.subr.mxu0 0.0
    %461 = vmatpush2.msra.mxu0 0.0
    %462 = vmatprep.subr.mxu0 0.0
    %463 = vmatpush2.msra.mxu0 0.0
    %464 = vmatprep.subr.mxu0 0.0
    %465 = vmatpush2.msra.mxu0 0.0
    %466 = vmatprep.subr.mxu0 0.0
    %467 = vmatpush2.msra.mxu0 0.0
    %468 = vmatprep.subr.mxu0 0.0
    %469 = vmatpush2.msra.mxu0 0.0
    %470 = vmatprep.subr.mxu0 0.0
    %471 = vmatpush2.msra.mxu0 0.0
    %472 = vmatprep.subr.mxu0 0.0
    %473 = vmatpush2.msra.mxu0 0.0
    %474 = vmatprep.subr.mxu0 0.0
    %475 = vmatpush2.msra.mxu0 0.0
    %476 = vmatprep.subr.mxu0 0.0
    %477 = vmatpush2.msra.mxu0 0.0
    %478 = vmatprep.subr.mxu0 0.0
    %479 = vmatpush2.msra.mxu0 0.0
    %480 = vmatprep.subr.mxu0 0.0
    %481 = vmatpush2.msra.mxu0 0.0
    %482 = vmatprep.subr.mxu0 0.0
    %483 = vmatpush2.msra.mxu0 0.0
    %484 = vmatprep.subr.mxu0 0.0
    %485 = vmatpush2.msra.mxu0 0.0
    %486 = vmatprep.subr.mxu0 0.0
    %487 = vmatpush2.msra.mxu0 0.0
    %488 = vmatprep.subr.mxu0 0.0
    %489 = vmatpush2.msra.mxu0 0.0
    %490 = vmatprep.subr.mxu0 0.0
    %491 = vmatpush2.msra.mxu0 0.0
    %492 = vmatprep.mubr.f32.mxu0 0.0
    %493 = vmatmul.mubr.f32.gmra.mxu0 %v405
    %v494 = vpop.f32.mrf.mxu0
    %v495 = vadd.f32 %v402, %v494
    %v496 = vpop.f32.mrf.mxu0
    %497 = vmatprep.mubr.f32.mxu0 0.0
    %498 = vmatmul.mubr.f32.gmra.mxu0 %v408
    %v499 = vpop.f32.mrf.mxu0
    %v500 = vadd.f32 %v402, %v499
    %v501 = vpop.f32.mrf.mxu0
    %502 = vmatprep.mubr.f32.mxu0 0.0
    %503 = vmatmul.mubr.f32.gmra.mxu0 %v411
    %v504 = vpop.f32.mrf.mxu0
    %v505 = vadd.f32 %v402, %v504
    %v506 = vpop.f32.mrf.mxu0
    %507 = vmatprep.mubr.f32.mxu0 0.0
    %508 = vmatmul.mubr.f32.gmra.mxu0 %v414
    %v509 = vpop.f32.mrf.mxu0
    %v510 = vadd.f32 %v402, %v509
    %v511 = vpop.f32.mrf.mxu0
    %512 = vmatprep.mubr.f32.mxu0 0.0
    %513 = vmatmul.mubr.f32.gmra.mxu0 %v417
    %v514 = vpop.f32.mrf.mxu0
    %v515 = vadd.f32 %v402, %v514
    %v516 = vpop.f32.mrf.mxu0
    %517 = vmatprep.mubr.f32.mxu0 0.0
    %518 = vmatmul.mubr.f32.gmra.mxu0 %v420
    %v519 = vpop.f32.mrf.mxu0
    %v520 = vadd.f32 %v402, %v519
    %v521 = vpop.f32.mrf.mxu0
    %522 = vmatprep.mubr.f32.mxu0 0.0
    %523 = vmatmul.mubr.f32.gmra.mxu0 %v423
    %v524 = vpop.f32.mrf.mxu0
    %v525 = vadd.f32 %v402, %v524
    %v526 = vpop.f32.mrf.mxu0
    %527 = vmatprep.mubr.f32.mxu0 0.0
    %528 = vmatmul.mubr.f32.gmra.mxu0 %v426
    %v529 = vpop.f32.mrf.mxu0
    %v530 = vadd.f32 %v402, %v529
    %v531 = vpop.f32.mrf.mxu0
    %532 = vdwg.mxu0
    %v533 = vsel %vm403, %v495, 0.0
    %534 = vadd.xlane.f32.xlu0 %v533
    %v535 = vpop.xlane.xlu0 %534
    %v536 = vsel %vm403, %v500, 0.0
    %537 = vadd.xlane.f32.xlu0 %v536
    %v538 = vpop.xlane.xlu0 %537
    %v539 = vsel %vm403, %v505, 0.0
    %540 = vadd.xlane.f32.xlu0 %v539
    %v541 = vpop.xlane.xlu0 %540
    %v542 = vsel %vm403, %v510, 0.0
    %543 = vadd.xlane.f32.xlu0 %v542
    %v544 = vpop.xlane.xlu0 %543
    %v545 = vsel %vm403, %v515, 0.0
    %546 = vadd.xlane.f32.xlu0 %v545
    %v547 = vpop.xlane.xlu0 %546
    %v548 = vsel %vm403, %v520, 0.0
    %549 = vadd.xlane.f32.xlu0 %v548
    %v550 = vpop.xlane.xlu0 %549
    %v551 = vsel %vm403, %v525, 0.0
    %552 = vadd.xlane.f32.xlu0 %v551
    %v553 = vpop.xlane.xlu0 %552
    %v554 = vsel %vm403, %v530, 0.0
    %555 = vadd.xlane.f32.xlu0 %v554
    %v556 = vpop.xlane.xlu0 %555
    %v557 = vrcp.pop 16.0
    %v558 = vmul.f32 %v535, %v557
    %v559 = vmul.f32 %v538, %v557
    %v560 = vmul.f32 %v541, %v557
    %v561 = vmul.f32 %v544, %v557
    %v562 = vmul.f32 %v547, %v557
    %v563 = vmul.f32 %v550, %v557
    %v564 = vmul.f32 %v553, %v557
    %v565 = vmul.f32 %v556, %v557
    %v566 = vsub.f32 %v495, %v558
    %v567 = vsub.f32 %v500, %v559
    %v568 = vsub.f32 %v505, %v560
    %v569 = vsub.f32 %v510, %v561
    %v570 = vsub.f32 %v515, %v562
    %v571 = vsub.f32 %v520, %v563
    %v572 = vsub.f32 %v525, %v564
    %v573 = vsub.f32 %v530, %v565
    %v574 = vmul.f32 %v566, %v566
    %v575 = vmul.f32 %v567, %v567
    %v576 = vmul.f32 %v568, %v568
    %v577 = vmul.f32 %v569, %v569
    %v578 = vmul.f32 %v570, %v570
    %v579 = vmul.f32 %v571, %v571
    %v580 = vmul.f32 %v572, %v572
    %v581 = vmul.f32 %v573, %v573
    %v582 = vsel %vm403, %v574, 0.0
    %583 = vadd.xlane.f32.xlu0 %v582
    %v584 = vpop.xlane.xlu0 %583
    %v585 = vsel %vm403, %v575, 0.0
    %586 = vadd.xlane.f32.xlu0 %v585
    %v587 = vpop.xlane.xlu0 %586
    %v588 = vsel %vm403, %v576, 0.0
    %589 = vadd.xlane.f32.xlu0 %v588
    %v590 = vpop.xlane.xlu0 %589
    %v591 = vsel %vm403, %v577, 0.0
    %592 = vadd.xlane.f32.xlu0 %v591
    %v593 = vpop.xlane.xlu0 %592
    %v594 = vsel %vm403, %v578, 0.0
    %595 = vadd.xlane.f32.xlu0 %v594
    %v596 = vpop.xlane.xlu0 %595
    %v597 = vsel %vm403, %v579, 0.0
    %598 = vadd.xlane.f32.xlu0 %v597
    %v599 = vpop.xlane.xlu0 %598
    %v600 = vsel %vm403, %v580, 0.0
    %601 = vadd.xlane.f32.xlu0 %v600
    %v602 = vpop.xlane.xlu0 %601
    %v603 = vsel %vm403, %v581, 0.0
    %604 = vadd.xlane.f32.xlu0 %v603
    %v605 = vpop.xlane.xlu0 %604
    %v606 = vmul.f32 %v584, %v557
    %v607 = vmul.f32 %v587, %v557
    %v608 = vmul.f32 %v590, %v557
    %v609 = vmul.f32 %v593, %v557
    %v610 = vmul.f32 %v596, %v557
    %v611 = vmul.f32 %v599, %v557
    %v612 = vmul.f32 %v602, %v557
    %v613 = vmul.f32 %v605, %v557
    %v614 = vadd.f32 %v606, 1e-05
    %v615 = vadd.f32 %v607, 1e-05
    %v616 = vadd.f32 %v608, 1e-05
    %v617 = vadd.f32 %v609, 1e-05
    %v618 = vadd.f32 %v610, 1e-05
    %v619 = vadd.f32 %v611, 1e-05
    %v620 = vadd.f32 %v612, 1e-05
    %v621 = vadd.f32 %v613, 1e-05
    %v622 = vrsqrt.pop %v614
    %v623 = vrsqrt.pop %v615
    %v624 = vrsqrt.pop %v616
    %v625 = vrsqrt.pop %v617
    %v626 = vrsqrt.pop %v618
    %v627 = vrsqrt.pop %v619
    %v628 = vrsqrt.pop %v620
    %v629 = vrsqrt.pop %v621
    %v630 = vmul.f32 %v566, %v622
    %v631 = vmul.f32 %v567, %v623
    %v632 = vmul.f32 %v568, %v624
    %v633 = vmul.f32 %v569, %v625
    %v634 = vmul.f32 %v570, %v626
    %v635 = vmul.f32 %v571, %v627
    %v636 = vmul.f32 %v572, %v628
    %v637 = vmul.f32 %v573, %v629
    %v638 = vlaneseq
    %v639 = vshrl.u32 %v638, 7
    %v640 = vsub.s32 0, %v639
    %v641 = vrot.slane %v59, %v640
    %v642 = vmul.f32 %v630, %v641
    %v643 = vmul.f32 %v631, %v641
    %v644 = vmul.f32 %v632, %v641
    %v645 = vmul.f32 %v633, %v641
    %v646 = vmul.f32 %v634, %v641
    %v647 = vmul.f32 %v635, %v641
    %v648 = vmul.f32 %v636, %v641
    %v649 = vmul.f32 %v637, %v641
    %v650 = vlaneseq
    %v651 = vshrl.u32 %v650, 7
    %v652 = vsub.s32 0, %v651
    %v653 = vrot.slane %v60, %v652
    %v654 = vadd.f32 %v642, %v653
    %v655 = vadd.f32 %v643, %v653
    %v656 = vadd.f32 %v644, %v653
    %v657 = vadd.f32 %v645, %v653
    %v658 = vadd.f32 %v646, %v653
    %v659 = vadd.f32 %v647, %v653
    %v660 = vadd.f32 %v648, %v653
    %v661 = vadd.f32 %v649, %v653
    %v662 = vlaneseq
    %v663 = vshrl.u32 %v662, 7
    %v664 = vsub.s32 0, %v663
    %v665 = vrot.slane %v61, %v664
    %v667 = vsel %vm403, %v654, 0
    %v670 = vsel %vm403, %v655, 0
    %v673 = vsel %vm403, %v656, 0
    %v676 = vsel %vm403, %v657, 0
    %v679 = vsel %vm403, %v658, 0
    %v682 = vsel %vm403, %v659, 0
    %v685 = vsel %vm403, %v660, 0
    %v688 = vsel %vm403, %v661, 0
    %690 = vmatprep.subr.mxu0 0.0
    %691 = vmatpush1.msra.mxu0 0.0
    %692 = vmatprep.subr.mxu0 0.0
    %693 = vmatpush1.msra.mxu0 0.0
    %694 = vmatprep.subr.mxu0 0.0
    %695 = vmatpush1.msra.mxu0 0.0
    %696 = vmatprep.subr.mxu0 0.0
    %697 = vmatpush1.msra.mxu0 0.0
    %698 = vmatprep.subr.mxu0 0.0
    %699 = vmatpush1.msra.mxu0 0.0
    %700 = vmatprep.subr.mxu0 0.0
    %701 = vmatpush1.msra.mxu0 0.0
    %702 = vmatprep.subr.mxu0 0.0
    %703 = vmatpush1.msra.mxu0 0.0
    %704 = vmatprep.subr.mxu0 0.0
    %705 = vmatpush1.msra.mxu0 0.0
    %706 = vmatprep.subr.mxu0 0.0
    %707 = vmatpush1.msra.mxu0 0.0
    %708 = vmatprep.subr.mxu0 0.0
    %709 = vmatpush1.msra.mxu0 0.0
    %710 = vmatprep.subr.mxu0 0.0
    %711 = vmatpush1.msra.mxu0 0.0
    %712 = vmatprep.subr.mxu0 0.0
    %713 = vmatpush1.msra.mxu0 0.0
    %714 = vmatprep.subr.mxu0 0.0
    %715 = vmatpush1.msra.mxu0 0.0
    %716 = vmatprep.subr.mxu0 0.0
    %717 = vmatpush1.msra.mxu0 0.0
    %718 = vmatprep.subr.mxu0 0.0
    %719 = vmatpush1.msra.mxu0 %v41
    %720 = vmatprep.subr.mxu0 0.0
    %721 = vmatpush1.msra.mxu0 %v40
    %722 = vmatprep.subr.mxu0 0.0
    %723 = vmatpush2.msra.mxu0 0.0
    %724 = vmatprep.subr.mxu0 0.0
    %725 = vmatpush2.msra.mxu0 0.0
    %726 = vmatprep.subr.mxu0 0.0
    %727 = vmatpush2.msra.mxu0 0.0
    %728 = vmatprep.subr.mxu0 0.0
    %729 = vmatpush2.msra.mxu0 0.0
    %730 = vmatprep.subr.mxu0 0.0
    %731 = vmatpush2.msra.mxu0 0.0
    %732 = vmatprep.subr.mxu0 0.0
    %733 = vmatpush2.msra.mxu0 0.0
    %734 = vmatprep.subr.mxu0 0.0
    %735 = vmatpush2.msra.mxu0 0.0
    %736 = vmatprep.subr.mxu0 0.0
    %737 = vmatpush2.msra.mxu0 0.0
    %738 = vmatprep.subr.mxu0 0.0
    %739 = vmatpush2.msra.mxu0 0.0
    %740 = vmatprep.subr.mxu0 0.0
    %741 = vmatpush2.msra.mxu0 0.0
    %742 = vmatprep.subr.mxu0 0.0
    %743 = vmatpush2.msra.mxu0 0.0
    %744 = vmatprep.subr.mxu0 0.0
    %745 = vmatpush2.msra.mxu0 0.0
    %746 = vmatprep.subr.mxu0 0.0
    %747 = vmatpush2.msra.mxu0 0.0
    %748 = vmatprep.subr.mxu0 0.0
    %749 = vmatpush2.msra.mxu0 0.0
    %750 = vmatprep.subr.mxu0 0.0
    %751 = vmatpush2.msra.mxu0 0.0
    %752 = vmatprep.subr.mxu0 0.0
    %753 = vmatpush2.msra.mxu0 0.0
    %754 = vmatprep.mubr.f32.mxu0 0.0
    %755 = vmatmul.mubr.f32.gmra.mxu0 %v667
    %v756 = vpop.f32.mrf.mxu0
    %v757 = vadd.f32 %v665, %v756
    %v758 = vpop.f32.mrf.mxu0
    %759 = vmatprep.mubr.f32.mxu0 0.0
    %760 = vmatmul.mubr.f32.gmra.mxu0 %v670
    %v761 = vpop.f32.mrf.mxu0
    %v762 = vadd.f32 %v665, %v761
    %v763 = vpop.f32.mrf.mxu0
    %764 = vmatprep.mubr.f32.mxu0 0.0
    %765 = vmatmul.mubr.f32.gmra.mxu0 %v673
    %v766 = vpop.f32.mrf.mxu0
    %v767 = vadd.f32 %v665, %v766
    %v768 = vpop.f32.mrf.mxu0
    %769 = vmatprep.mubr.f32.mxu0 0.0
    %770 = vmatmul.mubr.f32.gmra.mxu0 %v676
    %v771 = vpop.f32.mrf.mxu0
    %v772 = vadd.f32 %v665, %v771
    %v773 = vpop.f32.mrf.mxu0
    %774 = vmatprep.mubr.f32.mxu0 0.0
    %775 = vmatmul.mubr.f32.gmra.mxu0 %v679
    %v776 = vpop.f32.mrf.mxu0
    %v777 = vadd.f32 %v665, %v776
    %v778 = vpop.f32.mrf.mxu0
    %779 = vmatprep.mubr.f32.mxu0 0.0
    %780 = vmatmul.mubr.f32.gmra.mxu0 %v682
    %v781 = vpop.f32.mrf.mxu0
    %v782 = vadd.f32 %v665, %v781
    %v783 = vpop.f32.mrf.mxu0
    %784 = vmatprep.mubr.f32.mxu0 0.0
    %785 = vmatmul.mubr.f32.gmra.mxu0 %v685
    %v786 = vpop.f32.mrf.mxu0
    %v787 = vadd.f32 %v665, %v786
    %v788 = vpop.f32.mrf.mxu0
    %789 = vmatprep.mubr.f32.mxu0 0.0
    %790 = vmatmul.mubr.f32.gmra.mxu0 %v688
    %v791 = vpop.f32.mrf.mxu0
    %v792 = vadd.f32 %v665, %v791
    %v793 = vpop.f32.mrf.mxu0
    %794 = vdwg.mxu0
    %v795 = vmul.f32 %v757, 0.5
    %v796 = vmul.f32 %v762, 0.5
    %v797 = vmul.f32 %v767, 0.5
    %v798 = vmul.f32 %v772, 0.5
    %v799 = vmul.f32 %v777, 0.5
    %v800 = vmul.f32 %v782, 0.5
    %v801 = vmul.f32 %v787, 0.5
    %v802 = vmul.f32 %v792, 0.5
    %807 = vrot.lane.b32.xlu0 %v54, 16
    %v808 = vpop.permute.xlu0 %807
    %809 = vrot.lane.b32.xlu0 %v55, 16
    %v810 = vpop.permute.xlu0 %809
    %811 = vrot.lane.b32.xlu0 %v56, 16
    %v812 = vpop.permute.xlu0 %811
    %813 = vrot.lane.b32.xlu0 %v57, 16
    %v814 = vpop.permute.xlu0 %813
    %v819 = vmul.f32 %v757, %v808
    %v820 = vmul.f32 %v757, %v810
    %v821 = vmul.f32 %v757, %v812
    %v822 = vmul.f32 %v757, %v814
    %v823 = vmul.f32 %v762, %v808
    %v824 = vmul.f32 %v762, %v810
    %v825 = vmul.f32 %v762, %v812
    %v826 = vmul.f32 %v762, %v814
    %v827 = vmul.f32 %v767, %v808
    %v828 = vmul.f32 %v767, %v810
    %v829 = vmul.f32 %v767, %v812
    %v830 = vmul.f32 %v767, %v814
    %v831 = vmul.f32 %v772, %v808
    %v832 = vmul.f32 %v772, %v810
    %v833 = vmul.f32 %v772, %v812
    %v834 = vmul.f32 %v772, %v814
    %v835 = vmul.f32 %v777, %v808
    %v836 = vmul.f32 %v777, %v810
    %v837 = vmul.f32 %v777, %v812
    %v838 = vmul.f32 %v777, %v814
    %v839 = vmul.f32 %v782, %v808
    %v840 = vmul.f32 %v782, %v810
    %v841 = vmul.f32 %v782, %v812
    %v842 = vmul.f32 %v782, %v814
    %v843 = vmul.f32 %v787, %v808
    %v844 = vmul.f32 %v787, %v810
    %v845 = vmul.f32 %v787, %v812
    %v846 = vmul.f32 %v787, %v814
    %v847 = vmul.f32 %v792, %v808
    %v848 = vmul.f32 %v792, %v810
    %v849 = vmul.f32 %v792, %v812
    %v850 = vmul.f32 %v792, %v814
    %851 = vrot.lane.b32.xlu0 %v54, 32
    %v852 = vpop.permute.xlu0 %851
    %853 = vrot.lane.b32.xlu0 %v55, 32
    %v854 = vpop.permute.xlu0 %853
    %855 = vrot.lane.b32.xlu0 %v56, 32
    %v856 = vpop.permute.xlu0 %855
    %857 = vrot.lane.b32.xlu0 %v57, 32
    %v858 = vpop.permute.xlu0 %857
    %v863 = vmul.f32 %v757, %v852
    %v864 = vmul.f32 %v757, %v854
    %v865 = vmul.f32 %v757, %v856
    %v866 = vmul.f32 %v757, %v858
    %v867 = vmul.f32 %v762, %v852
    %v868 = vmul.f32 %v762, %v854
    %v869 = vmul.f32 %v762, %v856
    %v870 = vmul.f32 %v762, %v858
    %v871 = vmul.f32 %v767, %v852
    %v872 = vmul.f32 %v767, %v854
    %v873 = vmul.f32 %v767, %v856
    %v874 = vmul.f32 %v767, %v858
    %v875 = vmul.f32 %v772, %v852
    %v876 = vmul.f32 %v772, %v854
    %v877 = vmul.f32 %v772, %v856
    %v878 = vmul.f32 %v772, %v858
    %v879 = vmul.f32 %v777, %v852
    %v880 = vmul.f32 %v777, %v854
    %v881 = vmul.f32 %v777, %v856
    %v882 = vmul.f32 %v777, %v858
    %v883 = vmul.f32 %v782, %v852
    %v884 = vmul.f32 %v782, %v854
    %v885 = vmul.f32 %v782, %v856
    %v886 = vmul.f32 %v782, %v858
    %v887 = vmul.f32 %v787, %v852
    %v888 = vmul.f32 %v787, %v854
    %v889 = vmul.f32 %v787, %v856
    %v890 = vmul.f32 %v787, %v858
    %v891 = vmul.f32 %v792, %v852
    %v892 = vmul.f32 %v792, %v854
    %v893 = vmul.f32 %v792, %v856
    %v894 = vmul.f32 %v792, %v858
    %899 = vrot.lane.b32.xlu0 %v819, 112
    %v900 = vpop.permute.xlu0 %899
    %901 = vrot.lane.b32.xlu0 %v820, 112
    %v902 = vpop.permute.xlu0 %901
    %903 = vrot.lane.b32.xlu0 %v821, 112
    %v904 = vpop.permute.xlu0 %903
    %905 = vrot.lane.b32.xlu0 %v822, 112
    %v906 = vpop.permute.xlu0 %905
    %v908 = vsel %vm403, %v795, 0
    %v910 = vsel %vm403, %v900, 0
    %v912 = vsel %vm403, %v902, 0
    %v914 = vsel %vm403, %v904, 0
    %v916 = vsel %vm403, %v906, 0
    %918 = vmatprep.subr.mxu0 0.0
    %919 = vmatpush1.xpose.msra.mxu0 0.0
    %920 = vmatprep.subr.mxu0 0.0
    %921 = vmatpush1.xpose.msra.mxu0 0.0
    %922 = vmatprep.subr.mxu0 0.0
    %923 = vmatpush1.xpose.msra.mxu0 0.0
    %924 = vmatprep.subr.mxu0 0.0
    %925 = vmatpush1.xpose.msra.mxu0 0.0
    %926 = vmatprep.subr.mxu0 0.0
    %927 = vmatpush1.xpose.msra.mxu0 0.0
    %928 = vmatprep.subr.mxu0 0.0
    %929 = vmatpush1.xpose.msra.mxu0 0.0
    %930 = vmatprep.subr.mxu0 0.0
    %931 = vmatpush1.xpose.msra.mxu0 0.0
    %932 = vmatprep.subr.mxu0 0.0
    %933 = vmatpush1.xpose.msra.mxu0 0.0
    %934 = vmatprep.subr.mxu0 0.0
    %935 = vmatpush1.xpose.msra.mxu0 0.0
    %936 = vmatprep.subr.mxu0 0.0
    %937 = vmatpush1.xpose.msra.mxu0 0.0
    %938 = vmatprep.subr.mxu0 0.0
    %939 = vmatpush1.xpose.msra.mxu0 0.0
    %940 = vmatprep.subr.mxu0 0.0
    %941 = vmatpush1.xpose.msra.mxu0 0.0
    %942 = vmatprep.subr.mxu0 0.0
    %943 = vmatpush1.xpose.msra.mxu0 %v916
    %944 = vmatprep.subr.mxu0 0.0
    %945 = vmatpush1.xpose.msra.mxu0 %v914
    %946 = vmatprep.subr.mxu0 0.0
    %947 = vmatpush1.xpose.msra.mxu0 %v912
    %948 = vmatprep.subr.mxu0 0.0
    %949 = vmatpush1.xpose.msra.mxu0 %v910
    %950 = vmatprep.subr.mxu0 0.0
    %951 = vmatpush2.xpose.msra.mxu0 0.0
    %952 = vmatprep.subr.mxu0 0.0
    %953 = vmatpush2.xpose.msra.mxu0 0.0
    %954 = vmatprep.subr.mxu0 0.0
    %955 = vmatpush2.xpose.msra.mxu0 0.0
    %956 = vmatprep.subr.mxu0 0.0
    %957 = vmatpush2.xpose.msra.mxu0 0.0
    %958 = vmatprep.subr.mxu0 0.0
    %959 = vmatpush2.xpose.msra.mxu0 0.0
    %960 = vmatprep.subr.mxu0 0.0
    %961 = vmatpush2.xpose.msra.mxu0 0.0
    %962 = vmatprep.subr.mxu0 0.0
    %963 = vmatpush2.xpose.msra.mxu0 0.0
    %964 = vmatprep.subr.mxu0 0.0
    %965 = vmatpush2.xpose.msra.mxu0 0.0
    %966 = vmatprep.subr.mxu0 0.0
    %967 = vmatpush2.xpose.msra.mxu0 0.0
    %968 = vmatprep.subr.mxu0 0.0
    %969 = vmatpush2.xpose.msra.mxu0 0.0
    %970 = vmatprep.subr.mxu0 0.0
    %971 = vmatpush2.xpose.msra.mxu0 0.0
    %972 = vmatprep.subr.mxu0 0.0
    %973 = vmatpush2.xpose.msra.mxu0 0.0
    %974 = vmatprep.subr.mxu0 0.0
    %975 = vmatpush2.xpose.msra.mxu0 0.0
    %976 = vmatprep.subr.mxu0 0.0
    %977 = vmatpush2.xpose.msra.mxu0 0.0
    %978 = vmatprep.subr.mxu0 0.0
    %979 = vmatpush2.xpose.msra.mxu0 0.0
    %980 = vmatprep.subr.mxu0 0.0
    %981 = vmatpush2.xpose.msra.mxu0 0.0
    %982 = vmatprep.mubr.f32.mxu0 0.0
    %983 = vmatmul.mubr.f32.gmra.mxu0 %v908
    %v984 = vpop.f32.mrf.mxu0
    %v985 = vadd.f32 0.0, %v984
    %v986 = vpop.f32.mrf.mxu0
    %987 = vdwg.mxu0
    %992 = vrot.lane.b32.xlu0 %v823, 112
    %v993 = vpop.permute.xlu0 %992
    %994 = vrot.lane.b32.xlu0 %v824, 112
    %v995 = vpop.permute.xlu0 %994
    %996 = vrot.lane.b32.xlu0 %v825, 112
    %v997 = vpop.permute.xlu0 %996
    %998 = vrot.lane.b32.xlu0 %v826, 112
    %v999 = vpop.permute.xlu0 %998
    %v1001 = vsel %vm403, %v796, 0
    %v1003 = vsel %vm403, %v993, 0
    %v1005 = vsel %vm403, %v995, 0
    %v1007 = vsel %vm403, %v997, 0
    %v1009 = vsel %vm403, %v999, 0
    %1011 = vmatprep.subr.mxu0 0.0
    %1012 = vmatpush1.xpose.msra.mxu0 0.0
    %1013 = vmatprep.subr.mxu0 0.0
    %1014 = vmatpush1.xpose.msra.mxu0 0.0
    %1015 = vmatprep.subr.mxu0 0.0
    %1016 = vmatpush1.xpose.msra.mxu0 0.0
    %1017 = vmatprep.subr.mxu0 0.0
    %1018 = vmatpush1.xpose.msra.mxu0 0.0
    %1019 = vmatprep.subr.mxu0 0.0
    %1020 = vmatpush1.xpose.msra.mxu0 0.0
    %1021 = vmatprep.subr.mxu0 0.0
    %1022 = vmatpush1.xpose.msra.mxu0 0.0
    %1023 = vmatprep.subr.mxu0 0.0
    %1024 = vmatpush1.xpose.msra.mxu0 0.0
    %1025 = vmatprep.subr.mxu0 0.0
    %1026 = vmatpush1.xpose.msra.mxu0 0.0
    %1027 = vmatprep.subr.mxu0 0.0
    %1028 = vmatpush1.xpose.msra.mxu0 0.0
    %1029 = vmatprep.subr.mxu0 0.0
    %1030 = vmatpush1.xpose.msra.mxu0 0.0
    %1031 = vmatprep.subr.mxu0 0.0
    %1032 = vmatpush1.xpose.msra.mxu0 0.0
    %1033 = vmatprep.subr.mxu0 0.0
    %1034 = vmatpush1.xpose.msra.mxu0 0.0
    %1035 = vmatprep.subr.mxu0 0.0
    %1036 = vmatpush1.xpose.msra.mxu0 %v1009
    %1037 = vmatprep.subr.mxu0 0.0
    %1038 = vmatpush1.xpose.msra.mxu0 %v1007
    %1039 = vmatprep.subr.mxu0 0.0
    %1040 = vmatpush1.xpose.msra.mxu0 %v1005
    %1041 = vmatprep.subr.mxu0 0.0
    %1042 = vmatpush1.xpose.msra.mxu0 %v1003
    %1043 = vmatprep.subr.mxu0 0.0
    %1044 = vmatpush2.xpose.msra.mxu0 0.0
    %1045 = vmatprep.subr.mxu0 0.0
    %1046 = vmatpush2.xpose.msra.mxu0 0.0
    %1047 = vmatprep.subr.mxu0 0.0
    %1048 = vmatpush2.xpose.msra.mxu0 0.0
    %1049 = vmatprep.subr.mxu0 0.0
    %1050 = vmatpush2.xpose.msra.mxu0 0.0
    %1051 = vmatprep.subr.mxu0 0.0
    %1052 = vmatpush2.xpose.msra.mxu0 0.0
    %1053 = vmatprep.subr.mxu0 0.0
    %1054 = vmatpush2.xpose.msra.mxu0 0.0
    %1055 = vmatprep.subr.mxu0 0.0
    %1056 = vmatpush2.xpose.msra.mxu0 0.0
    %1057 = vmatprep.subr.mxu0 0.0
    %1058 = vmatpush2.xpose.msra.mxu0 0.0
    %1059 = vmatprep.subr.mxu0 0.0
    %1060 = vmatpush2.xpose.msra.mxu0 0.0
    %1061 = vmatprep.subr.mxu0 0.0
    %1062 = vmatpush2.xpose.msra.mxu0 0.0
    %1063 = vmatprep.subr.mxu0 0.0
    %1064 = vmatpush2.xpose.msra.mxu0 0.0
    %1065 = vmatprep.subr.mxu0 0.0
    %1066 = vmatpush2.xpose.msra.mxu0 0.0
    %1067 = vmatprep.subr.mxu0 0.0
    %1068 = vmatpush2.xpose.msra.mxu0 0.0
    %1069 = vmatprep.subr.mxu0 0.0
    %1070 = vmatpush2.xpose.msra.mxu0 0.0
    %1071 = vmatprep.subr.mxu0 0.0
    %1072 = vmatpush2.xpose.msra.mxu0 0.0
    %1073 = vmatprep.subr.mxu0 0.0
    %1074 = vmatpush2.xpose.msra.mxu0 0.0
    %1075 = vmatprep.mubr.f32.mxu0 0.0
    %1076 = vmatmul.mubr.f32.gmra.mxu0 %v1001
    %v1077 = vpop.f32.mrf.mxu0
    %v1078 = vadd.f32 0.0, %v1077
    %v1079 = vpop.f32.mrf.mxu0
    %1080 = vdwg.mxu0
    %1085 = vrot.lane.b32.xlu0 %v827, 112
    %v1086 = vpop.permute.xlu0 %1085
    %1087 = vrot.lane.b32.xlu0 %v828, 112
    %v1088 = vpop.permute.xlu0 %1087
    %1089 = vrot.lane.b32.xlu0 %v829, 112
    %v1090 = vpop.permute.xlu0 %1089
    %1091 = vrot.lane.b32.xlu0 %v830, 112
    %v1092 = vpop.permute.xlu0 %1091
    %v1094 = vsel %vm403, %v797, 0
    %v1096 = vsel %vm403, %v1086, 0
    %v1098 = vsel %vm403, %v1088, 0
    %v1100 = vsel %vm403, %v1090, 0
    %v1102 = vsel %vm403, %v1092, 0
    %1104 = vmatprep.subr.mxu0 0.0
    %1105 = vmatpush1.xpose.msra.mxu0 0.0
    %1106 = vmatprep.subr.mxu0 0.0
    %1107 = vmatpush1.xpose.msra.mxu0 0.0
    %1108 = vmatprep.subr.mxu0 0.0
    %1109 = vmatpush1.xpose.msra.mxu0 0.0
    %1110 = vmatprep.subr.mxu0 0.0
    %1111 = vmatpush1.xpose.msra.mxu0 0.0
    %1112 = vmatprep.subr.mxu0 0.0
    %1113 = vmatpush1.xpose.msra.mxu0 0.0
    %1114 = vmatprep.subr.mxu0 0.0
    %1115 = vmatpush1.xpose.msra.mxu0 0.0
    %1116 = vmatprep.subr.mxu0 0.0
    %1117 = vmatpush1.xpose.msra.mxu0 0.0
    %1118 = vmatprep.subr.mxu0 0.0
    %1119 = vmatpush1.xpose.msra.mxu0 0.0
    %1120 = vmatprep.subr.mxu0 0.0
    %1121 = vmatpush1.xpose.msra.mxu0 0.0
    %1122 = vmatprep.subr.mxu0 0.0
    %1123 = vmatpush1.xpose.msra.mxu0 0.0
    %1124 = vmatprep.subr.mxu0 0.0
    %1125 = vmatpush1.xpose.msra.mxu0 0.0
    %1126 = vmatprep.subr.mxu0 0.0
    %1127 = vmatpush1.xpose.msra.mxu0 0.0
    %1128 = vmatprep.subr.mxu0 0.0
    %1129 = vmatpush1.xpose.msra.mxu0 %v1102
    %1130 = vmatprep.subr.mxu0 0.0
    %1131 = vmatpush1.xpose.msra.mxu0 %v1100
    %1132 = vmatprep.subr.mxu0 0.0
    %1133 = vmatpush1.xpose.msra.mxu0 %v1098
    %1134 = vmatprep.subr.mxu0 0.0
    %1135 = vmatpush1.xpose.msra.mxu0 %v1096
    %1136 = vmatprep.subr.mxu0 0.0
    %1137 = vmatpush2.xpose.msra.mxu0 0.0
    %1138 = vmatprep.subr.mxu0 0.0
    %1139 = vmatpush2.xpose.msra.mxu0 0.0
    %1140 = vmatprep.subr.mxu0 0.0
    %1141 = vmatpush2.xpose.msra.mxu0 0.0
    %1142 = vmatprep.subr.mxu0 0.0
    %1143 = vmatpush2.xpose.msra.mxu0 0.0
    %1144 = vmatprep.subr.mxu0 0.0
    %1145 = vmatpush2.xpose.msra.mxu0 0.0
    %1146 = vmatprep.subr.mxu0 0.0
    %1147 = vmatpush2.xpose.msra.mxu0 0.0
    %1148 = vmatprep.subr.mxu0 0.0
    %1149 = vmatpush2.xpose.msra.mxu0 0.0
    %1150 = vmatprep.subr.mxu0 0.0
    %1151 = vmatpush2.xpose.msra.mxu0 0.0
    %1152 = vmatprep.subr.mxu0 0.0
    %1153 = vmatpush2.xpose.msra.mxu0 0.0
    %1154 = vmatprep.subr.mxu0 0.0
    %1155 = vmatpush2.xpose.msra.mxu0 0.0
    %1156 = vmatprep.subr.mxu0 0.0
    %1157 = vmatpush2.xpose.msra.mxu0 0.0
    %1158 = vmatprep.subr.mxu0 0.0
    %1159 = vmatpush2.xpose.msra.mxu0 0.0
    %1160 = vmatprep.subr.mxu0 0.0
    %1161 = vmatpush2.xpose.msra.mxu0 0.0
    %1162 = vmatprep.subr.mxu0 0.0
    %1163 = vmatpush2.xpose.msra.mxu0 0.0
    %1164 = vmatprep.subr.mxu0 0.0
    %1165 = vmatpush2.xpose.msra.mxu0 0.0
    %1166 = vmatprep.subr.mxu0 0.0
    %1167 = vmatpush2.xpose.msra.mxu0 0.0
    %1168 = vmatprep.mubr.f32.mxu0 0.0
    %1169 = vmatmul.mubr.f32.gmra.mxu0 %v1094
    %v1170 = vpop.f32.mrf.mxu0
    %v1171 = vadd.f32 0.0, %v1170
    %v1172 = vpop.f32.mrf.mxu0
    %1173 = vdwg.mxu0
    %1178 = vrot.lane.b32.xlu0 %v831, 112
    %v1179 = vpop.permute.xlu0 %1178
    %1180 = vrot.lane.b32.xlu0 %v832, 112
    %v1181 = vpop.permute.xlu0 %1180
    %1182 = vrot.lane.b32.xlu0 %v833, 112
    %v1183 = vpop.permute.xlu0 %1182
    %1184 = vrot.lane.b32.xlu0 %v834, 112
    %v1185 = vpop.permute.xlu0 %1184
    %v1187 = vsel %vm403, %v798, 0
    %v1189 = vsel %vm403, %v1179, 0
    %v1191 = vsel %vm403, %v1181, 0
    %v1193 = vsel %vm403, %v1183, 0
    %v1195 = vsel %vm403, %v1185, 0
    %1197 = vmatprep.subr.mxu0 0.0
    %1198 = vmatpush1.xpose.msra.mxu0 0.0
    %1199 = vmatprep.subr.mxu0 0.0
    %1200 = vmatpush1.xpose.msra.mxu0 0.0
    %1201 = vmatprep.subr.mxu0 0.0
    %1202 = vmatpush1.xpose.msra.mxu0 0.0
    %1203 = vmatprep.subr.mxu0 0.0
    %1204 = vmatpush1.xpose.msra.mxu0 0.0
    %1205 = vmatprep.subr.mxu0 0.0
    %1206 = vmatpush1.xpose.msra.mxu0 0.0
    %1207 = vmatprep.subr.mxu0 0.0
    %1208 = vmatpush1.xpose.msra.mxu0 0.0
    %1209 = vmatprep.subr.mxu0 0.0
    %1210 = vmatpush1.xpose.msra.mxu0 0.0
    %1211 = vmatprep.subr.mxu0 0.0
    %1212 = vmatpush1.xpose.msra.mxu0 0.0
    %1213 = vmatprep.subr.mxu0 0.0
    %1214 = vmatpush1.xpose.msra.mxu0 0.0
    %1215 = vmatprep.subr.mxu0 0.0
    %1216 = vmatpush1.xpose.msra.mxu0 0.0
    %1217 = vmatprep.subr.mxu0 0.0
    %1218 = vmatpush1.xpose.msra.mxu0 0.0
    %1219 = vmatprep.subr.mxu0 0.0
    %1220 = vmatpush1.xpose.msra.mxu0 0.0
    %1221 = vmatprep.subr.mxu0 0.0
    %1222 = vmatpush1.xpose.msra.mxu0 %v1195
    %1223 = vmatprep.subr.mxu0 0.0
    %1224 = vmatpush1.xpose.msra.mxu0 %v1193
    %1225 = vmatprep.subr.mxu0 0.0
    %1226 = vmatpush1.xpose.msra.mxu0 %v1191
    %1227 = vmatprep.subr.mxu0 0.0
    %1228 = vmatpush1.xpose.msra.mxu0 %v1189
    %1229 = vmatprep.subr.mxu0 0.0
    %1230 = vmatpush2.xpose.msra.mxu0 0.0
    %1231 = vmatprep.subr.mxu0 0.0
    %1232 = vmatpush2.xpose.msra.mxu0 0.0
    %1233 = vmatprep.subr.mxu0 0.0
    %1234 = vmatpush2.xpose.msra.mxu0 0.0
    %1235 = vmatprep.subr.mxu0 0.0
    %1236 = vmatpush2.xpose.msra.mxu0 0.0
    %1237 = vmatprep.subr.mxu0 0.0
    %1238 = vmatpush2.xpose.msra.mxu0 0.0
    %1239 = vmatprep.subr.mxu0 0.0
    %1240 = vmatpush2.xpose.msra.mxu0 0.0
    %1241 = vmatprep.subr.mxu0 0.0
    %1242 = vmatpush2.xpose.msra.mxu0 0.0
    %1243 = vmatprep.subr.mxu0 0.0
    %1244 = vmatpush2.xpose.msra.mxu0 0.0
    %1245 = vmatprep.subr.mxu0 0.0
    %1246 = vmatpush2.xpose.msra.mxu0 0.0
    %1247 = vmatprep.subr.mxu0 0.0
    %1248 = vmatpush2.xpose.msra.mxu0 0.0
    %1249 = vmatprep.subr.mxu0 0.0
    %1250 = vmatpush2.xpose.msra.mxu0 0.0
    %1251 = vmatprep.subr.mxu0 0.0
    %1252 = vmatpush2.xpose.msra.mxu0 0.0
    %1253 = vmatprep.subr.mxu0 0.0
    %1254 = vmatpush2.xpose.msra.mxu0 0.0
    %1255 = vmatprep.subr.mxu0 0.0
    %1256 = vmatpush2.xpose.msra.mxu0 0.0
    %1257 = vmatprep.subr.mxu0 0.0
    %1258 = vmatpush2.xpose.msra.mxu0 0.0
    %1259 = vmatprep.subr.mxu0 0.0
    %1260 = vmatpush2.xpose.msra.mxu0 0.0
    %1261 = vmatprep.mubr.f32.mxu0 0.0
    %1262 = vmatmul.mubr.f32.gmra.mxu0 %v1187
    %v1263 = vpop.f32.mrf.mxu0
    %v1264 = vadd.f32 0.0, %v1263
    %v1265 = vpop.f32.mrf.mxu0
    %1266 = vdwg.mxu0
    %1271 = vrot.lane.b32.xlu0 %v835, 112
    %v1272 = vpop.permute.xlu0 %1271
    %1273 = vrot.lane.b32.xlu0 %v836, 112
    %v1274 = vpop.permute.xlu0 %1273
    %1275 = vrot.lane.b32.xlu0 %v837, 112
    %v1276 = vpop.permute.xlu0 %1275
    %1277 = vrot.lane.b32.xlu0 %v838, 112
    %v1278 = vpop.permute.xlu0 %1277
    %v1280 = vsel %vm403, %v799, 0
    %v1282 = vsel %vm403, %v1272, 0
    %v1284 = vsel %vm403, %v1274, 0
    %v1286 = vsel %vm403, %v1276, 0
    %v1288 = vsel %vm403, %v1278, 0
    %1290 = vmatprep.subr.mxu0 0.0
    %1291 = vmatpush1.xpose.msra.mxu0 0.0
    %1292 = vmatprep.subr.mxu0 0.0
    %1293 = vmatpush1.xpose.msra.mxu0 0.0
    %1294 = vmatprep.subr.mxu0 0.0
    %1295 = vmatpush1.xpose.msra.mxu0 0.0
    %1296 = vmatprep.subr.mxu0 0.0
    %1297 = vmatpush1.xpose.msra.mxu0 0.0
    %1298 = vmatprep.subr.mxu0 0.0
    %1299 = vmatpush1.xpose.msra.mxu0 0.0
    %1300 = vmatprep.subr.mxu0 0.0
    %1301 = vmatpush1.xpose.msra.mxu0 0.0
    %1302 = vmatprep.subr.mxu0 0.0
    %1303 = vmatpush1.xpose.msra.mxu0 0.0
    %1304 = vmatprep.subr.mxu0 0.0
    %1305 = vmatpush1.xpose.msra.mxu0 0.0
    %1306 = vmatprep.subr.mxu0 0.0
    %1307 = vmatpush1.xpose.msra.mxu0 0.0
    %1308 = vmatprep.subr.mxu0 0.0
    %1309 = vmatpush1.xpose.msra.mxu0 0.0
    %1310 = vmatprep.subr.mxu0 0.0
    %1311 = vmatpush1.xpose.msra.mxu0 0.0
    %1312 = vmatprep.subr.mxu0 0.0
    %1313 = vmatpush1.xpose.msra.mxu0 0.0
    %1314 = vmatprep.subr.mxu0 0.0
    %1315 = vmatpush1.xpose.msra.mxu0 %v1288
    %1316 = vmatprep.subr.mxu0 0.0
    %1317 = vmatpush1.xpose.msra.mxu0 %v1286
    %1318 = vmatprep.subr.mxu0 0.0
    %1319 = vmatpush1.xpose.msra.mxu0 %v1284
    %1320 = vmatprep.subr.mxu0 0.0
    %1321 = vmatpush1.xpose.msra.mxu0 %v1282
    %1322 = vmatprep.subr.mxu0 0.0
    %1323 = vmatpush2.xpose.msra.mxu0 0.0
    %1324 = vmatprep.subr.mxu0 0.0
    %1325 = vmatpush2.xpose.msra.mxu0 0.0
    %1326 = vmatprep.subr.mxu0 0.0
    %1327 = vmatpush2.xpose.msra.mxu0 0.0
    %1328 = vmatprep.subr.mxu0 0.0
    %1329 = vmatpush2.xpose.msra.mxu0 0.0
    %1330 = vmatprep.subr.mxu0 0.0
    %1331 = vmatpush2.xpose.msra.mxu0 0.0
    %1332 = vmatprep.subr.mxu0 0.0
    %1333 = vmatpush2.xpose.msra.mxu0 0.0
    %1334 = vmatprep.subr.mxu0 0.0
    %1335 = vmatpush2.xpose.msra.mxu0 0.0
    %1336 = vmatprep.subr.mxu0 0.0
    %1337 = vmatpush2.xpose.msra.mxu0 0.0
    %1338 = vmatprep.subr.mxu0 0.0
    %1339 = vmatpush2.xpose.msra.mxu0 0.0
    %1340 = vmatprep.subr.mxu0 0.0
    %1341 = vmatpush2.xpose.msra.mxu0 0.0
    %1342 = vmatprep.subr.mxu0 0.0
    %1343 = vmatpush2.xpose.msra.mxu0 0.0
    %1344 = vmatprep.subr.mxu0 0.0
    %1345 = vmatpush2.xpose.msra.mxu0 0.0
    %1346 = vmatprep.subr.mxu0 0.0
    %1347 = vmatpush2.xpose.msra.mxu0 0.0
    %1348 = vmatprep.subr.mxu0 0.0
    %1349 = vmatpush2.xpose.msra.mxu0 0.0
    %1350 = vmatprep.subr.mxu0 0.0
    %1351 = vmatpush2.xpose.msra.mxu0 0.0
    %1352 = vmatprep.subr.mxu0 0.0
    %1353 = vmatpush2.xpose.msra.mxu0 0.0
    %1354 = vmatprep.mubr.f32.mxu0 0.0
    %1355 = vmatmul.mubr.f32.gmra.mxu0 %v1280
    %v1356 = vpop.f32.mrf.mxu0
    %v1357 = vadd.f32 0.0, %v1356
    %v1358 = vpop.f32.mrf.mxu0
    %1359 = vdwg.mxu0
    %1364 = vrot.lane.b32.xlu0 %v839, 112
    %v1365 = vpop.permute.xlu0 %1364
    %1366 = vrot.lane.b32.xlu0 %v840, 112
    %v1367 = vpop.permute.xlu0 %1366
    %1368 = vrot.lane.b32.xlu0 %v841, 112
    %v1369 = vpop.permute.xlu0 %1368
    %1370 = vrot.lane.b32.xlu0 %v842, 112
    %v1371 = vpop.permute.xlu0 %1370
    %v1373 = vsel %vm403, %v800, 0
    %v1375 = vsel %vm403, %v1365, 0
    %v1377 = vsel %vm403, %v1367, 0
    %v1379 = vsel %vm403, %v1369, 0
    %v1381 = vsel %vm403, %v1371, 0
    %1383 = vmatprep.subr.mxu0 0.0
    %1384 = vmatpush1.xpose.msra.mxu0 0.0
    %1385 = vmatprep.subr.mxu0 0.0
    %1386 = vmatpush1.xpose.msra.mxu0 0.0
    %1387 = vmatprep.subr.mxu0 0.0
    %1388 = vmatpush1.xpose.msra.mxu0 0.0
    %1389 = vmatprep.subr.mxu0 0.0
    %1390 = vmatpush1.xpose.msra.mxu0 0.0
    %1391 = vmatprep.subr.mxu0 0.0
    %1392 = vmatpush1.xpose.msra.mxu0 0.0
    %1393 = vmatprep.subr.mxu0 0.0
    %1394 = vmatpush1.xpose.msra.mxu0 0.0
    %1395 = vmatprep.subr.mxu0 0.0
    %1396 = vmatpush1.xpose.msra.mxu0 0.0
    %1397 = vmatprep.subr.mxu0 0.0
    %1398 = vmatpush1.xpose.msra.mxu0 0.0
    %1399 = vmatprep.subr.mxu0 0.0
    %1400 = vmatpush1.xpose.msra.mxu0 0.0
    %1401 = vmatprep.subr.mxu0 0.0
    %1402 = vmatpush1.xpose.msra.mxu0 0.0
    %1403 = vmatprep.subr.mxu0 0.0
    %1404 = vmatpush1.xpose.msra.mxu0 0.0
    %1405 = vmatprep.subr.mxu0 0.0
    %1406 = vmatpush1.xpose.msra.mxu0 0.0
    %1407 = vmatprep.subr.mxu0 0.0
    %1408 = vmatpush1.xpose.msra.mxu0 %v1381
    %1409 = vmatprep.subr.mxu0 0.0
    %1410 = vmatpush1.xpose.msra.mxu0 %v1379
    %1411 = vmatprep.subr.mxu0 0.0
    %1412 = vmatpush1.xpose.msra.mxu0 %v1377
    %1413 = vmatprep.subr.mxu0 0.0
    %1414 = vmatpush1.xpose.msra.mxu0 %v1375
    %1415 = vmatprep.subr.mxu0 0.0
    %1416 = vmatpush2.xpose.msra.mxu0 0.0
    %1417 = vmatprep.subr.mxu0 0.0
    %1418 = vmatpush2.xpose.msra.mxu0 0.0
    %1419 = vmatprep.subr.mxu0 0.0
    %1420 = vmatpush2.xpose.msra.mxu0 0.0
    %1421 = vmatprep.subr.mxu0 0.0
    %1422 = vmatpush2.xpose.msra.mxu0 0.0
    %1423 = vmatprep.subr.mxu0 0.0
    %1424 = vmatpush2.xpose.msra.mxu0 0.0
    %1425 = vmatprep.subr.mxu0 0.0
    %1426 = vmatpush2.xpose.msra.mxu0 0.0
    %1427 = vmatprep.subr.mxu0 0.0
    %1428 = vmatpush2.xpose.msra.mxu0 0.0
    %1429 = vmatprep.subr.mxu0 0.0
    %1430 = vmatpush2.xpose.msra.mxu0 0.0
    %1431 = vmatprep.subr.mxu0 0.0
    %1432 = vmatpush2.xpose.msra.mxu0 0.0
    %1433 = vmatprep.subr.mxu0 0.0
    %1434 = vmatpush2.xpose.msra.mxu0 0.0
    %1435 = vmatprep.subr.mxu0 0.0
    %1436 = vmatpush2.xpose.msra.mxu0 0.0
    %1437 = vmatprep.subr.mxu0 0.0
    %1438 = vmatpush2.xpose.msra.mxu0 0.0
    %1439 = vmatprep.subr.mxu0 0.0
    %1440 = vmatpush2.xpose.msra.mxu0 0.0
    %1441 = vmatprep.subr.mxu0 0.0
    %1442 = vmatpush2.xpose.msra.mxu0 0.0
    %1443 = vmatprep.subr.mxu0 0.0
    %1444 = vmatpush2.xpose.msra.mxu0 0.0
    %1445 = vmatprep.subr.mxu0 0.0
    %1446 = vmatpush2.xpose.msra.mxu0 0.0
    %1447 = vmatprep.mubr.f32.mxu0 0.0
    %1448 = vmatmul.mubr.f32.gmra.mxu0 %v1373
    %v1449 = vpop.f32.mrf.mxu0
    %v1450 = vadd.f32 0.0, %v1449
    %v1451 = vpop.f32.mrf.mxu0
    %1452 = vdwg.mxu0
    %1457 = vrot.lane.b32.xlu0 %v843, 112
    %v1458 = vpop.permute.xlu0 %1457
    %1459 = vrot.lane.b32.xlu0 %v844, 112
    %v1460 = vpop.permute.xlu0 %1459
    %1461 = vrot.lane.b32.xlu0 %v845, 112
    %v1462 = vpop.permute.xlu0 %1461
    %1463 = vrot.lane.b32.xlu0 %v846, 112
    %v1464 = vpop.permute.xlu0 %1463
    %v1466 = vsel %vm403, %v801, 0
    %v1468 = vsel %vm403, %v1458, 0
    %v1470 = vsel %vm403, %v1460, 0
    %v1472 = vsel %vm403, %v1462, 0
    %v1474 = vsel %vm403, %v1464, 0
    %1476 = vmatprep.subr.mxu0 0.0
    %1477 = vmatpush1.xpose.msra.mxu0 0.0
    %1478 = vmatprep.subr.mxu0 0.0
    %1479 = vmatpush1.xpose.msra.mxu0 0.0
    %1480 = vmatprep.subr.mxu0 0.0
    %1481 = vmatpush1.xpose.msra.mxu0 0.0
    %1482 = vmatprep.subr.mxu0 0.0
    %1483 = vmatpush1.xpose.msra.mxu0 0.0
    %1484 = vmatprep.subr.mxu0 0.0
    %1485 = vmatpush1.xpose.msra.mxu0 0.0
    %1486 = vmatprep.subr.mxu0 0.0
    %1487 = vmatpush1.xpose.msra.mxu0 0.0
    %1488 = vmatprep.subr.mxu0 0.0
    %1489 = vmatpush1.xpose.msra.mxu0 0.0
    %1490 = vmatprep.subr.mxu0 0.0
    %1491 = vmatpush1.xpose.msra.mxu0 0.0
    %1492 = vmatprep.subr.mxu0 0.0
    %1493 = vmatpush1.xpose.msra.mxu0 0.0
    %1494 = vmatprep.subr.mxu0 0.0
    %1495 = vmatpush1.xpose.msra.mxu0 0.0
    %1496 = vmatprep.subr.mxu0 0.0
    %1497 = vmatpush1.xpose.msra.mxu0 0.0
    %1498 = vmatprep.subr.mxu0 0.0
    %1499 = vmatpush1.xpose.msra.mxu0 0.0
    %1500 = vmatprep.subr.mxu0 0.0
    %1501 = vmatpush1.xpose.msra.mxu0 %v1474
    %1502 = vmatprep.subr.mxu0 0.0
    %1503 = vmatpush1.xpose.msra.mxu0 %v1472
    %1504 = vmatprep.subr.mxu0 0.0
    %1505 = vmatpush1.xpose.msra.mxu0 %v1470
    %1506 = vmatprep.subr.mxu0 0.0
    %1507 = vmatpush1.xpose.msra.mxu0 %v1468
    %1508 = vmatprep.subr.mxu0 0.0
    %1509 = vmatpush2.xpose.msra.mxu0 0.0
    %1510 = vmatprep.subr.mxu0 0.0
    %1511 = vmatpush2.xpose.msra.mxu0 0.0
    %1512 = vmatprep.subr.mxu0 0.0
    %1513 = vmatpush2.xpose.msra.mxu0 0.0
    %1514 = vmatprep.subr.mxu0 0.0
    %1515 = vmatpush2.xpose.msra.mxu0 0.0
    %1516 = vmatprep.subr.mxu0 0.0
    %1517 = vmatpush2.xpose.msra.mxu0 0.0
    %1518 = vmatprep.subr.mxu0 0.0
    %1519 = vmatpush2.xpose.msra.mxu0 0.0
    %1520 = vmatprep.subr.mxu0 0.0
    %1521 = vmatpush2.xpose.msra.mxu0 0.0
    %1522 = vmatprep.subr.mxu0 0.0
    %1523 = vmatpush2.xpose.msra.mxu0 0.0
    %1524 = vmatprep.subr.mxu0 0.0
    %1525 = vmatpush2.xpose.msra.mxu0 0.0
    %1526 = vmatprep.subr.mxu0 0.0
    %1527 = vmatpush2.xpose.msra.mxu0 0.0
    %1528 = vmatprep.subr.mxu0 0.0
    %1529 = vmatpush2.xpose.msra.mxu0 0.0
    %1530 = vmatprep.subr.mxu0 0.0
    %1531 = vmatpush2.xpose.msra.mxu0 0.0
    %1532 = vmatprep.subr.mxu0 0.0
    %1533 = vmatpush2.xpose.msra.mxu0 0.0
    %1534 = vmatprep.subr.mxu0 0.0
    %1535 = vmatpush2.xpose.msra.mxu0 0.0
    %1536 = vmatprep.subr.mxu0 0.0
    %1537 = vmatpush2.xpose.msra.mxu0 0.0
    %1538 = vmatprep.subr.mxu0 0.0
    %1539 = vmatpush2.xpose.msra.mxu0 0.0
    %1540 = vmatprep.mubr.f32.mxu0 0.0
    %1541 = vmatmul.mubr.f32.gmra.mxu0 %v1466
    %v1542 = vpop.f32.mrf.mxu0
    %v1543 = vadd.f32 0.0, %v1542
    %v1544 = vpop.f32.mrf.mxu0
    %1545 = vdwg.mxu0
    %1550 = vrot.lane.b32.xlu0 %v847, 112
    %v1551 = vpop.permute.xlu0 %1550
    %1552 = vrot.lane.b32.xlu0 %v848, 112
    %v1553 = vpop.permute.xlu0 %1552
    %1554 = vrot.lane.b32.xlu0 %v849, 112
    %v1555 = vpop.permute.xlu0 %1554
    %1556 = vrot.lane.b32.xlu0 %v850, 112
    %v1557 = vpop.permute.xlu0 %1556
    %v1559 = vsel %vm403, %v802, 0
    %v1561 = vsel %vm403, %v1551, 0
    %v1563 = vsel %vm403, %v1553, 0
    %v1565 = vsel %vm403, %v1555, 0
    %v1567 = vsel %vm403, %v1557, 0
    %1569 = vmatprep.subr.mxu0 0.0
    %1570 = vmatpush1.xpose.msra.mxu0 0.0
    %1571 = vmatprep.subr.mxu0 0.0
    %1572 = vmatpush1.xpose.msra.mxu0 0.0
    %1573 = vmatprep.subr.mxu0 0.0
    %1574 = vmatpush1.xpose.msra.mxu0 0.0
    %1575 = vmatprep.subr.mxu0 0.0
    %1576 = vmatpush1.xpose.msra.mxu0 0.0
    %1577 = vmatprep.subr.mxu0 0.0
    %1578 = vmatpush1.xpose.msra.mxu0 0.0
    %1579 = vmatprep.subr.mxu0 0.0
    %1580 = vmatpush1.xpose.msra.mxu0 0.0
    %1581 = vmatprep.subr.mxu0 0.0
    %1582 = vmatpush1.xpose.msra.mxu0 0.0
    %1583 = vmatprep.subr.mxu0 0.0
    %1584 = vmatpush1.xpose.msra.mxu0 0.0
    %1585 = vmatprep.subr.mxu0 0.0
    %1586 = vmatpush1.xpose.msra.mxu0 0.0
    %1587 = vmatprep.subr.mxu0 0.0
    %1588 = vmatpush1.xpose.msra.mxu0 0.0
    %1589 = vmatprep.subr.mxu0 0.0
    %1590 = vmatpush1.xpose.msra.mxu0 0.0
    %1591 = vmatprep.subr.mxu0 0.0
    %1592 = vmatpush1.xpose.msra.mxu0 0.0
    %1593 = vmatprep.subr.mxu0 0.0
    %1594 = vmatpush1.xpose.msra.mxu0 %v1567
    %1595 = vmatprep.subr.mxu0 0.0
    %1596 = vmatpush1.xpose.msra.mxu0 %v1565
    %1597 = vmatprep.subr.mxu0 0.0
    %1598 = vmatpush1.xpose.msra.mxu0 %v1563
    %1599 = vmatprep.subr.mxu0 0.0
    %1600 = vmatpush1.xpose.msra.mxu0 %v1561
    %1601 = vmatprep.subr.mxu0 0.0
    %1602 = vmatpush2.xpose.msra.mxu0 0.0
    %1603 = vmatprep.subr.mxu0 0.0
    %1604 = vmatpush2.xpose.msra.mxu0 0.0
    %1605 = vmatprep.subr.mxu0 0.0
    %1606 = vmatpush2.xpose.msra.mxu0 0.0
    %1607 = vmatprep.subr.mxu0 0.0
    %1608 = vmatpush2.xpose.msra.mxu0 0.0
    %1609 = vmatprep.subr.mxu0 0.0
    %1610 = vmatpush2.xpose.msra.mxu0 0.0
    %1611 = vmatprep.subr.mxu0 0.0
    %1612 = vmatpush2.xpose.msra.mxu0 0.0
    %1613 = vmatprep.subr.mxu0 0.0
    %1614 = vmatpush2.xpose.msra.mxu0 0.0
    %1615 = vmatprep.subr.mxu0 0.0
    %1616 = vmatpush2.xpose.msra.mxu0 0.0
    %1617 = vmatprep.subr.mxu0 0.0
    %1618 = vmatpush2.xpose.msra.mxu0 0.0
    %1619 = vmatprep.subr.mxu0 0.0
    %1620 = vmatpush2.xpose.msra.mxu0 0.0
    %1621 = vmatprep.subr.mxu0 0.0
    %1622 = vmatpush2.xpose.msra.mxu0 0.0
    %1623 = vmatprep.subr.mxu0 0.0
    %1624 = vmatpush2.xpose.msra.mxu0 0.0
    %1625 = vmatprep.subr.mxu0 0.0
    %1626 = vmatpush2.xpose.msra.mxu0 0.0
    %1627 = vmatprep.subr.mxu0 0.0
    %1628 = vmatpush2.xpose.msra.mxu0 0.0
    %1629 = vmatprep.subr.mxu0 0.0
    %1630 = vmatpush2.xpose.msra.mxu0 0.0
    %1631 = vmatprep.subr.mxu0 0.0
    %1632 = vmatpush2.xpose.msra.mxu0 0.0
    %1633 = vmatprep.mubr.f32.mxu0 0.0
    %1634 = vmatmul.mubr.f32.gmra.mxu0 %v1559
    %v1635 = vpop.f32.mrf.mxu0
    %v1636 = vadd.f32 0.0, %v1635
    %v1637 = vpop.f32.mrf.mxu0
    %1638 = vdwg.mxu0
    %vm1639 = vcmask 64512
    %v1640 = vsel %vm1639, %v985, -inf
    %1641 = vmax.xlane.f32.xlu0 %v1640
    %v1642 = vpop.xlane.xlu0 %1641
    %v1643 = vsel %vm1639, %v1078, -inf
    %1644 = vmax.xlane.f32.xlu0 %v1643
    %v1645 = vpop.xlane.xlu0 %1644
    %v1646 = vsel %vm1639, %v1171, -inf
    %1647 = vmax.xlane.f32.xlu0 %v1646
    %v1648 = vpop.xlane.xlu0 %1647
    %v1649 = vsel %vm1639, %v1264, -inf
    %1650 = vmax.xlane.f32.xlu0 %v1649
    %v1651 = vpop.xlane.xlu0 %1650
    %v1652 = vsel %vm1639, %v1357, -inf
    %1653 = vmax.xlane.f32.xlu0 %v1652
    %v1654 = vpop.xlane.xlu0 %1653
    %v1655 = vsel %vm1639, %v1450, -inf
    %1656 = vmax.xlane.f32.xlu0 %v1655
    %v1657 = vpop.xlane.xlu0 %1656
    %v1658 = vsel %vm1639, %v1543, -inf
    %1659 = vmax.xlane.f32.xlu0 %v1658
    %v1660 = vpop.xlane.xlu0 %1659
    %v1661 = vsel %vm1639, %v1636, -inf
    %1662 = vmax.xlane.f32.xlu0 %v1661
    %v1663 = vpop.xlane.xlu0 %1662
    %v1664 = vsub.f32 %v985, %v1642
    %v1665 = vsub.f32 %v1078, %v1645
    %v1666 = vsub.f32 %v1171, %v1648
    %v1667 = vsub.f32 %v1264, %v1651
    %v1668 = vsub.f32 %v1357, %v1654
    %v1669 = vsub.f32 %v1450, %v1657
    %v1670 = vsub.f32 %v1543, %v1660
    %v1671 = vsub.f32 %v1636, %v1663
    %v1672 = vmul.f32 %v1664, 1.442695
    %v1673 = vpow.pop %v1672
    %v1674 = vmul.f32 %v1665, 1.442695
    %v1675 = vpow.pop %v1674
    %v1676 = vmul.f32 %v1666, 1.442695
    %v1677 = vpow.pop %v1676
    %v1678 = vmul.f32 %v1667, 1.442695
    %v1679 = vpow.pop %v1678
    %v1680 = vmul.f32 %v1668, 1.442695
    %v1681 = vpow.pop %v1680
    %v1682 = vmul.f32 %v1669, 1.442695
    %v1683 = vpow.pop %v1682
    %v1684 = vmul.f32 %v1670, 1.442695
    %v1685 = vpow.pop %v1684
    %v1686 = vmul.f32 %v1671, 1.442695
    %v1687 = vpow.pop %v1686
    %v1688 = vsel %vm1639, %v1673, 0.0
    %1689 = vadd.xlane.f32.xlu0 %v1688
    %v1690 = vpop.xlane.xlu0 %1689
    %v1691 = vsel %vm1639, %v1675, 0.0
    %1692 = vadd.xlane.f32.xlu0 %v1691
    %v1693 = vpop.xlane.xlu0 %1692
    %v1694 = vsel %vm1639, %v1677, 0.0
    %1695 = vadd.xlane.f32.xlu0 %v1694
    %v1696 = vpop.xlane.xlu0 %1695
    %v1697 = vsel %vm1639, %v1679, 0.0
    %1698 = vadd.xlane.f32.xlu0 %v1697
    %v1699 = vpop.xlane.xlu0 %1698
    %v1700 = vsel %vm1639, %v1681, 0.0
    %1701 = vadd.xlane.f32.xlu0 %v1700
    %v1702 = vpop.xlane.xlu0 %1701
    %v1703 = vsel %vm1639, %v1683, 0.0
    %1704 = vadd.xlane.f32.xlu0 %v1703
    %v1705 = vpop.xlane.xlu0 %1704
    %v1706 = vsel %vm1639, %v1685, 0.0
    %1707 = vadd.xlane.f32.xlu0 %v1706
    %v1708 = vpop.xlane.xlu0 %1707
    %v1709 = vsel %vm1639, %v1687, 0.0
    %1710 = vadd.xlane.f32.xlu0 %v1709
    %v1711 = vpop.xlane.xlu0 %1710
    %v1712 = vrcp.pop %v1690
    %v1713 = vmul.f32 %v1673, %v1712
    %v1714 = vrcp.pop %v1693
    %v1715 = vmul.f32 %v1675, %v1714
    %v1716 = vrcp.pop %v1696
    %v1717 = vmul.f32 %v1677, %v1716
    %v1718 = vrcp.pop %v1699
    %v1719 = vmul.f32 %v1679, %v1718
    %v1720 = vrcp.pop %v1702
    %v1721 = vmul.f32 %v1681, %v1720
    %v1722 = vrcp.pop %v1705
    %v1723 = vmul.f32 %v1683, %v1722
    %v1724 = vrcp.pop %v1708
    %v1725 = vmul.f32 %v1685, %v1724
    %v1726 = vrcp.pop %v1711
    %v1727 = vmul.f32 %v1687, %v1726
    %vm1728 = vcmask 130112
    %v1729 = vsel %vm1728, %v985, -inf
    %1730 = vmax.xlane.f32.xlu0 %v1729
    %v1731 = vpop.xlane.xlu0 %1730
    %v1732 = vsel %vm1728, %v1078, -inf
    %1733 = vmax.xlane.f32.xlu0 %v1732
    %v1734 = vpop.xlane.xlu0 %1733
    %v1735 = vsel %vm1728, %v1171, -inf
    %1736 = vmax.xlane.f32.xlu0 %v1735
    %v1737 = vpop.xlane.xlu0 %1736
    %v1738 = vsel %vm1728, %v1264, -inf
    %1739 = vmax.xlane.f32.xlu0 %v1738
    %v1740 = vpop.xlane.xlu0 %1739
    %v1741 = vsel %vm1728, %v1357, -inf
    %1742 = vmax.xlane.f32.xlu0 %v1741
    %v1743 = vpop.xlane.xlu0 %1742
    %v1744 = vsel %vm1728, %v1450, -inf
    %1745 = vmax.xlane.f32.xlu0 %v1744
    %v1746 = vpop.xlane.xlu0 %1745
    %v1747 = vsel %vm1728, %v1543, -inf
    %1748 = vmax.xlane.f32.xlu0 %v1747
    %v1749 = vpop.xlane.xlu0 %1748
    %v1750 = vsel %vm1728, %v1636, -inf
    %1751 = vmax.xlane.f32.xlu0 %v1750
    %v1752 = vpop.xlane.xlu0 %1751
    %v1753 = vsub.f32 %v985, %v1731
    %v1754 = vsub.f32 %v1078, %v1734
    %v1755 = vsub.f32 %v1171, %v1737
    %v1756 = vsub.f32 %v1264, %v1740
    %v1757 = vsub.f32 %v1357, %v1743
    %v1758 = vsub.f32 %v1450, %v1746
    %v1759 = vsub.f32 %v1543, %v1749
    %v1760 = vsub.f32 %v1636, %v1752
    %v1761 = vmul.f32 %v1753, 1.442695
    %v1762 = vpow.pop %v1761
    %v1763 = vmul.f32 %v1754, 1.442695
    %v1764 = vpow.pop %v1763
    %v1765 = vmul.f32 %v1755, 1.442695
    %v1766 = vpow.pop %v1765
    %v1767 = vmul.f32 %v1756, 1.442695
    %v1768 = vpow.pop %v1767
    %v1769 = vmul.f32 %v1757, 1.442695
    %v1770 = vpow.pop %v1769
    %v1771 = vmul.f32 %v1758, 1.442695
    %v1772 = vpow.pop %v1771
    %v1773 = vmul.f32 %v1759, 1.442695
    %v1774 = vpow.pop %v1773
    %v1775 = vmul.f32 %v1760, 1.442695
    %v1776 = vpow.pop %v1775
    %1785 = vrot.lane.b32.xlu0 %v1762, 120
    %v1786 = vpop.permute.xlu0 %1785
    %1787 = vrot.lane.b32.xlu0 %v1764, 120
    %v1788 = vpop.permute.xlu0 %1787
    %1789 = vrot.lane.b32.xlu0 %v1766, 120
    %v1790 = vpop.permute.xlu0 %1789
    %1791 = vrot.lane.b32.xlu0 %v1768, 120
    %v1792 = vpop.permute.xlu0 %1791
    %1793 = vrot.lane.b32.xlu0 %v1770, 120
    %v1794 = vpop.permute.xlu0 %1793
    %1795 = vrot.lane.b32.xlu0 %v1772, 120
    %v1796 = vpop.permute.xlu0 %1795
    %1797 = vrot.lane.b32.xlu0 %v1774, 120
    %v1798 = vpop.permute.xlu0 %1797
    %1799 = vrot.lane.b32.xlu0 %v1776, 120
    %v1800 = vpop.permute.xlu0 %1799
    %v1809 = vsel %vm1639, %v1786, 0.0
    %1810 = vadd.xlane.f32.xlu0 %v1809
    %v1811 = vpop.xlane.xlu0 %1810
    %v1812 = vsel %vm1639, %v1788, 0.0
    %1813 = vadd.xlane.f32.xlu0 %v1812
    %v1814 = vpop.xlane.xlu0 %1813
    %v1815 = vsel %vm1639, %v1790, 0.0
    %1816 = vadd.xlane.f32.xlu0 %v1815
    %v1817 = vpop.xlane.xlu0 %1816
    %v1818 = vsel %vm1639, %v1792, 0.0
    %1819 = vadd.xlane.f32.xlu0 %v1818
    %v1820 = vpop.xlane.xlu0 %1819
    %v1821 = vsel %vm1639, %v1794, 0.0
    %1822 = vadd.xlane.f32.xlu0 %v1821
    %v1823 = vpop.xlane.xlu0 %1822
    %v1824 = vsel %vm1639, %v1796, 0.0
    %1825 = vadd.xlane.f32.xlu0 %v1824
    %v1826 = vpop.xlane.xlu0 %1825
    %v1827 = vsel %vm1639, %v1798, 0.0
    %1828 = vadd.xlane.f32.xlu0 %v1827
    %v1829 = vpop.xlane.xlu0 %1828
    %v1830 = vsel %vm1639, %v1800, 0.0
    %1831 = vadd.xlane.f32.xlu0 %v1830
    %v1832 = vpop.xlane.xlu0 %1831
    %v1833 = vrcp.pop %v1811
    %v1834 = vmul.f32 %v1762, %v1833
    %v1835 = vrcp.pop %v1814
    %v1836 = vmul.f32 %v1764, %v1835
    %v1837 = vrcp.pop %v1817
    %v1838 = vmul.f32 %v1766, %v1837
    %v1839 = vrcp.pop %v1820
    %v1840 = vmul.f32 %v1768, %v1839
    %v1841 = vrcp.pop %v1823
    %v1842 = vmul.f32 %v1770, %v1841
    %v1843 = vrcp.pop %v1826
    %v1844 = vmul.f32 %v1772, %v1843
    %v1845 = vrcp.pop %v1829
    %v1846 = vmul.f32 %v1774, %v1845
    %v1847 = vrcp.pop %v1832
    %v1848 = vmul.f32 %v1776, %v1847
    %vm1849 = vcmask 195712
    %v1850 = vsel %vm1849, %v985, -inf
    %1851 = vmax.xlane.f32.xlu0 %v1850
    %v1852 = vpop.xlane.xlu0 %1851
    %v1853 = vsel %vm1849, %v1078, -inf
    %1854 = vmax.xlane.f32.xlu0 %v1853
    %v1855 = vpop.xlane.xlu0 %1854
    %v1856 = vsel %vm1849, %v1171, -inf
    %1857 = vmax.xlane.f32.xlu0 %v1856
    %v1858 = vpop.xlane.xlu0 %1857
    %v1859 = vsel %vm1849, %v1264, -inf
    %1860 = vmax.xlane.f32.xlu0 %v1859
    %v1861 = vpop.xlane.xlu0 %1860
    %v1862 = vsel %vm1849, %v1357, -inf
    %1863 = vmax.xlane.f32.xlu0 %v1862
    %v1864 = vpop.xlane.xlu0 %1863
    %v1865 = vsel %vm1849, %v1450, -inf
    %1866 = vmax.xlane.f32.xlu0 %v1865
    %v1867 = vpop.xlane.xlu0 %1866
    %v1868 = vsel %vm1849, %v1543, -inf
    %1869 = vmax.xlane.f32.xlu0 %v1868
    %v1870 = vpop.xlane.xlu0 %1869
    %v1871 = vsel %vm1849, %v1636, -inf
    %1872 = vmax.xlane.f32.xlu0 %v1871
    %v1873 = vpop.xlane.xlu0 %1872
    %v1874 = vsub.f32 %v985, %v1852
    %v1875 = vsub.f32 %v1078, %v1855
    %v1876 = vsub.f32 %v1171, %v1858
    %v1877 = vsub.f32 %v1264, %v1861
    %v1878 = vsub.f32 %v1357, %v1864
    %v1879 = vsub.f32 %v1450, %v1867
    %v1880 = vsub.f32 %v1543, %v1870
    %v1881 = vsub.f32 %v1636, %v1873
    %v1882 = vmul.f32 %v1874, 1.442695
    %v1883 = vpow.pop %v1882
    %v1884 = vmul.f32 %v1875, 1.442695
    %v1885 = vpow.pop %v1884
    %v1886 = vmul.f32 %v1876, 1.442695
    %v1887 = vpow.pop %v1886
    %v1888 = vmul.f32 %v1877, 1.442695
    %v1889 = vpow.pop %v1888
    %v1890 = vmul.f32 %v1878, 1.442695
    %v1891 = vpow.pop %v1890
    %v1892 = vmul.f32 %v1879, 1.442695
    %v1893 = vpow.pop %v1892
    %v1894 = vmul.f32 %v1880, 1.442695
    %v1895 = vpow.pop %v1894
    %v1896 = vmul.f32 %v1881, 1.442695
    %v1897 = vpow.pop %v1896
    %1906 = vrot.lane.b32.xlu0 %v1883, 112
    %v1907 = vpop.permute.xlu0 %1906
    %1908 = vrot.lane.b32.xlu0 %v1885, 112
    %v1909 = vpop.permute.xlu0 %1908
    %1910 = vrot.lane.b32.xlu0 %v1887, 112
    %v1911 = vpop.permute.xlu0 %1910
    %1912 = vrot.lane.b32.xlu0 %v1889, 112
    %v1913 = vpop.permute.xlu0 %1912
    %1914 = vrot.lane.b32.xlu0 %v1891, 112
    %v1915 = vpop.permute.xlu0 %1914
    %1916 = vrot.lane.b32.xlu0 %v1893, 112
    %v1917 = vpop.permute.xlu0 %1916
    %1918 = vrot.lane.b32.xlu0 %v1895, 112
    %v1919 = vpop.permute.xlu0 %1918
    %1920 = vrot.lane.b32.xlu0 %v1897, 112
    %v1921 = vpop.permute.xlu0 %1920
    %v1930 = vsel %vm1639, %v1907, 0.0
    %1931 = vadd.xlane.f32.xlu0 %v1930
    %v1932 = vpop.xlane.xlu0 %1931
    %v1933 = vsel %vm1639, %v1909, 0.0
    %1934 = vadd.xlane.f32.xlu0 %v1933
    %v1935 = vpop.xlane.xlu0 %1934
    %v1936 = vsel %vm1639, %v1911, 0.0
    %1937 = vadd.xlane.f32.xlu0 %v1936
    %v1938 = vpop.xlane.xlu0 %1937
    %v1939 = vsel %vm1639, %v1913, 0.0
    %1940 = vadd.xlane.f32.xlu0 %v1939
    %v1941 = vpop.xlane.xlu0 %1940
    %v1942 = vsel %vm1639, %v1915, 0.0
    %1943 = vadd.xlane.f32.xlu0 %v1942
    %v1944 = vpop.xlane.xlu0 %1943
    %v1945 = vsel %vm1639, %v1917, 0.0
    %1946 = vadd.xlane.f32.xlu0 %v1945
    %v1947 = vpop.xlane.xlu0 %1946
    %v1948 = vsel %vm1639, %v1919, 0.0
    %1949 = vadd.xlane.f32.xlu0 %v1948
    %v1950 = vpop.xlane.xlu0 %1949
    %v1951 = vsel %vm1639, %v1921, 0.0
    %1952 = vadd.xlane.f32.xlu0 %v1951
    %v1953 = vpop.xlane.xlu0 %1952
    %v1954 = vrcp.pop %v1932
    %v1955 = vmul.f32 %v1883, %v1954
    %v1956 = vrcp.pop %v1935
    %v1957 = vmul.f32 %v1885, %v1956
    %v1958 = vrcp.pop %v1938
    %v1959 = vmul.f32 %v1887, %v1958
    %v1960 = vrcp.pop %v1941
    %v1961 = vmul.f32 %v1889, %v1960
    %v1962 = vrcp.pop %v1944
    %v1963 = vmul.f32 %v1891, %v1962
    %v1964 = vrcp.pop %v1947
    %v1965 = vmul.f32 %v1893, %v1964
    %v1966 = vrcp.pop %v1950
    %v1967 = vmul.f32 %v1895, %v1966
    %v1968 = vrcp.pop %v1953
    %v1969 = vmul.f32 %v1897, %v1968
    %vm1970 = vcmask 261312
    %v1971 = vsel %vm1970, %v985, -inf
    %1972 = vmax.xlane.f32.xlu0 %v1971
    %v1973 = vpop.xlane.xlu0 %1972
    %v1974 = vsel %vm1970, %v1078, -inf
    %1975 = vmax.xlane.f32.xlu0 %v1974
    %v1976 = vpop.xlane.xlu0 %1975
    %v1977 = vsel %vm1970, %v1171, -inf
    %1978 = vmax.xlane.f32.xlu0 %v1977
    %v1979 = vpop.xlane.xlu0 %1978
    %v1980 = vsel %vm1970, %v1264, -inf
    %1981 = vmax.xlane.f32.xlu0 %v1980
    %v1982 = vpop.xlane.xlu0 %1981
    %v1983 = vsel %vm1970, %v1357, -inf
    %1984 = vmax.xlane.f32.xlu0 %v1983
    %v1985 = vpop.xlane.xlu0 %1984
    %v1986 = vsel %vm1970, %v1450, -inf
    %1987 = vmax.xlane.f32.xlu0 %v1986
    %v1988 = vpop.xlane.xlu0 %1987
    %v1989 = vsel %vm1970, %v1543, -inf
    %1990 = vmax.xlane.f32.xlu0 %v1989
    %v1991 = vpop.xlane.xlu0 %1990
    %v1992 = vsel %vm1970, %v1636, -inf
    %1993 = vmax.xlane.f32.xlu0 %v1992
    %v1994 = vpop.xlane.xlu0 %1993
    %v1995 = vsub.f32 %v985, %v1973
    %v1996 = vsub.f32 %v1078, %v1976
    %v1997 = vsub.f32 %v1171, %v1979
    %v1998 = vsub.f32 %v1264, %v1982
    %v1999 = vsub.f32 %v1357, %v1985
    %v2000 = vsub.f32 %v1450, %v1988
    %v2001 = vsub.f32 %v1543, %v1991
    %v2002 = vsub.f32 %v1636, %v1994
    %v2003 = vmul.f32 %v1995, 1.442695
    %v2004 = vpow.pop %v2003
    %v2005 = vmul.f32 %v1996, 1.442695
    %v2006 = vpow.pop %v2005
    %v2007 = vmul.f32 %v1997, 1.442695
    %v2008 = vpow.pop %v2007
    %v2009 = vmul.f32 %v1998, 1.442695
    %v2010 = vpow.pop %v2009
    %v2011 = vmul.f32 %v1999, 1.442695
    %v2012 = vpow.pop %v2011
    %v2013 = vmul.f32 %v2000, 1.442695
    %v2014 = vpow.pop %v2013
    %v2015 = vmul.f32 %v2001, 1.442695
    %v2016 = vpow.pop %v2015
    %v2017 = vmul.f32 %v2002, 1.442695
    %v2018 = vpow.pop %v2017
    %2027 = vrot.lane.b32.xlu0 %v2004, 104
    %v2028 = vpop.permute.xlu0 %2027
    %2029 = vrot.lane.b32.xlu0 %v2006, 104
    %v2030 = vpop.permute.xlu0 %2029
    %2031 = vrot.lane.b32.xlu0 %v2008, 104
    %v2032 = vpop.permute.xlu0 %2031
    %2033 = vrot.lane.b32.xlu0 %v2010, 104
    %v2034 = vpop.permute.xlu0 %2033
    %2035 = vrot.lane.b32.xlu0 %v2012, 104
    %v2036 = vpop.permute.xlu0 %2035
    %2037 = vrot.lane.b32.xlu0 %v2014, 104
    %v2038 = vpop.permute.xlu0 %2037
    %2039 = vrot.lane.b32.xlu0 %v2016, 104
    %v2040 = vpop.permute.xlu0 %2039
    %2041 = vrot.lane.b32.xlu0 %v2018, 104
    %v2042 = vpop.permute.xlu0 %2041
    %v2051 = vsel %vm1639, %v2028, 0.0
    %2052 = vadd.xlane.f32.xlu0 %v2051
    %v2053 = vpop.xlane.xlu0 %2052
    %v2054 = vsel %vm1639, %v2030, 0.0
    %2055 = vadd.xlane.f32.xlu0 %v2054
    %v2056 = vpop.xlane.xlu0 %2055
    %v2057 = vsel %vm1639, %v2032, 0.0
    %2058 = vadd.xlane.f32.xlu0 %v2057
    %v2059 = vpop.xlane.xlu0 %2058
    %v2060 = vsel %vm1639, %v2034, 0.0
    %2061 = vadd.xlane.f32.xlu0 %v2060
    %v2062 = vpop.xlane.xlu0 %2061
    %v2063 = vsel %vm1639, %v2036, 0.0
    %2064 = vadd.xlane.f32.xlu0 %v2063
    %v2065 = vpop.xlane.xlu0 %2064
    %v2066 = vsel %vm1639, %v2038, 0.0
    %2067 = vadd.xlane.f32.xlu0 %v2066
    %v2068 = vpop.xlane.xlu0 %2067
    %v2069 = vsel %vm1639, %v2040, 0.0
    %2070 = vadd.xlane.f32.xlu0 %v2069
    %v2071 = vpop.xlane.xlu0 %2070
    %v2072 = vsel %vm1639, %v2042, 0.0
    %2073 = vadd.xlane.f32.xlu0 %v2072
    %v2074 = vpop.xlane.xlu0 %2073
    %v2075 = vrcp.pop %v2053
    %v2076 = vmul.f32 %v2004, %v2075
    %v2077 = vrcp.pop %v2056
    %v2078 = vmul.f32 %v2006, %v2077
    %v2079 = vrcp.pop %v2059
    %v2080 = vmul.f32 %v2008, %v2079
    %v2081 = vrcp.pop %v2062
    %v2082 = vmul.f32 %v2010, %v2081
    %v2083 = vrcp.pop %v2065
    %v2084 = vmul.f32 %v2012, %v2083
    %v2085 = vrcp.pop %v2068
    %v2086 = vmul.f32 %v2014, %v2085
    %v2087 = vrcp.pop %v2071
    %v2088 = vmul.f32 %v2016, %v2087
    %v2089 = vrcp.pop %v2074
    %v2090 = vmul.f32 %v2018, %v2089
    %v2091 = vsel %vm1639, %v1713, %v1834
    %v2092 = vsel %vm1639, %v1715, %v1836
    %v2093 = vsel %vm1639, %v1717, %v1838
    %v2094 = vsel %vm1639, %v1719, %v1840
    %v2095 = vsel %vm1639, %v1721, %v1842
    %v2096 = vsel %vm1639, %v1723, %v1844
    %v2097 = vsel %vm1639, %v1725, %v1846
    %v2098 = vsel %vm1639, %v1727, %v1848
    %v2099 = vsel %vm403, %v2091, %v1955
    %v2100 = vsel %vm403, %v2092, %v1957
    %v2101 = vsel %vm403, %v2093, %v1959
    %v2102 = vsel %vm403, %v2094, %v1961
    %v2103 = vsel %vm403, %v2095, %v1963
    %v2104 = vsel %vm403, %v2096, %v1965
    %v2105 = vsel %vm403, %v2097, %v1967
    %v2106 = vsel %vm403, %v2098, %v1969
    %vm2107 = vcmask 195584
    %v2108 = vsel %vm2107, %v2099, %v2076
    %v2109 = vsel %vm2107, %v2100, %v2078
    %v2110 = vsel %vm2107, %v2101, %v2080
    %v2111 = vsel %vm2107, %v2102, %v2082
    %v2112 = vsel %vm2107, %v2103, %v2084
    %v2113 = vsel %vm2107, %v2104, %v2086
    %v2114 = vsel %vm2107, %v2105, %v2088
    %v2115 = vsel %vm2107, %v2106, %v2090
    %2120 = vrot.lane.b32.xlu0 %v863, 96
    %v2121 = vpop.permute.xlu0 %2120
    %2122 = vrot.lane.b32.xlu0 %v864, 96
    %v2123 = vpop.permute.xlu0 %2122
    %2124 = vrot.lane.b32.xlu0 %v865, 96
    %v2125 = vpop.permute.xlu0 %2124
    %2126 = vrot.lane.b32.xlu0 %v866, 96
    %v2127 = vpop.permute.xlu0 %2126
    %vm2132 = vcmask 261120
    %v2134 = vsel %vm2132, %v2108, 0
    %2136 = vmatprep.subr.mxu0 0.0
    %2137 = vmatpush1.msra.mxu0 0.0
    %2138 = vmatprep.subr.mxu0 0.0
    %2139 = vmatpush1.msra.mxu0 0.0
    %2140 = vmatprep.subr.mxu0 0.0
    %2141 = vmatpush1.msra.mxu0 0.0
    %2142 = vmatprep.subr.mxu0 0.0
    %2143 = vmatpush1.msra.mxu0 0.0
    %2144 = vmatprep.subr.mxu0 0.0
    %2145 = vmatpush1.msra.mxu0 0.0
    %2146 = vmatprep.subr.mxu0 0.0
    %2147 = vmatpush1.msra.mxu0 0.0
    %2148 = vmatprep.subr.mxu0 0.0
    %2149 = vmatpush1.msra.mxu0 0.0
    %2150 = vmatprep.subr.mxu0 0.0
    %2151 = vmatpush1.msra.mxu0 0.0
    %2152 = vmatprep.subr.mxu0 0.0
    %2153 = vmatpush1.msra.mxu0 0.0
    %2154 = vmatprep.subr.mxu0 0.0
    %2155 = vmatpush1.msra.mxu0 0.0
    %2156 = vmatprep.subr.mxu0 0.0
    %2157 = vmatpush1.msra.mxu0 0.0
    %2158 = vmatprep.subr.mxu0 0.0
    %2159 = vmatpush1.msra.mxu0 0.0
    %2160 = vmatprep.subr.mxu0 0.0
    %2161 = vmatpush1.msra.mxu0 %v2127
    %2162 = vmatprep.subr.mxu0 0.0
    %2163 = vmatpush1.msra.mxu0 %v2125
    %2164 = vmatprep.subr.mxu0 0.0
    %2165 = vmatpush1.msra.mxu0 %v2123
    %2166 = vmatprep.subr.mxu0 0.0
    %2167 = vmatpush1.msra.mxu0 %v2121
    %2168 = vmatprep.subr.mxu0 0.0
    %2169 = vmatpush2.msra.mxu0 0.0
    %2170 = vmatprep.subr.mxu0 0.0
    %2171 = vmatpush2.msra.mxu0 0.0
    %2172 = vmatprep.subr.mxu0 0.0
    %2173 = vmatpush2.msra.mxu0 0.0
    %2174 = vmatprep.subr.mxu0 0.0
    %2175 = vmatpush2.msra.mxu0 0.0
    %2176 = vmatprep.subr.mxu0 0.0
    %2177 = vmatpush2.msra.mxu0 0.0
    %2178 = vmatprep.subr.mxu0 0.0
    %2179 = vmatpush2.msra.mxu0 0.0
    %2180 = vmatprep.subr.mxu0 0.0
    %2181 = vmatpush2.msra.mxu0 0.0
    %2182 = vmatprep.subr.mxu0 0.0
    %2183 = vmatpush2.msra.mxu0 0.0
    %2184 = vmatprep.subr.mxu0 0.0
    %2185 = vmatpush2.msra.mxu0 0.0
    %2186 = vmatprep.subr.mxu0 0.0
    %2187 = vmatpush2.msra.mxu0 0.0
    %2188 = vmatprep.subr.mxu0 0.0
    %2189 = vmatpush2.msra.mxu0 0.0
    %2190 = vmatprep.subr.mxu0 0.0
    %2191 = vmatpush2.msra.mxu0 0.0
    %2192 = vmatprep.subr.mxu0 0.0
    %2193 = vmatpush2.msra.mxu0 0.0
    %2194 = vmatprep.subr.mxu0 0.0
    %2195 = vmatpush2.msra.mxu0 0.0
    %2196 = vmatprep.subr.mxu0 0.0
    %2197 = vmatpush2.msra.mxu0 0.0
    %2198 = vmatprep.subr.mxu0 0.0
    %2199 = vmatpush2.msra.mxu0 0.0
    %2200 = vmatprep.mubr.f32.mxu0 0.0
    %2201 = vmatmul.mubr.f32.gmra.mxu0 %v2134
    %v2202 = vpop.f32.mrf.mxu0
    %v2203 = vadd.f32 0.0, %v2202
    %v2204 = vpop.f32.mrf.mxu0
    %2205 = vdwg.mxu0
    %2210 = vrot.lane.b32.xlu0 %v867, 96
    %v2211 = vpop.permute.xlu0 %2210
    %2212 = vrot.lane.b32.xlu0 %v868, 96
    %v2213 = vpop.permute.xlu0 %2212
    %2214 = vrot.lane.b32.xlu0 %v869, 96
    %v2215 = vpop.permute.xlu0 %2214
    %2216 = vrot.lane.b32.xlu0 %v870, 96
    %v2217 = vpop.permute.xlu0 %2216
    %v2223 = vsel %vm2132, %v2109, 0
    %2225 = vmatprep.subr.mxu0 0.0
    %2226 = vmatpush1.msra.mxu0 0.0
    %2227 = vmatprep.subr.mxu0 0.0
    %2228 = vmatpush1.msra.mxu0 0.0
    %2229 = vmatprep.subr.mxu0 0.0
    %2230 = vmatpush1.msra.mxu0 0.0
    %2231 = vmatprep.subr.mxu0 0.0
    %2232 = vmatpush1.msra.mxu0 0.0
    %2233 = vmatprep.subr.mxu0 0.0
    %2234 = vmatpush1.msra.mxu0 0.0
    %2235 = vmatprep.subr.mxu0 0.0
    %2236 = vmatpush1.msra.mxu0 0.0
    %2237 = vmatprep.subr.mxu0 0.0
    %2238 = vmatpush1.msra.mxu0 0.0
    %2239 = vmatprep.subr.mxu0 0.0
    %2240 = vmatpush1.msra.mxu0 0.0
    %2241 = vmatprep.subr.mxu0 0.0
    %2242 = vmatpush1.msra.mxu0 0.0
    %2243 = vmatprep.subr.mxu0 0.0
    %2244 = vmatpush1.msra.mxu0 0.0
    %2245 = vmatprep.subr.mxu0 0.0
    %2246 = vmatpush1.msra.mxu0 0.0
    %2247 = vmatprep.subr.mxu0 0.0
    %2248 = vmatpush1.msra.mxu0 0.0
    %2249 = vmatprep.subr.mxu0 0.0
    %2250 = vmatpush1.msra.mxu0 %v2217
    %2251 = vmatprep.subr.mxu0 0.0
    %2252 = vmatpush1.msra.mxu0 %v2215
    %2253 = vmatprep.subr.mxu0 0.0
    %2254 = vmatpush1.msra.mxu0 %v2213
    %2255 = vmatprep.subr.mxu0 0.0
    %2256 = vmatpush1.msra.mxu0 %v2211
    %2257 = vmatprep.subr.mxu0 0.0
    %2258 = vmatpush2.msra.mxu0 0.0
    %2259 = vmatprep.subr.mxu0 0.0
    %2260 = vmatpush2.msra.mxu0 0.0
    %2261 = vmatprep.subr.mxu0 0.0
    %2262 = vmatpush2.msra.mxu0 0.0
    %2263 = vmatprep.subr.mxu0 0.0
    %2264 = vmatpush2.msra.mxu0 0.0
    %2265 = vmatprep.subr.mxu0 0.0
    %2266 = vmatpush2.msra.mxu0 0.0
    %2267 = vmatprep.subr.mxu0 0.0
    %2268 = vmatpush2.msra.mxu0 0.0
    %2269 = vmatprep.subr.mxu0 0.0
    %2270 = vmatpush2.msra.mxu0 0.0
    %2271 = vmatprep.subr.mxu0 0.0
    %2272 = vmatpush2.msra.mxu0 0.0
    %2273 = vmatprep.subr.mxu0 0.0
    %2274 = vmatpush2.msra.mxu0 0.0
    %2275 = vmatprep.subr.mxu0 0.0
    %2276 = vmatpush2.msra.mxu0 0.0
    %2277 = vmatprep.subr.mxu0 0.0
    %2278 = vmatpush2.msra.mxu0 0.0
    %2279 = vmatprep.subr.mxu0 0.0
    %2280 = vmatpush2.msra.mxu0 0.0
    %2281 = vmatprep.subr.mxu0 0.0
    %2282 = vmatpush2.msra.mxu0 0.0
    %2283 = vmatprep.subr.mxu0 0.0
    %2284 = vmatpush2.msra.mxu0 0.0
    %2285 = vmatprep.subr.mxu0 0.0
    %2286 = vmatpush2.msra.mxu0 0.0
    %2287 = vmatprep.subr.mxu0 0.0
    %2288 = vmatpush2.msra.mxu0 0.0
    %2289 = vmatprep.mubr.f32.mxu0 0.0
    %2290 = vmatmul.mubr.f32.gmra.mxu0 %v2223
    %v2291 = vpop.f32.mrf.mxu0
    %v2292 = vadd.f32 0.0, %v2291
    %v2293 = vpop.f32.mrf.mxu0
    %2294 = vdwg.mxu0
    %2299 = vrot.lane.b32.xlu0 %v871, 96
    %v2300 = vpop.permute.xlu0 %2299
    %2301 = vrot.lane.b32.xlu0 %v872, 96
    %v2302 = vpop.permute.xlu0 %2301
    %2303 = vrot.lane.b32.xlu0 %v873, 96
    %v2304 = vpop.permute.xlu0 %2303
    %2305 = vrot.lane.b32.xlu0 %v874, 96
    %v2306 = vpop.permute.xlu0 %2305
    %v2312 = vsel %vm2132, %v2110, 0
    %2314 = vmatprep.subr.mxu0 0.0
    %2315 = vmatpush1.msra.mxu0 0.0
    %2316 = vmatprep.subr.mxu0 0.0
    %2317 = vmatpush1.msra.mxu0 0.0
    %2318 = vmatprep.subr.mxu0 0.0
    %2319 = vmatpush1.msra.mxu0 0.0
    %2320 = vmatprep.subr.mxu0 0.0
    %2321 = vmatpush1.msra.mxu0 0.0
    %2322 = vmatprep.subr.mxu0 0.0
    %2323 = vmatpush1.msra.mxu0 0.0
    %2324 = vmatprep.subr.mxu0 0.0
    %2325 = vmatpush1.msra.mxu0 0.0
    %2326 = vmatprep.subr.mxu0 0.0
    %2327 = vmatpush1.msra.mxu0 0.0
    %2328 = vmatprep.subr.mxu0 0.0
    %2329 = vmatpush1.msra.mxu0 0.0
    %2330 = vmatprep.subr.mxu0 0.0
    %2331 = vmatpush1.msra.mxu0 0.0
    %2332 = vmatprep.subr.mxu0 0.0
    %2333 = vmatpush1.msra.mxu0 0.0
    %2334 = vmatprep.subr.mxu0 0.0
    %2335 = vmatpush1.msra.mxu0 0.0
    %2336 = vmatprep.subr.mxu0 0.0
    %2337 = vmatpush1.msra.mxu0 0.0
    %2338 = vmatprep.subr.mxu0 0.0
    %2339 = vmatpush1.msra.mxu0 %v2306
    %2340 = vmatprep.subr.mxu0 0.0
    %2341 = vmatpush1.msra.mxu0 %v2304
    %2342 = vmatprep.subr.mxu0 0.0
    %2343 = vmatpush1.msra.mxu0 %v2302
    %2344 = vmatprep.subr.mxu0 0.0
    %2345 = vmatpush1.msra.mxu0 %v2300
    %2346 = vmatprep.subr.mxu0 0.0
    %2347 = vmatpush2.msra.mxu0 0.0
    %2348 = vmatprep.subr.mxu0 0.0
    %2349 = vmatpush2.msra.mxu0 0.0
    %2350 = vmatprep.subr.mxu0 0.0
    %2351 = vmatpush2.msra.mxu0 0.0
    %2352 = vmatprep.subr.mxu0 0.0
    %2353 = vmatpush2.msra.mxu0 0.0
    %2354 = vmatprep.subr.mxu0 0.0
    %2355 = vmatpush2.msra.mxu0 0.0
    %2356 = vmatprep.subr.mxu0 0.0
    %2357 = vmatpush2.msra.mxu0 0.0
    %2358 = vmatprep.subr.mxu0 0.0
    %2359 = vmatpush2.msra.mxu0 0.0
    %2360 = vmatprep.subr.mxu0 0.0
    %2361 = vmatpush2.msra.mxu0 0.0
    %2362 = vmatprep.subr.mxu0 0.0
    %2363 = vmatpush2.msra.mxu0 0.0
    %2364 = vmatprep.subr.mxu0 0.0
    %2365 = vmatpush2.msra.mxu0 0.0
    %2366 = vmatprep.subr.mxu0 0.0
    %2367 = vmatpush2.msra.mxu0 0.0
    %2368 = vmatprep.subr.mxu0 0.0
    %2369 = vmatpush2.msra.mxu0 0.0
    %2370 = vmatprep.subr.mxu0 0.0
    %2371 = vmatpush2.msra.mxu0 0.0
    %2372 = vmatprep.subr.mxu0 0.0
    %2373 = vmatpush2.msra.mxu0 0.0
    %2374 = vmatprep.subr.mxu0 0.0
    %2375 = vmatpush2.msra.mxu0 0.0
    %2376 = vmatprep.subr.mxu0 0.0
    %2377 = vmatpush2.msra.mxu0 0.0
    %2378 = vmatprep.mubr.f32.mxu0 0.0
    %2379 = vmatmul.mubr.f32.gmra.mxu0 %v2312
    %v2380 = vpop.f32.mrf.mxu0
    %v2381 = vadd.f32 0.0, %v2380
    %v2382 = vpop.f32.mrf.mxu0
    %2383 = vdwg.mxu0
    %2388 = vrot.lane.b32.xlu0 %v875, 96
    %v2389 = vpop.permute.xlu0 %2388
    %2390 = vrot.lane.b32.xlu0 %v876, 96
    %v2391 = vpop.permute.xlu0 %2390
    %2392 = vrot.lane.b32.xlu0 %v877, 96
    %v2393 = vpop.permute.xlu0 %2392
    %2394 = vrot.lane.b32.xlu0 %v878, 96
    %v2395 = vpop.permute.xlu0 %2394
    %v2401 = vsel %vm2132, %v2111, 0
    %2403 = vmatprep.subr.mxu0 0.0
    %2404 = vmatpush1.msra.mxu0 0.0
    %2405 = vmatprep.subr.mxu0 0.0
    %2406 = vmatpush1.msra.mxu0 0.0
    %2407 = vmatprep.subr.mxu0 0.0
    %2408 = vmatpush1.msra.mxu0 0.0
    %2409 = vmatprep.subr.mxu0 0.0
    %2410 = vmatpush1.msra.mxu0 0.0
    %2411 = vmatprep.subr.mxu0 0.0
    %2412 = vmatpush1.msra.mxu0 0.0
    %2413 = vmatprep.subr.mxu0 0.0
    %2414 = vmatpush1.msra.mxu0 0.0
    %2415 = vmatprep.subr.mxu0 0.0
    %2416 = vmatpush1.msra.mxu0 0.0
    %2417 = vmatprep.subr.mxu0 0.0
    %2418 = vmatpush1.msra.mxu0 0.0
    %2419 = vmatprep.subr.mxu0 0.0
    %2420 = vmatpush1.msra.mxu0 0.0
    %2421 = vmatprep.subr.mxu0 0.0
    %2422 = vmatpush1.msra.mxu0 0.0
    %2423 = vmatprep.subr.mxu0 0.0
    %2424 = vmatpush1.msra.mxu0 0.0
    %2425 = vmatprep.subr.mxu0 0.0
    %2426 = vmatpush1.msra.mxu0 0.0
    %2427 = vmatprep.subr.mxu0 0.0
    %2428 = vmatpush1.msra.mxu0 %v2395
    %2429 = vmatprep.subr.mxu0 0.0
    %2430 = vmatpush1.msra.mxu0 %v2393
    %2431 = vmatprep.subr.mxu0 0.0
    %2432 = vmatpush1.msra.mxu0 %v2391
    %2433 = vmatprep.subr.mxu0 0.0
    %2434 = vmatpush1.msra.mxu0 %v2389
    %2435 = vmatprep.subr.mxu0 0.0
    %2436 = vmatpush2.msra.mxu0 0.0
    %2437 = vmatprep.subr.mxu0 0.0
    %2438 = vmatpush2.msra.mxu0 0.0
    %2439 = vmatprep.subr.mxu0 0.0
    %2440 = vmatpush2.msra.mxu0 0.0
    %2441 = vmatprep.subr.mxu0 0.0
    %2442 = vmatpush2.msra.mxu0 0.0
    %2443 = vmatprep.subr.mxu0 0.0
    %2444 = vmatpush2.msra.mxu0 0.0
    %2445 = vmatprep.subr.mxu0 0.0
    %2446 = vmatpush2.msra.mxu0 0.0
    %2447 = vmatprep.subr.mxu0 0.0
    %2448 = vmatpush2.msra.mxu0 0.0
    %2449 = vmatprep.subr.mxu0 0.0
    %2450 = vmatpush2.msra.mxu0 0.0
    %2451 = vmatprep.subr.mxu0 0.0
    %2452 = vmatpush2.msra.mxu0 0.0
    %2453 = vmatprep.subr.mxu0 0.0
    %2454 = vmatpush2.msra.mxu0 0.0
    %2455 = vmatprep.subr.mxu0 0.0
    %2456 = vmatpush2.msra.mxu0 0.0
    %2457 = vmatprep.subr.mxu0 0.0
    %2458 = vmatpush2.msra.mxu0 0.0
    %2459 = vmatprep.subr.mxu0 0.0
    %2460 = vmatpush2.msra.mxu0 0.0
    %2461 = vmatprep.subr.mxu0 0.0
    %2462 = vmatpush2.msra.mxu0 0.0
    %2463 = vmatprep.subr.mxu0 0.0
    %2464 = vmatpush2.msra.mxu0 0.0
    %2465 = vmatprep.subr.mxu0 0.0
    %2466 = vmatpush2.msra.mxu0 0.0
    %2467 = vmatprep.mubr.f32.mxu0 0.0
    %2468 = vmatmul.mubr.f32.gmra.mxu0 %v2401
    %v2469 = vpop.f32.mrf.mxu0
    %v2470 = vadd.f32 0.0, %v2469
    %v2471 = vpop.f32.mrf.mxu0
    %2472 = vdwg.mxu0
    %2477 = vrot.lane.b32.xlu0 %v879, 96
    %v2478 = vpop.permute.xlu0 %2477
    %2479 = vrot.lane.b32.xlu0 %v880, 96
    %v2480 = vpop.permute.xlu0 %2479
    %2481 = vrot.lane.b32.xlu0 %v881, 96
    %v2482 = vpop.permute.xlu0 %2481
    %2483 = vrot.lane.b32.xlu0 %v882, 96
    %v2484 = vpop.permute.xlu0 %2483
    %v2490 = vsel %vm2132, %v2112, 0
    %2492 = vmatprep.subr.mxu0 0.0
    %2493 = vmatpush1.msra.mxu0 0.0
    %2494 = vmatprep.subr.mxu0 0.0
    %2495 = vmatpush1.msra.mxu0 0.0
    %2496 = vmatprep.subr.mxu0 0.0
    %2497 = vmatpush1.msra.mxu0 0.0
    %2498 = vmatprep.subr.mxu0 0.0
    %2499 = vmatpush1.msra.mxu0 0.0
    %2500 = vmatprep.subr.mxu0 0.0
    %2501 = vmatpush1.msra.mxu0 0.0
    %2502 = vmatprep.subr.mxu0 0.0
    %2503 = vmatpush1.msra.mxu0 0.0
    %2504 = vmatprep.subr.mxu0 0.0
    %2505 = vmatpush1.msra.mxu0 0.0
    %2506 = vmatprep.subr.mxu0 0.0
    %2507 = vmatpush1.msra.mxu0 0.0
    %2508 = vmatprep.subr.mxu0 0.0
    %2509 = vmatpush1.msra.mxu0 0.0
    %2510 = vmatprep.subr.mxu0 0.0
    %2511 = vmatpush1.msra.mxu0 0.0
    %2512 = vmatprep.subr.mxu0 0.0
    %2513 = vmatpush1.msra.mxu0 0.0
    %2514 = vmatprep.subr.mxu0 0.0
    %2515 = vmatpush1.msra.mxu0 0.0
    %2516 = vmatprep.subr.mxu0 0.0
    %2517 = vmatpush1.msra.mxu0 %v2484
    %2518 = vmatprep.subr.mxu0 0.0
    %2519 = vmatpush1.msra.mxu0 %v2482
    %2520 = vmatprep.subr.mxu0 0.0
    %2521 = vmatpush1.msra.mxu0 %v2480
    %2522 = vmatprep.subr.mxu0 0.0
    %2523 = vmatpush1.msra.mxu0 %v2478
    %2524 = vmatprep.subr.mxu0 0.0
    %2525 = vmatpush2.msra.mxu0 0.0
    %2526 = vmatprep.subr.mxu0 0.0
    %2527 = vmatpush2.msra.mxu0 0.0
    %2528 = vmatprep.subr.mxu0 0.0
    %2529 = vmatpush2.msra.mxu0 0.0
    %2530 = vmatprep.subr.mxu0 0.0
    %2531 = vmatpush2.msra.mxu0 0.0
    %2532 = vmatprep.subr.mxu0 0.0
    %2533 = vmatpush2.msra.mxu0 0.0
    %2534 = vmatprep.subr.mxu0 0.0
    %2535 = vmatpush2.msra.mxu0 0.0
    %2536 = vmatprep.subr.mxu0 0.0
    %2537 = vmatpush2.msra.mxu0 0.0
    %2538 = vmatprep.subr.mxu0 0.0
    %2539 = vmatpush2.msra.mxu0 0.0
    %2540 = vmatprep.subr.mxu0 0.0
    %2541 = vmatpush2.msra.mxu0 0.0
    %2542 = vmatprep.subr.mxu0 0.0
    %2543 = vmatpush2.msra.mxu0 0.0
    %2544 = vmatprep.subr.mxu0 0.0
    %2545 = vmatpush2.msra.mxu0 0.0
    %2546 = vmatprep.subr.mxu0 0.0
    %2547 = vmatpush2.msra.mxu0 0.0
    %2548 = vmatprep.subr.mxu0 0.0
    %2549 = vmatpush2.msra.mxu0 0.0
    %2550 = vmatprep.subr.mxu0 0.0
    %2551 = vmatpush2.msra.mxu0 0.0
    %2552 = vmatprep.subr.mxu0 0.0
    %2553 = vmatpush2.msra.mxu0 0.0
    %2554 = vmatprep.subr.mxu0 0.0
    %2555 = vmatpush2.msra.mxu0 0.0
    %2556 = vmatprep.mubr.f32.mxu0 0.0
    %2557 = vmatmul.mubr.f32.gmra.mxu0 %v2490
    %v2558 = vpop.f32.mrf.mxu0
    %v2559 = vadd.f32 0.0, %v2558
    %v2560 = vpop.f32.mrf.mxu0
    %2561 = vdwg.mxu0
    %2566 = vrot.lane.b32.xlu0 %v883, 96
    %v2567 = vpop.permute.xlu0 %2566
    %2568 = vrot.lane.b32.xlu0 %v884, 96
    %v2569 = vpop.permute.xlu0 %2568
    %2570 = vrot.lane.b32.xlu0 %v885, 96
    %v2571 = vpop.permute.xlu0 %2570
    %2572 = vrot.lane.b32.xlu0 %v886, 96
    %v2573 = vpop.permute.xlu0 %2572
    %v2579 = vsel %vm2132, %v2113, 0
    %2581 = vmatprep.subr.mxu0 0.0
    %2582 = vmatpush1.msra.mxu0 0.0
    %2583 = vmatprep.subr.mxu0 0.0
    %2584 = vmatpush1.msra.mxu0 0.0
    %2585 = vmatprep.subr.mxu0 0.0
    %2586 = vmatpush1.msra.mxu0 0.0
    %2587 = vmatprep.subr.mxu0 0.0
    %2588 = vmatpush1.msra.mxu0 0.0
    %2589 = vmatprep.subr.mxu0 0.0
    %2590 = vmatpush1.msra.mxu0 0.0
    %2591 = vmatprep.subr.mxu0 0.0
    %2592 = vmatpush1.msra.mxu0 0.0
    %2593 = vmatprep.subr.mxu0 0.0
    %2594 = vmatpush1.msra.mxu0 0.0
    %2595 = vmatprep.subr.mxu0 0.0
    %2596 = vmatpush1.msra.mxu0 0.0
    %2597 = vmatprep.subr.mxu0 0.0
    %2598 = vmatpush1.msra.mxu0 0.0
    %2599 = vmatprep.subr.mxu0 0.0
    %2600 = vmatpush1.msra.mxu0 0.0
    %2601 = vmatprep.subr.mxu0 0.0
    %2602 = vmatpush1.msra.mxu0 0.0
    %2603 = vmatprep.subr.mxu0 0.0
    %2604 = vmatpush1.msra.mxu0 0.0
    %2605 = vmatprep.subr.mxu0 0.0
    %2606 = vmatpush1.msra.mxu0 %v2573
    %2607 = vmatprep.subr.mxu0 0.0
    %2608 = vmatpush1.msra.mxu0 %v2571
    %2609 = vmatprep.subr.mxu0 0.0
    %2610 = vmatpush1.msra.mxu0 %v2569
    %2611 = vmatprep.subr.mxu0 0.0
    %2612 = vmatpush1.msra.mxu0 %v2567
    %2613 = vmatprep.subr.mxu0 0.0
    %2614 = vmatpush2.msra.mxu0 0.0
    %2615 = vmatprep.subr.mxu0 0.0
    %2616 = vmatpush2.msra.mxu0 0.0
    %2617 = vmatprep.subr.mxu0 0.0
    %2618 = vmatpush2.msra.mxu0 0.0
    %2619 = vmatprep.subr.mxu0 0.0
    %2620 = vmatpush2.msra.mxu0 0.0
    %2621 = vmatprep.subr.mxu0 0.0
    %2622 = vmatpush2.msra.mxu0 0.0
    %2623 = vmatprep.subr.mxu0 0.0
    %2624 = vmatpush2.msra.mxu0 0.0
    %2625 = vmatprep.subr.mxu0 0.0
    %2626 = vmatpush2.msra.mxu0 0.0
    %2627 = vmatprep.subr.mxu0 0.0
    %2628 = vmatpush2.msra.mxu0 0.0
    %2629 = vmatprep.subr.mxu0 0.0
    %2630 = vmatpush2.msra.mxu0 0.0
    %2631 = vmatprep.subr.mxu0 0.0
    %2632 = vmatpush2.msra.mxu0 0.0
    %2633 = vmatprep.subr.mxu0 0.0
    %2634 = vmatpush2.msra.mxu0 0.0
    %2635 = vmatprep.subr.mxu0 0.0
    %2636 = vmatpush2.msra.mxu0 0.0
    %2637 = vmatprep.subr.mxu0 0.0
    %2638 = vmatpush2.msra.mxu0 0.0
    %2639 = vmatprep.subr.mxu0 0.0
    %2640 = vmatpush2.msra.mxu0 0.0
    %2641 = vmatprep.subr.mxu0 0.0
    %2642 = vmatpush2.msra.mxu0 0.0
    %2643 = vmatprep.subr.mxu0 0.0
    %2644 = vmatpush2.msra.mxu0 0.0
    %2645 = vmatprep.mubr.f32.mxu0 0.0
    %2646 = vmatmul.mubr.f32.gmra.mxu0 %v2579
    %v2647 = vpop.f32.mrf.mxu0
    %v2648 = vadd.f32 0.0, %v2647
    %v2649 = vpop.f32.mrf.mxu0
    %2650 = vdwg.mxu0
    %2655 = vrot.lane.b32.xlu0 %v887, 96
    %v2656 = vpop.permute.xlu0 %2655
    %2657 = vrot.lane.b32.xlu0 %v888, 96
    %v2658 = vpop.permute.xlu0 %2657
    %2659 = vrot.lane.b32.xlu0 %v889, 96
    %v2660 = vpop.permute.xlu0 %2659
    %2661 = vrot.lane.b32.xlu0 %v890, 96
    %v2662 = vpop.permute.xlu0 %2661
    %v2668 = vsel %vm2132, %v2114, 0
    %2670 = vmatprep.subr.mxu0 0.0
    %2671 = vmatpush1.msra.mxu0 0.0
    %2672 = vmatprep.subr.mxu0 0.0
    %2673 = vmatpush1.msra.mxu0 0.0
    %2674 = vmatprep.subr.mxu0 0.0
    %2675 = vmatpush1.msra.mxu0 0.0
    %2676 = vmatprep.subr.mxu0 0.0
    %2677 = vmatpush1.msra.mxu0 0.0
    %2678 = vmatprep.subr.mxu0 0.0
    %2679 = vmatpush1.msra.mxu0 0.0
    %2680 = vmatprep.subr.mxu0 0.0
    %2681 = vmatpush1.msra.mxu0 0.0
    %2682 = vmatprep.subr.mxu0 0.0
    %2683 = vmatpush1.msra.mxu0 0.0
    %2684 = vmatprep.subr.mxu0 0.0
    %2685 = vmatpush1.msra.mxu0 0.0
    %2686 = vmatprep.subr.mxu0 0.0
    %2687 = vmatpush1.msra.mxu0 0.0
    %2688 = vmatprep.subr.mxu0 0.0
    %2689 = vmatpush1.msra.mxu0 0.0
    %2690 = vmatprep.subr.mxu0 0.0
    %2691 = vmatpush1.msra.mxu0 0.0
    %2692 = vmatprep.subr.mxu0 0.0
    %2693 = vmatpush1.msra.mxu0 0.0
    %2694 = vmatprep.subr.mxu0 0.0
    %2695 = vmatpush1.msra.mxu0 %v2662
    %2696 = vmatprep.subr.mxu0 0.0
    %2697 = vmatpush1.msra.mxu0 %v2660
    %2698 = vmatprep.subr.mxu0 0.0
    %2699 = vmatpush1.msra.mxu0 %v2658
    %2700 = vmatprep.subr.mxu0 0.0
    %2701 = vmatpush1.msra.mxu0 %v2656
    %2702 = vmatprep.subr.mxu0 0.0
    %2703 = vmatpush2.msra.mxu0 0.0
    %2704 = vmatprep.subr.mxu0 0.0
    %2705 = vmatpush2.msra.mxu0 0.0
    %2706 = vmatprep.subr.mxu0 0.0
    %2707 = vmatpush2.msra.mxu0 0.0
    %2708 = vmatprep.subr.mxu0 0.0
    %2709 = vmatpush2.msra.mxu0 0.0
    %2710 = vmatprep.subr.mxu0 0.0
    %2711 = vmatpush2.msra.mxu0 0.0
    %2712 = vmatprep.subr.mxu0 0.0
    %2713 = vmatpush2.msra.mxu0 0.0
    %2714 = vmatprep.subr.mxu0 0.0
    %2715 = vmatpush2.msra.mxu0 0.0
    %2716 = vmatprep.subr.mxu0 0.0
    %2717 = vmatpush2.msra.mxu0 0.0
    %2718 = vmatprep.subr.mxu0 0.0
    %2719 = vmatpush2.msra.mxu0 0.0
    %2720 = vmatprep.subr.mxu0 0.0
    %2721 = vmatpush2.msra.mxu0 0.0
    %2722 = vmatprep.subr.mxu0 0.0
    %2723 = vmatpush2.msra.mxu0 0.0
    %2724 = vmatprep.subr.mxu0 0.0
    %2725 = vmatpush2.msra.mxu0 0.0
    %2726 = vmatprep.subr.mxu0 0.0
    %2727 = vmatpush2.msra.mxu0 0.0
    %2728 = vmatprep.subr.mxu0 0.0
    %2729 = vmatpush2.msra.mxu0 0.0
    %2730 = vmatprep.subr.mxu0 0.0
    %2731 = vmatpush2.msra.mxu0 0.0
    %2732 = vmatprep.subr.mxu0 0.0
    %2733 = vmatpush2.msra.mxu0 0.0
    %2734 = vmatprep.mubr.f32.mxu0 0.0
    %2735 = vmatmul.mubr.f32.gmra.mxu0 %v2668
    %v2736 = vpop.f32.mrf.mxu0
    %v2737 = vadd.f32 0.0, %v2736
    %v2738 = vpop.f32.mrf.mxu0
    %2739 = vdwg.mxu0
    %2744 = vrot.lane.b32.xlu0 %v891, 96
    %v2745 = vpop.permute.xlu0 %2744
    %2746 = vrot.lane.b32.xlu0 %v892, 96
    %v2747 = vpop.permute.xlu0 %2746
    %2748 = vrot.lane.b32.xlu0 %v893, 96
    %v2749 = vpop.permute.xlu0 %2748
    %2750 = vrot.lane.b32.xlu0 %v894, 96
    %v2751 = vpop.permute.xlu0 %2750
    %v2757 = vsel %vm2132, %v2115, 0
    %2759 = vmatprep.subr.mxu0 0.0
    %2760 = vmatpush1.msra.mxu0 0.0
    %2761 = vmatprep.subr.mxu0 0.0
    %2762 = vmatpush1.msra.mxu0 0.0
    %2763 = vmatprep.subr.mxu0 0.0
    %2764 = vmatpush1.msra.mxu0 0.0
    %2765 = vmatprep.subr.mxu0 0.0
    %2766 = vmatpush1.msra.mxu0 0.0
    %2767 = vmatprep.subr.mxu0 0.0
    %2768 = vmatpush1.msra.mxu0 0.0
    %2769 = vmatprep.subr.mxu0 0.0
    %2770 = vmatpush1.msra.mxu0 0.0
    %2771 = vmatprep.subr.mxu0 0.0
    %2772 = vmatpush1.msra.mxu0 0.0
    %2773 = vmatprep.subr.mxu0 0.0
    %2774 = vmatpush1.msra.mxu0 0.0
    %2775 = vmatprep.subr.mxu0 0.0
    %2776 = vmatpush1.msra.mxu0 0.0
    %2777 = vmatprep.subr.mxu0 0.0
    %2778 = vmatpush1.msra.mxu0 0.0
    %2779 = vmatprep.subr.mxu0 0.0
    %2780 = vmatpush1.msra.mxu0 0.0
    %2781 = vmatprep.subr.mxu0 0.0
    %2782 = vmatpush1.msra.mxu0 0.0
    %2783 = vmatprep.subr.mxu0 0.0
    %2784 = vmatpush1.msra.mxu0 %v2751
    %2785 = vmatprep.subr.mxu0 0.0
    %2786 = vmatpush1.msra.mxu0 %v2749
    %2787 = vmatprep.subr.mxu0 0.0
    %2788 = vmatpush1.msra.mxu0 %v2747
    %2789 = vmatprep.subr.mxu0 0.0
    %2790 = vmatpush1.msra.mxu0 %v2745
    %2791 = vmatprep.subr.mxu0 0.0
    %2792 = vmatpush2.msra.mxu0 0.0
    %2793 = vmatprep.subr.mxu0 0.0
    %2794 = vmatpush2.msra.mxu0 0.0
    %2795 = vmatprep.subr.mxu0 0.0
    %2796 = vmatpush2.msra.mxu0 0.0
    %2797 = vmatprep.subr.mxu0 0.0
    %2798 = vmatpush2.msra.mxu0 0.0
    %2799 = vmatprep.subr.mxu0 0.0
    %2800 = vmatpush2.msra.mxu0 0.0
    %2801 = vmatprep.subr.mxu0 0.0
    %2802 = vmatpush2.msra.mxu0 0.0
    %2803 = vmatprep.subr.mxu0 0.0
    %2804 = vmatpush2.msra.mxu0 0.0
    %2805 = vmatprep.subr.mxu0 0.0
    %2806 = vmatpush2.msra.mxu0 0.0
    %2807 = vmatprep.subr.mxu0 0.0
    %2808 = vmatpush2.msra.mxu0 0.0
    %2809 = vmatprep.subr.mxu0 0.0
    %2810 = vmatpush2.msra.mxu0 0.0
    %2811 = vmatprep.subr.mxu0 0.0
    %2812 = vmatpush2.msra.mxu0 0.0
    %2813 = vmatprep.subr.mxu0 0.0
    %2814 = vmatpush2.msra.mxu0 0.0
    %2815 = vmatprep.subr.mxu0 0.0
    %2816 = vmatpush2.msra.mxu0 0.0
    %2817 = vmatprep.subr.mxu0 0.0
    %2818 = vmatpush2.msra.mxu0 0.0
    %2819 = vmatprep.subr.mxu0 0.0
    %2820 = vmatpush2.msra.mxu0 0.0
    %2821 = vmatprep.subr.mxu0 0.0
    %2822 = vmatpush2.msra.mxu0 0.0
    %2823 = vmatprep.mubr.f32.mxu0 0.0
    %2824 = vmatmul.mubr.f32.gmra.mxu0 %v2757
    %v2825 = vpop.f32.mrf.mxu0
    %v2826 = vadd.f32 0.0, %v2825
    %v2827 = vpop.f32.mrf.mxu0
    %2828 = vdwg.mxu0
    %v2829 = vlaneseq
    %v2830 = vshrl.u32 %v2829, 7
    %v2831 = vsub.s32 0, %v2830
    %v2832 = vrot.slane %v62, %v2831
    %v2834 = vsel %vm403, %v2203, 0
    %v2837 = vsel %vm403, %v2292, 0
    %v2840 = vsel %vm403, %v2381, 0
    %v2843 = vsel %vm403, %v2470, 0
    %v2846 = vsel %vm403, %v2559, 0
    %v2849 = vsel %vm403, %v2648, 0
    %v2852 = vsel %vm403, %v2737, 0
    %v2855 = vsel %vm403, %v2826, 0
    %2857 = vmatprep.subr.mxu0 0.0
    %2858 = vmatpush1.msra.mxu0 0.0
    %2859 = vmatprep.subr.mxu0 0.0
    %2860 = vmatpush1.msra.mxu0 0.0
    %2861 = vmatprep.subr.mxu0 0.0
    %2862 = vmatpush1.msra.mxu0 0.0
    %2863 = vmatprep.subr.mxu0 0.0
    %2864 = vmatpush1.msra.mxu0 0.0
    %2865 = vmatprep.subr.mxu0 0.0
    %2866 = vmatpush1.msra.mxu0 0.0
    %2867 = vmatprep.subr.mxu0 0.0
    %2868 = vmatpush1.msra.mxu0 0.0
    %2869 = vmatprep.subr.mxu0 0.0
    %2870 = vmatpush1.msra.mxu0 0.0
    %2871 = vmatprep.subr.mxu0 0.0
    %2872 = vmatpush1.msra.mxu0 0.0
    %2873 = vmatprep.subr.mxu0 0.0
    %2874 = vmatpush1.msra.mxu0 0.0
    %2875 = vmatprep.subr.mxu0 0.0
    %2876 = vmatpush1.msra.mxu0 0.0
    %2877 = vmatprep.subr.mxu0 0.0
    %2878 = vmatpush1.msra.mxu0 0.0
    %2879 = vmatprep.subr.mxu0 0.0
    %2880 = vmatpush1.msra.mxu0 0.0
    %2881 = vmatprep.subr.mxu0 0.0
    %2882 = vmatpush1.msra.mxu0 0.0
    %2883 = vmatprep.subr.mxu0 0.0
    %2884 = vmatpush1.msra.mxu0 0.0
    %2885 = vmatprep.subr.mxu0 0.0
    %2886 = vmatpush1.msra.mxu0 %v43
    %2887 = vmatprep.subr.mxu0 0.0
    %2888 = vmatpush1.msra.mxu0 %v42
    %2889 = vmatprep.subr.mxu0 0.0
    %2890 = vmatpush2.msra.mxu0 0.0
    %2891 = vmatprep.subr.mxu0 0.0
    %2892 = vmatpush2.msra.mxu0 0.0
    %2893 = vmatprep.subr.mxu0 0.0
    %2894 = vmatpush2.msra.mxu0 0.0
    %2895 = vmatprep.subr.mxu0 0.0
    %2896 = vmatpush2.msra.mxu0 0.0
    %2897 = vmatprep.subr.mxu0 0.0
    %2898 = vmatpush2.msra.mxu0 0.0
    %2899 = vmatprep.subr.mxu0 0.0
    %2900 = vmatpush2.msra.mxu0 0.0
    %2901 = vmatprep.subr.mxu0 0.0
    %2902 = vmatpush2.msra.mxu0 0.0
    %2903 = vmatprep.subr.mxu0 0.0
    %2904 = vmatpush2.msra.mxu0 0.0
    %2905 = vmatprep.subr.mxu0 0.0
    %2906 = vmatpush2.msra.mxu0 0.0
    %2907 = vmatprep.subr.mxu0 0.0
    %2908 = vmatpush2.msra.mxu0 0.0
    %2909 = vmatprep.subr.mxu0 0.0
    %2910 = vmatpush2.msra.mxu0 0.0
    %2911 = vmatprep.subr.mxu0 0.0
    %2912 = vmatpush2.msra.mxu0 0.0
    %2913 = vmatprep.subr.mxu0 0.0
    %2914 = vmatpush2.msra.mxu0 0.0
    %2915 = vmatprep.subr.mxu0 0.0
    %2916 = vmatpush2.msra.mxu0 0.0
    %2917 = vmatprep.subr.mxu0 0.0
    %2918 = vmatpush2.msra.mxu0 0.0
    %2919 = vmatprep.subr.mxu0 0.0
    %2920 = vmatpush2.msra.mxu0 0.0
    %2921 = vmatprep.mubr.f32.mxu0 0.0
    %2922 = vmatmul.mubr.f32.gmra.mxu0 %v2834
    %v2923 = vpop.f32.mrf.mxu0
    %v2924 = vadd.f32 %v2832, %v2923
    %v2925 = vpop.f32.mrf.mxu0
    %2926 = vmatprep.mubr.f32.mxu0 0.0
    %2927 = vmatmul.mubr.f32.gmra.mxu0 %v2837
    %v2928 = vpop.f32.mrf.mxu0
    %v2929 = vadd.f32 %v2832, %v2928
    %v2930 = vpop.f32.mrf.mxu0
    %2931 = vmatprep.mubr.f32.mxu0 0.0
    %2932 = vmatmul.mubr.f32.gmra.mxu0 %v2840
    %v2933 = vpop.f32.mrf.mxu0
    %v2934 = vadd.f32 %v2832, %v2933
    %v2935 = vpop.f32.mrf.mxu0
    %2936 = vmatprep.mubr.f32.mxu0 0.0
    %2937 = vmatmul.mubr.f32.gmra.mxu0 %v2843
    %v2938 = vpop.f32.mrf.mxu0
    %v2939 = vadd.f32 %v2832, %v2938
    %v2940 = vpop.f32.mrf.mxu0
    %2941 = vmatprep.mubr.f32.mxu0 0.0
    %2942 = vmatmul.mubr.f32.gmra.mxu0 %v2846
    %v2943 = vpop.f32.mrf.mxu0
    %v2944 = vadd.f32 %v2832, %v2943
    %v2945 = vpop.f32.mrf.mxu0
    %2946 = vmatprep.mubr.f32.mxu0 0.0
    %2947 = vmatmul.mubr.f32.gmra.mxu0 %v2849
    %v2948 = vpop.f32.mrf.mxu0
    %v2949 = vadd.f32 %v2832, %v2948
    %v2950 = vpop.f32.mrf.mxu0
    %2951 = vmatprep.mubr.f32.mxu0 0.0
    %2952 = vmatmul.mubr.f32.gmra.mxu0 %v2852
    %v2953 = vpop.f32.mrf.mxu0
    %v2954 = vadd.f32 %v2832, %v2953
    %v2955 = vpop.f32.mrf.mxu0
    %2956 = vmatprep.mubr.f32.mxu0 0.0
    %2957 = vmatmul.mubr.f32.gmra.mxu0 %v2855
    %v2958 = vpop.f32.mrf.mxu0
    %v2959 = vadd.f32 %v2832, %v2958
    %v2960 = vpop.f32.mrf.mxu0
    %2961 = vdwg.mxu0
    %v2962 = vadd.f32 %v495, %v2924
    %v2963 = vadd.f32 %v500, %v2929
    %v2964 = vadd.f32 %v505, %v2934
    %v2965 = vadd.f32 %v510, %v2939
    %v2966 = vadd.f32 %v515, %v2944
    %v2967 = vadd.f32 %v520, %v2949
    %v2968 = vadd.f32 %v525, %v2954
    %v2969 = vadd.f32 %v530, %v2959
    %v2970 = vsel %vm403, %v2962, 0.0
    %2971 = vadd.xlane.f32.xlu0 %v2970
    %v2972 = vpop.xlane.xlu0 %2971
    %v2973 = vsel %vm403, %v2963, 0.0
    %2974 = vadd.xlane.f32.xlu0 %v2973
    %v2975 = vpop.xlane.xlu0 %2974
    %v2976 = vsel %vm403, %v2964, 0.0
    %2977 = vadd.xlane.f32.xlu0 %v2976
    %v2978 = vpop.xlane.xlu0 %2977
    %v2979 = vsel %vm403, %v2965, 0.0
    %2980 = vadd.xlane.f32.xlu0 %v2979
    %v2981 = vpop.xlane.xlu0 %2980
    %v2982 = vsel %vm403, %v2966, 0.0
    %2983 = vadd.xlane.f32.xlu0 %v2982
    %v2984 = vpop.xlane.xlu0 %2983
    %v2985 = vsel %vm403, %v2967, 0.0
    %2986 = vadd.xlane.f32.xlu0 %v2985
    %v2987 = vpop.xlane.xlu0 %2986
    %v2988 = vsel %vm403, %v2968, 0.0
    %2989 = vadd.xlane.f32.xlu0 %v2988
    %v2990 = vpop.xlane.xlu0 %2989
    %v2991 = vsel %vm403, %v2969, 0.0
    %2992 = vadd.xlane.f32.xlu0 %v2991
    %v2993 = vpop.xlane.xlu0 %2992
    %v2994 = vmul.f32 %v2972, %v557
    %v2995 = vmul.f32 %v2975, %v557
    %v2996 = vmul.f32 %v2978, %v557
    %v2997 = vmul.f32 %v2981, %v557
    %v2998 = vmul.f32 %v2984, %v557
    %v2999 = vmul.f32 %v2987, %v557
    %v3000 = vmul.f32 %v2990, %v557
    %v3001 = vmul.f32 %v2993, %v557
    %v3002 = vsub.f32 %v2962, %v2994
    %v3003 = vsub.f32 %v2963, %v2995
    %v3004 = vsub.f32 %v2964, %v2996
    %v3005 = vsub.f32 %v2965, %v2997
    %v3006 = vsub.f32 %v2966, %v2998
    %v3007 = vsub.f32 %v2967, %v2999
    %v3008 = vsub.f32 %v2968, %v3000
    %v3009 = vsub.f32 %v2969, %v3001
    %v3010 = vmul.f32 %v3002, %v3002
    %v3011 = vmul.f32 %v3003, %v3003
    %v3012 = vmul.f32 %v3004, %v3004
    %v3013 = vmul.f32 %v3005, %v3005
    %v3014 = vmul.f32 %v3006, %v3006
    %v3015 = vmul.f32 %v3007, %v3007
    %v3016 = vmul.f32 %v3008, %v3008
    %v3017 = vmul.f32 %v3009, %v3009
    %v3018 = vsel %vm403, %v3010, 0.0
    %3019 = vadd.xlane.f32.xlu0 %v3018
    %v3020 = vpop.xlane.xlu0 %3019
    %v3021 = vsel %vm403, %v3011, 0.0
    %3022 = vadd.xlane.f32.xlu0 %v3021
    %v3023 = vpop.xlane.xlu0 %3022
    %v3024 = vsel %vm403, %v3012, 0.0
    %3025 = vadd.xlane.f32.xlu0 %v3024
    %v3026 = vpop.xlane.xlu0 %3025
    %v3027 = vsel %vm403, %v3013, 0.0
    %3028 = vadd.xlane.f32.xlu0 %v3027
    %v3029 = vpop.xlane.xlu0 %3028
    %v3030 = vsel %vm403, %v3014, 0.0
    %3031 = vadd.xlane.f32.xlu0 %v3030
    %v3032 = vpop.xlane.xlu0 %3031
    %v3033 = vsel %vm403, %v3015, 0.0
    %3034 = vadd.xlane.f32.xlu0 %v3033
    %v3035 = vpop.xlane.xlu0 %3034
    %v3036 = vsel %vm403, %v3016, 0.0
    %3037 = vadd.xlane.f32.xlu0 %v3036
    %v3038 = vpop.xlane.xlu0 %3037
    %v3039 = vsel %vm403, %v3017, 0.0
    %3040 = vadd.xlane.f32.xlu0 %v3039
    %v3041 = vpop.xlane.xlu0 %3040
    %v3042 = vmul.f32 %v3020, %v557
    %v3043 = vmul.f32 %v3023, %v557
    %v3044 = vmul.f32 %v3026, %v557
    %v3045 = vmul.f32 %v3029, %v557
    %v3046 = vmul.f32 %v3032, %v557
    %v3047 = vmul.f32 %v3035, %v557
    %v3048 = vmul.f32 %v3038, %v557
    %v3049 = vmul.f32 %v3041, %v557
    %v3050 = vadd.f32 %v3042, 1e-05
    %v3051 = vadd.f32 %v3043, 1e-05
    %v3052 = vadd.f32 %v3044, 1e-05
    %v3053 = vadd.f32 %v3045, 1e-05
    %v3054 = vadd.f32 %v3046, 1e-05
    %v3055 = vadd.f32 %v3047, 1e-05
    %v3056 = vadd.f32 %v3048, 1e-05
    %v3057 = vadd.f32 %v3049, 1e-05
    %v3058 = vrsqrt.pop %v3050
    %v3059 = vrsqrt.pop %v3051
    %v3060 = vrsqrt.pop %v3052
    %v3061 = vrsqrt.pop %v3053
    %v3062 = vrsqrt.pop %v3054
    %v3063 = vrsqrt.pop %v3055
    %v3064 = vrsqrt.pop %v3056
    %v3065 = vrsqrt.pop %v3057
    %v3066 = vmul.f32 %v3002, %v3058
    %v3067 = vmul.f32 %v3003, %v3059
    %v3068 = vmul.f32 %v3004, %v3060
    %v3069 = vmul.f32 %v3005, %v3061
    %v3070 = vmul.f32 %v3006, %v3062
    %v3071 = vmul.f32 %v3007, %v3063
    %v3072 = vmul.f32 %v3008, %v3064
    %v3073 = vmul.f32 %v3009, %v3065
    %v3074 = vlaneseq
    %v3075 = vshrl.u32 %v3074, 7
    %v3076 = vsub.s32 0, %v3075
    %v3077 = vrot.slane %v63, %v3076
    %v3078 = vmul.f32 %v3066, %v3077
    %v3079 = vmul.f32 %v3067, %v3077
    %v3080 = vmul.f32 %v3068, %v3077
    %v3081 = vmul.f32 %v3069, %v3077
    %v3082 = vmul.f32 %v3070, %v3077
    %v3083 = vmul.f32 %v3071, %v3077
    %v3084 = vmul.f32 %v3072, %v3077
    %v3085 = vmul.f32 %v3073, %v3077
    %v3086 = vlaneseq
    %v3087 = vshrl.u32 %v3086, 7
    %v3088 = vsub.s32 0, %v3087
    %v3089 = vrot.slane %v64, %v3088
    %v3090 = vadd.f32 %v3078, %v3089
    %v3091 = vadd.f32 %v3079, %v3089
    %v3092 = vadd.f32 %v3080, %v3089
    %v3093 = vadd.f32 %v3081, %v3089
    %v3094 = vadd.f32 %v3082, %v3089
    %v3095 = vadd.f32 %v3083, %v3089
    %v3096 = vadd.f32 %v3084, %v3089
    %v3097 = vadd.f32 %v3085, %v3089
    %v3098 = vlaneseq
    %v3099 = vshrl.u32 %v3098, 7
    %v3100 = vsub.s32 0, %v3099
    %v3101 = vrot.slane %v65, %v3100
    %v3103 = vsel %vm403, %v3090, 0
    %v3106 = vsel %vm403, %v3091, 0
    %v3109 = vsel %vm403, %v3092, 0
    %v3112 = vsel %vm403, %v3093, 0
    %v3115 = vsel %vm403, %v3094, 0
    %v3118 = vsel %vm403, %v3095, 0
    %v3121 = vsel %vm403, %v3096, 0
    %v3124 = vsel %vm403, %v3097, 0
    %3126 = vmatprep.subr.mxu0 0.0
    %3127 = vmatpush1.msra.mxu0 0.0
    %3128 = vmatprep.subr.mxu0 0.0
    %3129 = vmatpush1.msra.mxu0 0.0
    %3130 = vmatprep.subr.mxu0 0.0
    %3131 = vmatpush1.msra.mxu0 0.0
    %3132 = vmatprep.subr.mxu0 0.0
    %3133 = vmatpush1.msra.mxu0 0.0
    %3134 = vmatprep.subr.mxu0 0.0
    %3135 = vmatpush1.msra.mxu0 0.0
    %3136 = vmatprep.subr.mxu0 0.0
    %3137 = vmatpush1.msra.mxu0 0.0
    %3138 = vmatprep.subr.mxu0 0.0
    %3139 = vmatpush1.msra.mxu0 0.0
    %3140 = vmatprep.subr.mxu0 0.0
    %3141 = vmatpush1.msra.mxu0 0.0
    %3142 = vmatprep.subr.mxu0 0.0
    %3143 = vmatpush1.msra.mxu0 0.0
    %3144 = vmatprep.subr.mxu0 0.0
    %3145 = vmatpush1.msra.mxu0 0.0
    %3146 = vmatprep.subr.mxu0 0.0
    %3147 = vmatpush1.msra.mxu0 0.0
    %3148 = vmatprep.subr.mxu0 0.0
    %3149 = vmatpush1.msra.mxu0 0.0
    %3150 = vmatprep.subr.mxu0 0.0
    %3151 = vmatpush1.msra.mxu0 0.0
    %3152 = vmatprep.subr.mxu0 0.0
    %3153 = vmatpush1.msra.mxu0 0.0
    %3154 = vmatprep.subr.mxu0 0.0
    %3155 = vmatpush1.msra.mxu0 %v45
    %3156 = vmatprep.subr.mxu0 0.0
    %3157 = vmatpush1.msra.mxu0 %v44
    %3158 = vmatprep.subr.mxu0 0.0
    %3159 = vmatpush2.msra.mxu0 0.0
    %3160 = vmatprep.subr.mxu0 0.0
    %3161 = vmatpush2.msra.mxu0 0.0
    %3162 = vmatprep.subr.mxu0 0.0
    %3163 = vmatpush2.msra.mxu0 0.0
    %3164 = vmatprep.subr.mxu0 0.0
    %3165 = vmatpush2.msra.mxu0 0.0
    %3166 = vmatprep.subr.mxu0 0.0
    %3167 = vmatpush2.msra.mxu0 0.0
    %3168 = vmatprep.subr.mxu0 0.0
    %3169 = vmatpush2.msra.mxu0 0.0
    %3170 = vmatprep.subr.mxu0 0.0
    %3171 = vmatpush2.msra.mxu0 0.0
    %3172 = vmatprep.subr.mxu0 0.0
    %3173 = vmatpush2.msra.mxu0 0.0
    %3174 = vmatprep.subr.mxu0 0.0
    %3175 = vmatpush2.msra.mxu0 0.0
    %3176 = vmatprep.subr.mxu0 0.0
    %3177 = vmatpush2.msra.mxu0 0.0
    %3178 = vmatprep.subr.mxu0 0.0
    %3179 = vmatpush2.msra.mxu0 0.0
    %3180 = vmatprep.subr.mxu0 0.0
    %3181 = vmatpush2.msra.mxu0 0.0
    %3182 = vmatprep.subr.mxu0 0.0
    %3183 = vmatpush2.msra.mxu0 0.0
    %3184 = vmatprep.subr.mxu0 0.0
    %3185 = vmatpush2.msra.mxu0 0.0
    %3186 = vmatprep.subr.mxu0 0.0
    %3187 = vmatpush2.msra.mxu0 0.0
    %3188 = vmatprep.subr.mxu0 0.0
    %3189 = vmatpush2.msra.mxu0 0.0
    %3190 = vmatprep.mubr.f32.mxu0 0.0
    %3191 = vmatmul.mubr.f32.gmra.mxu0 %v3103
    %v3192 = vpop.f32.mrf.mxu0
    %v3193 = vadd.f32 %v3101, %v3192
    %v3194 = vpop.f32.mrf.mxu0
    %3195 = vmatprep.mubr.f32.mxu0 0.0
    %3196 = vmatmul.mubr.f32.gmra.mxu0 %v3106
    %v3197 = vpop.f32.mrf.mxu0
    %v3198 = vadd.f32 %v3101, %v3197
    %v3199 = vpop.f32.mrf.mxu0
    %3200 = vmatprep.mubr.f32.mxu0 0.0
    %3201 = vmatmul.mubr.f32.gmra.mxu0 %v3109
    %v3202 = vpop.f32.mrf.mxu0
    %v3203 = vadd.f32 %v3101, %v3202
    %v3204 = vpop.f32.mrf.mxu0
    %3205 = vmatprep.mubr.f32.mxu0 0.0
    %3206 = vmatmul.mubr.f32.gmra.mxu0 %v3112
    %v3207 = vpop.f32.mrf.mxu0
    %v3208 = vadd.f32 %v3101, %v3207
    %v3209 = vpop.f32.mrf.mxu0
    %3210 = vmatprep.mubr.f32.mxu0 0.0
    %3211 = vmatmul.mubr.f32.gmra.mxu0 %v3115
    %v3212 = vpop.f32.mrf.mxu0
    %v3213 = vadd.f32 %v3101, %v3212
    %v3214 = vpop.f32.mrf.mxu0
    %3215 = vmatprep.mubr.f32.mxu0 0.0
    %3216 = vmatmul.mubr.f32.gmra.mxu0 %v3118
    %v3217 = vpop.f32.mrf.mxu0
    %v3218 = vadd.f32 %v3101, %v3217
    %v3219 = vpop.f32.mrf.mxu0
    %3220 = vmatprep.mubr.f32.mxu0 0.0
    %3221 = vmatmul.mubr.f32.gmra.mxu0 %v3121
    %v3222 = vpop.f32.mrf.mxu0
    %v3223 = vadd.f32 %v3101, %v3222
    %v3224 = vpop.f32.mrf.mxu0
    %3225 = vmatprep.mubr.f32.mxu0 0.0
    %3226 = vmatmul.mubr.f32.gmra.mxu0 %v3124
    %v3227 = vpop.f32.mrf.mxu0
    %v3228 = vadd.f32 %v3101, %v3227
    %v3229 = vpop.f32.mrf.mxu0
    %3230 = vdwg.mxu0
    %v3231 = vmul.f32 %v3193, 0.5
    %v3232 = vmul.f32 %v3198, 0.5
    %v3233 = vmul.f32 %v3203, 0.5
    %v3234 = vmul.f32 %v3208, 0.5
    %v3235 = vmul.f32 %v3213, 0.5
    %v3236 = vmul.f32 %v3218, 0.5
    %v3237 = vmul.f32 %v3223, 0.5
    %v3238 = vmul.f32 %v3228, 0.5
    %v3239 = vmul.f32 %v3193, 0.70710677
    %v3240 = vmul.f32 %v3198, 0.70710677
    %v3241 = vmul.f32 %v3203, 0.70710677
    %v3242 = vmul.f32 %v3208, 0.70710677
    %v3243 = vmul.f32 %v3213, 0.70710677
    %v3244 = vmul.f32 %v3218, 0.70710677
    %v3245 = vmul.f32 %v3223, 0.70710677
    %v3246 = vmul.f32 %v3228, 0.70710677
    %v3247 = vand.u32 2147483647, %v3239
    %v3248 = vand.u32 2147483647, %v3240
    %v3249 = vand.u32 2147483647, %v3241
    %v3250 = vand.u32 2147483647, %v3242
    %v3251 = vand.u32 2147483647, %v3243
    %v3252 = vand.u32 2147483647, %v3244
    %v3253 = vand.u32 2147483647, %v3245
    %v3254 = vand.u32 2147483647, %v3246
    %v3255 = vmul.f32 %v3247, 0.3275911
    %v3256 = vmul.f32 %v3248, 0.3275911
    %v3257 = vmul.f32 %v3249, 0.3275911
    %v3258 = vmul.f32 %v3250, 0.3275911
    %v3259 = vmul.f32 %v3251, 0.3275911
    %v3260 = vmul.f32 %v3252, 0.3275911
    %v3261 = vmul.f32 %v3253, 0.3275911
    %v3262 = vmul.f32 %v3254, 0.3275911
    %v3263 = vadd.f32 %v3255, 1.0
    %v3264 = vadd.f32 %v3256, 1.0
    %v3265 = vadd.f32 %v3257, 1.0
    %v3266 = vadd.f32 %v3258, 1.0
    %v3267 = vadd.f32 %v3259, 1.0
    %v3268 = vadd.f32 %v3260, 1.0
    %v3269 = vadd.f32 %v3261, 1.0
    %v3270 = vadd.f32 %v3262, 1.0
    %v3271 = vrcp.pop %v3263
    %v3272 = vmul.f32 1.0, %v3271
    %v3273 = vrcp.pop %v3264
    %v3274 = vmul.f32 1.0, %v3273
    %v3275 = vrcp.pop %v3265
    %v3276 = vmul.f32 1.0, %v3275
    %v3277 = vrcp.pop %v3266
    %v3278 = vmul.f32 1.0, %v3277
    %v3279 = vrcp.pop %v3267
    %v3280 = vmul.f32 1.0, %v3279
    %v3281 = vrcp.pop %v3268
    %v3282 = vmul.f32 1.0, %v3281
    %v3283 = vrcp.pop %v3269
    %v3284 = vmul.f32 1.0, %v3283
    %v3285 = vrcp.pop %v3270
    %v3286 = vmul.f32 1.0, %v3285
    %v3287 = vmul.f32 %v3272, 1.0614054
    %v3288 = vmul.f32 %v3274, 1.0614054
    %v3289 = vmul.f32 %v3276, 1.0614054
    %v3290 = vmul.f32 %v3278, 1.0614054
    %v3291 = vmul.f32 %v3280, 1.0614054
    %v3292 = vmul.f32 %v3282, 1.0614054
    %v3293 = vmul.f32 %v3284, 1.0614054
    %v3294 = vmul.f32 %v3286, 1.0614054
    %v3295 = vadd.f32 %v3287, -1.4531521
    %v3296 = vadd.f32 %v3288, -1.4531521
    %v3297 = vadd.f32 %v3289, -1.4531521
    %v3298 = vadd.f32 %v3290, -1.4531521
    %v3299 = vadd.f32 %v3291, -1.4531521
    %v3300 = vadd.f32 %v3292, -1.4531521
    %v3301 = vadd.f32 %v3293, -1.4531521
    %v3302 = vadd.f32 %v3294, -1.4531521
    %v3303 = vmul.f32 %v3295, %v3272
    %v3304 = vmul.f32 %v3296, %v3274
    %v3305 = vmul.f32 %v3297, %v3276
    %v3306 = vmul.f32 %v3298, %v3278
    %v3307 = vmul.f32 %v3299, %v3280
    %v3308 = vmul.f32 %v3300, %v3282
    %v3309 = vmul.f32 %v3301, %v3284
    %v3310 = vmul.f32 %v3302, %v3286
    %v3311 = vadd.f32 %v3303, 1.4214138
    %v3312 = vadd.f32 %v3304, 1.4214138
    %v3313 = vadd.f32 %v3305, 1.4214138
    %v3314 = vadd.f32 %v3306, 1.4214138
    %v3315 = vadd.f32 %v3307, 1.4214138
    %v3316 = vadd.f32 %v3308, 1.4214138
    %v3317 = vadd.f32 %v3309, 1.4214138
    %v3318 = vadd.f32 %v3310, 1.4214138
    %v3319 = vmul.f32 %v3311, %v3272
    %v3320 = vmul.f32 %v3312, %v3274
    %v3321 = vmul.f32 %v3313, %v3276
    %v3322 = vmul.f32 %v3314, %v3278
    %v3323 = vmul.f32 %v3315, %v3280
    %v3324 = vmul.f32 %v3316, %v3282
    %v3325 = vmul.f32 %v3317, %v3284
    %v3326 = vmul.f32 %v3318, %v3286
    %v3327 = vadd.f32 %v3319, -0.28449672
    %v3328 = vadd.f32 %v3320, -0.28449672
    %v3329 = vadd.f32 %v3321, -0.28449672
    %v3330 = vadd.f32 %v3322, -0.28449672
    %v3331 = vadd.f32 %v3323, -0.28449672
    %v3332 = vadd.f32 %v3324, -0.28449672
    %v3333 = vadd.f32 %v3325, -0.28449672
    %v3334 = vadd.f32 %v3326, -0.28449672
    %v3335 = vmul.f32 %v3327, %v3272
    %v3336 = vmul.f32 %v3328, %v3274
    %v3337 = vmul.f32 %v3329, %v3276
    %v3338 = vmul.f32 %v3330, %v3278
    %v3339 = vmul.f32 %v3331, %v3280
    %v3340 = vmul.f32 %v3332, %v3282
    %v3341 = vmul.f32 %v3333, %v3284
    %v3342 = vmul.f32 %v3334, %v3286
    %v3343 = vadd.f32 %v3335, 0.2548296
    %v3344 = vadd.f32 %v3336, 0.2548296
    %v3345 = vadd.f32 %v3337, 0.2548296
    %v3346 = vadd.f32 %v3338, 0.2548296
    %v3347 = vadd.f32 %v3339, 0.2548296
    %v3348 = vadd.f32 %v3340, 0.2548296
    %v3349 = vadd.f32 %v3341, 0.2548296
    %v3350 = vadd.f32 %v3342, 0.2548296
    %v3351 = vmul.f32 %v3343, %v3272
    %v3352 = vmul.f32 %v3344, %v3274
    %v3353 = vmul.f32 %v3345, %v3276
    %v3354 = vmul.f32 %v3346, %v3278
    %v3355 = vmul.f32 %v3347, %v3280
    %v3356 = vmul.f32 %v3348, %v3282
    %v3357 = vmul.f32 %v3349, %v3284
    %v3358 = vmul.f32 %v3350, %v3286
    %v3359 = vsub.f32 0.0, %v3247
    %v3360 = vsub.f32 0.0, %v3248
    %v3361 = vsub.f32 0.0, %v3249
    %v3362 = vsub.f32 0.0, %v3250
    %v3363 = vsub.f32 0.0, %v3251
    %v3364 = vsub.f32 0.0, %v3252
    %v3365 = vsub.f32 0.0, %v3253
    %v3366 = vsub.f32 0.0, %v3254
    %v3367 = vmul.f32 %v3359, %v3247
    %v3368 = vmul.f32 %v3360, %v3248
    %v3369 = vmul.f32 %v3361, %v3249
    %v3370 = vmul.f32 %v3362, %v3250
    %v3371 = vmul.f32 %v3363, %v3251
    %v3372 = vmul.f32 %v3364, %v3252
    %v3373 = vmul.f32 %v3365, %v3253
    %v3374 = vmul.f32 %v3366, %v3254
    %v3375 = vmul.f32 %v3367, 1.442695
    %v3376 = vpow.pop %v3375
    %v3377 = vmul.f32 %v3368, 1.442695
    %v3378 = vpow.pop %v3377
    %v3379 = vmul.f32 %v3369, 1.442695
    %v3380 = vpow.pop %v3379
    %v3381 = vmul.f32 %v3370, 1.442695
    %v3382 = vpow.pop %v3381
    %v3383 = vmul.f32 %v3371, 1.442695
    %v3384 = vpow.pop %v3383
    %v3385 = vmul.f32 %v3372, 1.442695
    %v3386 = vpow.pop %v3385
    %v3387 = vmul.f32 %v3373, 1.442695
    %v3388 = vpow.pop %v3387
    %v3389 = vmul.f32 %v3374, 1.442695
    %v3390 = vpow.pop %v3389
    %v3391 = vmul.f32 %v3351, %v3376
    %v3392 = vmul.f32 %v3352, %v3378
    %v3393 = vmul.f32 %v3353, %v3380
    %v3394 = vmul.f32 %v3354, %v3382
    %v3395 = vmul.f32 %v3355, %v3384
    %v3396 = vmul.f32 %v3356, %v3386
    %v3397 = vmul.f32 %v3357, %v3388
    %v3398 = vmul.f32 %v3358, %v3390
    %v3399 = vsub.f32 1.0, %v3391
    %v3400 = vsub.f32 1.0, %v3392
    %v3401 = vsub.f32 1.0, %v3393
    %v3402 = vsub.f32 1.0, %v3394
    %v3403 = vsub.f32 1.0, %v3395
    %v3404 = vsub.f32 1.0, %v3396
    %v3405 = vsub.f32 1.0, %v3397
    %v3406 = vsub.f32 1.0, %v3398
    %vm3407 = vcmp.ge.f32.partialorder %v3239, 0.0
    %vm3408 = vcmp.ge.f32.partialorder %v3240, 0.0
    %vm3409 = vcmp.ge.f32.partialorder %v3241, 0.0
    %vm3410 = vcmp.ge.f32.partialorder %v3242, 0.0
    %vm3411 = vcmp.ge.f32.partialorder %v3243, 0.0
    %vm3412 = vcmp.ge.f32.partialorder %v3244, 0.0
    %vm3413 = vcmp.ge.f32.partialorder %v3245, 0.0
    %vm3414 = vcmp.ge.f32.partialorder %v3246, 0.0
    %v3415 = vsub.f32 0.0, %v3399
    %v3416 = vsub.f32 0.0, %v3400
    %v3417 = vsub.f32 0.0, %v3401
    %v3418 = vsub.f32 0.0, %v3402
    %v3419 = vsub.f32 0.0, %v3403
    %v3420 = vsub.f32 0.0, %v3404
    %v3421 = vsub.f32 0.0, %v3405
    %v3422 = vsub.f32 0.0, %v3406
    %v3423 = vsel %vm3407, %v3399, %v3415
    %v3424 = vsel %vm3408, %v3400, %v3416
    %v3425 = vsel %vm3409, %v3401, %v3417
    %v3426 = vsel %vm3410, %v3402, %v3418
    %v3427 = vsel %vm3411, %v3403, %v3419
    %v3428 = vsel %vm3412, %v3404, %v3420
    %v3429 = vsel %vm3413, %v3405, %v3421
    %v3430 = vsel %vm3414, %v3406, %v3422
    %v3431 = vadd.f32 %v3423, 1.0
    %v3432 = vadd.f32 %v3424, 1.0
    %v3433 = vadd.f32 %v3425, 1.0
    %v3434 = vadd.f32 %v3426, 1.0
    %v3435 = vadd.f32 %v3427, 1.0
    %v3436 = vadd.f32 %v3428, 1.0
    %v3437 = vadd.f32 %v3429, 1.0
    %v3438 = vadd.f32 %v3430, 1.0
    %v3439 = vmul.f32 %v3231, %v3431
    %v3440 = vmul.f32 %v3232, %v3432
    %v3441 = vmul.f32 %v3233, %v3433
    %v3442 = vmul.f32 %v3234, %v3434
    %v3443 = vmul.f32 %v3235, %v3435
    %v3444 = vmul.f32 %v3236, %v3436
    %v3445 = vmul.f32 %v3237, %v3437
    %v3446 = vmul.f32 %v3238, %v3438
    %v3447 = vlaneseq
    %v3448 = vshrl.u32 %v3447, 7
    %v3449 = vsub.s32 0, %v3448
    %v3450 = vrot.slane %v66, %v3449
    %vm3451 = vcmask 523264
    %v3453 = vsel %vm3451, %v3439, 0
    %v3456 = vsel %vm3451, %v3440, 0
    %v3459 = vsel %vm3451, %v3441, 0
    %v3462 = vsel %vm3451, %v3442, 0
    %v3465 = vsel %vm3451, %v3443, 0
    %v3468 = vsel %vm3451, %v3444, 0
    %v3471 = vsel %vm3451, %v3445, 0
    %v3474 = vsel %vm3451, %v3446, 0
    %3476 = vmatprep.subr.mxu0 0.0
    %3477 = vmatpush1.msra.mxu0 0.0
    %3478 = vmatprep.subr.mxu0 0.0
    %3479 = vmatpush1.msra.mxu0 0.0
    %3480 = vmatprep.subr.mxu0 0.0
    %3481 = vmatpush1.msra.mxu0 0.0
    %3482 = vmatprep.subr.mxu0 0.0
    %3483 = vmatpush1.msra.mxu0 0.0
    %3484 = vmatprep.subr.mxu0 0.0
    %3485 = vmatpush1.msra.mxu0 0.0
    %3486 = vmatprep.subr.mxu0 0.0
    %3487 = vmatpush1.msra.mxu0 0.0
    %3488 = vmatprep.subr.mxu0 0.0
    %3489 = vmatpush1.msra.mxu0 0.0
    %3490 = vmatprep.subr.mxu0 0.0
    %3491 = vmatpush1.msra.mxu0 0.0
    %3492 = vmatprep.subr.mxu0 0.0
    %3493 = vmatpush1.msra.mxu0 %v53
    %3494 = vmatprep.subr.mxu0 0.0
    %3495 = vmatpush1.msra.mxu0 %v52
    %3496 = vmatprep.subr.mxu0 0.0
    %3497 = vmatpush1.msra.mxu0 %v51
    %3498 = vmatprep.subr.mxu0 0.0
    %3499 = vmatpush1.msra.mxu0 %v50
    %3500 = vmatprep.subr.mxu0 0.0
    %3501 = vmatpush1.msra.mxu0 %v49
    %3502 = vmatprep.subr.mxu0 0.0
    %3503 = vmatpush1.msra.mxu0 %v48
    %3504 = vmatprep.subr.mxu0 0.0
    %3505 = vmatpush1.msra.mxu0 %v47
    %3506 = vmatprep.subr.mxu0 0.0
    %3507 = vmatpush1.msra.mxu0 %v46
    %3508 = vmatprep.subr.mxu0 0.0
    %3509 = vmatpush2.msra.mxu0 0.0
    %3510 = vmatprep.subr.mxu0 0.0
    %3511 = vmatpush2.msra.mxu0 0.0
    %3512 = vmatprep.subr.mxu0 0.0
    %3513 = vmatpush2.msra.mxu0 0.0
    %3514 = vmatprep.subr.mxu0 0.0
    %3515 = vmatpush2.msra.mxu0 0.0
    %3516 = vmatprep.subr.mxu0 0.0
    %3517 = vmatpush2.msra.mxu0 0.0
    %3518 = vmatprep.subr.mxu0 0.0
    %3519 = vmatpush2.msra.mxu0 0.0
    %3520 = vmatprep.subr.mxu0 0.0
    %3521 = vmatpush2.msra.mxu0 0.0
    %3522 = vmatprep.subr.mxu0 0.0
    %3523 = vmatpush2.msra.mxu0 0.0
    %3524 = vmatprep.subr.mxu0 0.0
    %3525 = vmatpush2.msra.mxu0 0.0
    %3526 = vmatprep.subr.mxu0 0.0
    %3527 = vmatpush2.msra.mxu0 0.0
    %3528 = vmatprep.subr.mxu0 0.0
    %3529 = vmatpush2.msra.mxu0 0.0
    %3530 = vmatprep.subr.mxu0 0.0
    %3531 = vmatpush2.msra.mxu0 0.0
    %3532 = vmatprep.subr.mxu0 0.0
    %3533 = vmatpush2.msra.mxu0 0.0
    %3534 = vmatprep.subr.mxu0 0.0
    %3535 = vmatpush2.msra.mxu0 0.0
    %3536 = vmatprep.subr.mxu0 0.0
    %3537 = vmatpush2.msra.mxu0 0.0
    %3538 = vmatprep.subr.mxu0 0.0
    %3539 = vmatpush2.msra.mxu0 0.0
    %3540 = vmatprep.mubr.f32.mxu0 0.0
    %3541 = vmatmul.mubr.f32.gmra.mxu0 %v3453
    %v3542 = vpop.f32.mrf.mxu0
    %v3543 = vadd.f32 %v3450, %v3542
    %v3544 = vpop.f32.mrf.mxu0
    %3545 = vmatprep.mubr.f32.mxu0 0.0
    %3546 = vmatmul.mubr.f32.gmra.mxu0 %v3456
    %v3547 = vpop.f32.mrf.mxu0
    %v3548 = vadd.f32 %v3450, %v3547
    %v3549 = vpop.f32.mrf.mxu0
    %3550 = vmatprep.mubr.f32.mxu0 0.0
    %3551 = vmatmul.mubr.f32.gmra.mxu0 %v3459
    %v3552 = vpop.f32.mrf.mxu0
    %v3553 = vadd.f32 %v3450, %v3552
    %v3554 = vpop.f32.mrf.mxu0
    %3555 = vmatprep.mubr.f32.mxu0 0.0
    %3556 = vmatmul.mubr.f32.gmra.mxu0 %v3462
    %v3557 = vpop.f32.mrf.mxu0
    %v3558 = vadd.f32 %v3450, %v3557
    %v3559 = vpop.f32.mrf.mxu0
    %3560 = vmatprep.mubr.f32.mxu0 0.0
    %3561 = vmatmul.mubr.f32.gmra.mxu0 %v3465
    %v3562 = vpop.f32.mrf.mxu0
    %v3563 = vadd.f32 %v3450, %v3562
    %v3564 = vpop.f32.mrf.mxu0
    %3565 = vmatprep.mubr.f32.mxu0 0.0
    %3566 = vmatmul.mubr.f32.gmra.mxu0 %v3468
    %v3567 = vpop.f32.mrf.mxu0
    %v3568 = vadd.f32 %v3450, %v3567
    %v3569 = vpop.f32.mrf.mxu0
    %3570 = vmatprep.mubr.f32.mxu0 0.0
    %3571 = vmatmul.mubr.f32.gmra.mxu0 %v3471
    %v3572 = vpop.f32.mrf.mxu0
    %v3573 = vadd.f32 %v3450, %v3572
    %v3574 = vpop.f32.mrf.mxu0
    %3575 = vmatprep.mubr.f32.mxu0 0.0
    %3576 = vmatmul.mubr.f32.gmra.mxu0 %v3474
    %v3577 = vpop.f32.mrf.mxu0
    %v3578 = vadd.f32 %v3450, %v3577
    %v3579 = vpop.f32.mrf.mxu0
    %3580 = vdwg.mxu0
    %v3581 = vadd.f32 %v2962, %v3543
    %v3582 = vadd.f32 %v2963, %v3548
    %v3583 = vadd.f32 %v2964, %v3553
    %v3584 = vadd.f32 %v2965, %v3558
    %v3585 = vadd.f32 %v2966, %v3563
    %v3586 = vadd.f32 %v2967, %v3568
    %v3587 = vadd.f32 %v2968, %v3573
    %v3588 = vadd.f32 %v2969, %v3578
    %3589 = vst.msk [vmem:[#allocation2] sm:$0xff] %vm403, %v3581
    %3590 = vst.msk [vmem:[#allocation2 + $0x8] sm:$0xff] %vm403, %v3582
    %3591 = vst.msk [vmem:[#allocation2 + $0x10] sm:$0xff] %vm403, %v3583
    %3592 = vst.msk [vmem:[#allocation2 + $0x18] sm:$0xff] %vm403, %v3584
    %3593 = vst.msk [vmem:[#allocation2 + $0x20] sm:$0xff] %vm403, %v3585
    %3594 = vst.msk [vmem:[#allocation2 + $0x28] sm:$0xff] %vm403, %v3586
    %3595 = vst.msk [vmem:[#allocation2 + $0x30] sm:$0xff] %vm403, %v3587
    %3596 = vst.msk [vmem:[#allocation2 + $0x38] sm:$0xff] %vm403, %v3588
    %v3597 = vld [vmem:[#allocation2] sm:$0x1]
    %v3598 = vld [vmem:[#allocation2 + $0x8] sm:$0x1]
    %v3599 = vld [vmem:[#allocation2 + $0x10] sm:$0x1]
    %v3600 = vld [vmem:[#allocation2 + $0x18] sm:$0x1]
    %v3601 = vld [vmem:[#allocation2 + $0x20] sm:$0x1]
    %v3602 = vld [vmem:[#allocation2 + $0x28] sm:$0x1]
    %v3603 = vld [vmem:[#allocation2 + $0x30] sm:$0x1]
    %v3604 = vld [vmem:[#allocation2 + $0x38] sm:$0x1]
    %v3605 = vld [vmem:[#allocation2 + $0x1] sm:$0x1]
    %v3606 = vld [vmem:[#allocation2 + $0x9] sm:$0x1]
    %v3607 = vld [vmem:[#allocation2 + $0x11] sm:$0x1]
    %v3608 = vld [vmem:[#allocation2 + $0x19] sm:$0x1]
    %v3609 = vld [vmem:[#allocation2 + $0x21] sm:$0x1]
    %v3610 = vld [vmem:[#allocation2 + $0x29] sm:$0x1]
    %v3611 = vld [vmem:[#allocation2 + $0x31] sm:$0x1]
    %v3612 = vld [vmem:[#allocation2 + $0x39] sm:$0x1]
    %v3613 = vld [vmem:[#allocation2 + $0x2] sm:$0x1]
    %v3614 = vld [vmem:[#allocation2 + $0xa] sm:$0x1]
    %v3615 = vld [vmem:[#allocation2 + $0x12] sm:$0x1]
    %v3616 = vld [vmem:[#allocation2 + $0x1a] sm:$0x1]
    %v3617 = vld [vmem:[#allocation2 + $0x22] sm:$0x1]
    %v3618 = vld [vmem:[#allocation2 + $0x2a] sm:$0x1]
    %v3619 = vld [vmem:[#allocation2 + $0x32] sm:$0x1]
    %v3620 = vld [vmem:[#allocation2 + $0x3a] sm:$0x1]
    %v3621 = vld [vmem:[#allocation2 + $0x3] sm:$0x1]
    %v3622 = vld [vmem:[#allocation2 + $0xb] sm:$0x1]
    %v3623 = vld [vmem:[#allocation2 + $0x13] sm:$0x1]
    %v3624 = vld [vmem:[#allocation2 + $0x1b] sm:$0x1]
    %v3625 = vld [vmem:[#allocation2 + $0x23] sm:$0x1]
    %v3626 = vld [vmem:[#allocation2 + $0x2b] sm:$0x1]
    %v3627 = vld [vmem:[#allocation2 + $0x33] sm:$0x1]
    %v3628 = vld [vmem:[#allocation2 + $0x3b] sm:$0x1]
    %v3629 = vld [vmem:[#allocation2 + $0x4] sm:$0x1]
    %v3630 = vld [vmem:[#allocation2 + $0xc] sm:$0x1]
    %v3631 = vld [vmem:[#allocation2 + $0x14] sm:$0x1]
    %v3632 = vld [vmem:[#allocation2 + $0x1c] sm:$0x1]
    %v3633 = vld [vmem:[#allocation2 + $0x24] sm:$0x1]
    %v3634 = vld [vmem:[#allocation2 + $0x2c] sm:$0x1]
    %v3635 = vld [vmem:[#allocation2 + $0x34] sm:$0x1]
    %v3636 = vld [vmem:[#allocation2 + $0x3c] sm:$0x1]
    %v3637 = vld [vmem:[#allocation2 + $0x5] sm:$0x1]
    %v3638 = vld [vmem:[#allocation2 + $0xd] sm:$0x1]
    %v3639 = vld [vmem:[#allocation2 + $0x15] sm:$0x1]
    %v3640 = vld [vmem:[#allocation2 + $0x1d] sm:$0x1]
    %v3641 = vld [vmem:[#allocation2 + $0x25] sm:$0x1]
    %v3642 = vld [vmem:[#allocation2 + $0x2d] sm:$0x1]
    %v3643 = vld [vmem:[#allocation2 + $0x35] sm:$0x1]
    %v3644 = vld [vmem:[#allocation2 + $0x3d] sm:$0x1]
    %v3645 = vld [vmem:[#allocation2 + $0x6] sm:$0x1]
    %v3646 = vld [vmem:[#allocation2 + $0xe] sm:$0x1]
    %v3647 = vld [vmem:[#allocation2 + $0x16] sm:$0x1]
    %v3648 = vld [vmem:[#allocation2 + $0x1e] sm:$0x1]
    %v3649 = vld [vmem:[#allocation2 + $0x26] sm:$0x1]
    %v3650 = vld [vmem:[#allocation2 + $0x2e] sm:$0x1]
    %v3651 = vld [vmem:[#allocation2 + $0x36] sm:$0x1]
    %v3652 = vld [vmem:[#allocation2 + $0x3e] sm:$0x1]
    %v3653 = vld [vmem:[#allocation2 + $0x7] sm:$0x1]
    %v3654 = vld [vmem:[#allocation2 + $0xf] sm:$0x1]
    %v3655 = vld [vmem:[#allocation2 + $0x17] sm:$0x1]
    %v3656 = vld [vmem:[#allocation2 + $0x1f] sm:$0x1]
    %v3657 = vld [vmem:[#allocation2 + $0x27] sm:$0x1]
    %v3658 = vld [vmem:[#allocation2 + $0x2f] sm:$0x1]
    %v3659 = vld [vmem:[#allocation2 + $0x37] sm:$0x1]
    %v3660 = vld [vmem:[#allocation2 + $0x3f] sm:$0x1]
    %v3669 = vrot.slane %v3598, 7
    %vm3670 = vcmask 1041409
    %v3671 = vsel %vm3670, %v3669, %v3597
    %v3672 = vrot.slane %v3599, 6
    %vm3673 = vcmask 1042434
    %v3674 = vsel %vm3673, %v3672, %v3671
    %v3675 = vrot.slane %v3600, 5
    %vm3676 = vcmask 1043459
    %v3677 = vsel %vm3676, %v3675, %v3674
    %v3678 = vrot.slane %v3601, 4
    %vm3679 = vcmask 1044484
    %v3680 = vsel %vm3679, %v3678, %v3677
    %v3681 = vrot.slane %v3602, 3
    %vm3682 = vcmask 1045509
    %v3683 = vsel %vm3682, %v3681, %v3680
    %v3684 = vrot.slane %v3603, 2
    %vm3685 = vcmask 1046534
    %v3686 = vsel %vm3685, %v3684, %v3683
    %v3687 = vrot.slane %v3604, 1
    %vm3688 = vcmask 1047559
    %v3689 = vsel %vm3688, %v3687, %v3686
    %v3699 = vrot.slane %v3606, 7
    %v3700 = vsel %vm3670, %v3699, %v3605
    %v3701 = vrot.slane %v3607, 6
    %v3702 = vsel %vm3673, %v3701, %v3700
    %v3703 = vrot.slane %v3608, 5
    %v3704 = vsel %vm3676, %v3703, %v3702
    %v3705 = vrot.slane %v3609, 4
    %v3706 = vsel %vm3679, %v3705, %v3704
    %v3707 = vrot.slane %v3610, 3
    %v3708 = vsel %vm3682, %v3707, %v3706
    %v3709 = vrot.slane %v3611, 2
    %v3710 = vsel %vm3685, %v3709, %v3708
    %v3711 = vrot.slane %v3612, 1
    %v3712 = vsel %vm3688, %v3711, %v3710
    %3713 = vrot.lane.b32.xlu0 %v3712, 16
    %v3714 = vpop.permute.xlu0 %3713
    %v3724 = vrot.slane %v3614, 7
    %v3725 = vsel %vm3670, %v3724, %v3613
    %v3726 = vrot.slane %v3615, 6
    %v3727 = vsel %vm3673, %v3726, %v3725
    %v3728 = vrot.slane %v3616, 5
    %v3729 = vsel %vm3676, %v3728, %v3727
    %v3730 = vrot.slane %v3617, 4
    %v3731 = vsel %vm3679, %v3730, %v3729
    %v3732 = vrot.slane %v3618, 3
    %v3733 = vsel %vm3682, %v3732, %v3731
    %v3734 = vrot.slane %v3619, 2
    %v3735 = vsel %vm3685, %v3734, %v3733
    %v3736 = vrot.slane %v3620, 1
    %v3737 = vsel %vm3688, %v3736, %v3735
    %3738 = vrot.lane.b32.xlu0 %v3737, 32
    %v3739 = vpop.permute.xlu0 %3738
    %v3749 = vrot.slane %v3622, 7
    %v3750 = vsel %vm3670, %v3749, %v3621
    %v3751 = vrot.slane %v3623, 6
    %v3752 = vsel %vm3673, %v3751, %v3750
    %v3753 = vrot.slane %v3624, 5
    %v3754 = vsel %vm3676, %v3753, %v3752
    %v3755 = vrot.slane %v3625, 4
    %v3756 = vsel %vm3679, %v3755, %v3754
    %v3757 = vrot.slane %v3626, 3
    %v3758 = vsel %vm3682, %v3757, %v3756
    %v3759 = vrot.slane %v3627, 2
    %v3760 = vsel %vm3685, %v3759, %v3758
    %v3761 = vrot.slane %v3628, 1
    %v3762 = vsel %vm3688, %v3761, %v3760
    %3763 = vrot.lane.b32.xlu0 %v3762, 48
    %v3764 = vpop.permute.xlu0 %3763
    %v3774 = vrot.slane %v3630, 7
    %v3775 = vsel %vm3670, %v3774, %v3629
    %v3776 = vrot.slane %v3631, 6
    %v3777 = vsel %vm3673, %v3776, %v3775
    %v3778 = vrot.slane %v3632, 5
    %v3779 = vsel %vm3676, %v3778, %v3777
    %v3780 = vrot.slane %v3633, 4
    %v3781 = vsel %vm3679, %v3780, %v3779
    %v3782 = vrot.slane %v3634, 3
    %v3783 = vsel %vm3682, %v3782, %v3781
    %v3784 = vrot.slane %v3635, 2
    %v3785 = vsel %vm3685, %v3784, %v3783
    %v3786 = vrot.slane %v3636, 1
    %v3787 = vsel %vm3688, %v3786, %v3785
    %3788 = vrot.lane.b32.xlu0 %v3787, 64
    %v3789 = vpop.permute.xlu0 %3788
    %v3799 = vrot.slane %v3638, 7
    %v3800 = vsel %vm3670, %v3799, %v3637
    %v3801 = vrot.slane %v3639, 6
    %v3802 = vsel %vm3673, %v3801, %v3800
    %v3803 = vrot.slane %v3640, 5
    %v3804 = vsel %vm3676, %v3803, %v3802
    %v3805 = vrot.slane %v3641, 4
    %v3806 = vsel %vm3679, %v3805, %v3804
    %v3807 = vrot.slane %v3642, 3
    %v3808 = vsel %vm3682, %v3807, %v3806
    %v3809 = vrot.slane %v3643, 2
    %v3810 = vsel %vm3685, %v3809, %v3808
    %v3811 = vrot.slane %v3644, 1
    %v3812 = vsel %vm3688, %v3811, %v3810
    %3813 = vrot.lane.b32.xlu0 %v3812, 80
    %v3814 = vpop.permute.xlu0 %3813
    %v3824 = vrot.slane %v3646, 7
    %v3825 = vsel %vm3670, %v3824, %v3645
    %v3826 = vrot.slane %v3647, 6
    %v3827 = vsel %vm3673, %v3826, %v3825
    %v3828 = vrot.slane %v3648, 5
    %v3829 = vsel %vm3676, %v3828, %v3827
    %v3830 = vrot.slane %v3649, 4
    %v3831 = vsel %vm3679, %v3830, %v3829
    %v3832 = vrot.slane %v3650, 3
    %v3833 = vsel %vm3682, %v3832, %v3831
    %v3834 = vrot.slane %v3651, 2
    %v3835 = vsel %vm3685, %v3834, %v3833
    %v3836 = vrot.slane %v3652, 1
    %v3837 = vsel %vm3688, %v3836, %v3835
    %3838 = vrot.lane.b32.xlu0 %v3837, 96
    %v3839 = vpop.permute.xlu0 %3838
    %v3849 = vrot.slane %v3654, 7
    %v3850 = vsel %vm3670, %v3849, %v3653
    %v3851 = vrot.slane %v3655, 6
    %v3852 = vsel %vm3673, %v3851, %v3850
    %v3853 = vrot.slane %v3656, 5
    %v3854 = vsel %vm3676, %v3853, %v3852
    %v3855 = vrot.slane %v3657, 4
    %v3856 = vsel %vm3679, %v3855, %v3854
    %v3857 = vrot.slane %v3658, 3
    %v3858 = vsel %vm3682, %v3857, %v3856
    %v3859 = vrot.slane %v3659, 2
    %v3860 = vsel %vm3685, %v3859, %v3858
    %v3861 = vrot.slane %v3660, 1
    %v3862 = vsel %vm3688, %v3861, %v3860
    %3863 = vrot.lane.b32.xlu0 %v3862, 112
    %v3864 = vpop.permute.xlu0 %3863
    %v3866 = vsel %vm403, %v3689, %v3714
    %v3867 = vsel %vm2132, %v3866, %v3739
    %vm3868 = vcmask 392192
    %v3869 = vsel %vm3868, %v3867, %v3764
    %v3870 = vsel %vm3451, %v3869, %v3789
    %vm3871 = vcmask 654336
    %v3872 = vsel %vm3871, %v3870, %v3814
    %vm3873 = vcmask 785408
    %v3874 = vsel %vm3873, %v3872, %v3839
    %vm3875 = vcmask 916480
    %v3876 = vsel %vm3875, %v3874, %v3864
    %3877 = vst [vmem:[#allocation8] sm:$0xff] %v3876
    // Predicated region
    $region18: #{tpu_custom_call.1} parent=1 // pred_check
      _
    $region19: #{tpu_custom_call.1} parent=1 // pred_check_branch
      %3879 = sbr.rel (0) target = $region21
    $region20: #{tpu_custom_call.1} parent=1 // pred_region
      %s3881 = ssub.s32 128, 128
      %3882 = vsyncadd [#allocation5], %s3881
      %s3884 = sshll.u32 [#allocation8], 4
      %s3885 = int_to_ptr.vmem [resolvable:$true] %s3884
      %3887 = dma.vmem_to_hbm [thread:$0]  %s3885, 128, %s2, [#allocation5]
    $region21: #{tpu_custom_call.1} parent=1 // pred_fallthru
      _
    // Predicated region
    $region22: #{tpu_custom_call.1} parent=1 // pred_check
      _
    $region23: #{tpu_custom_call.1} parent=1 // pred_check_branch
      %3889 = sbr.rel (0) target = $region25
    $region24: #{tpu_custom_call.1} parent=1 // pred_region
      %3890 = dma.done [#allocation5], 128
    $region25: #{tpu_custom_call.1} parent=1 // pred_fallthru
      _
    %3891 = vsyncpa [#allocation4], 1
    %3892 = vsyncpa [#allocation7], 1
    %3893 = vsyncpa [#allocation5], 1

</llo_original>
